<compile_context>
chip_gen: v7x
topology: tpu7x:2x2x1
jax: 0.10.0
libtpu: 0.0.40
codegen_flags: <defaults>
</compile_context>

<pallas_src>
import jax
import jax.numpy as jnp
from jax import lax
from jax.experimental import pallas as pl
from jax.experimental.pallas import tpu as pltpu


# -------------------- fused dense-layer kernel --------------------
def _make_dense_layer_kernel(W, L, Cmid, G):
    """One Dense_layer: BN1->ReLU->1x1conv->BN2->ReLU->3x3conv, in VMEM/vregs.

    Feature layout is channels-first with the batch folded into the lane axis:
    (C, L) with L = N*H*W (a multiple of 128 -> lane-dense loads/stores).
    """

    def kernel(feat_ref, s1_ref, b1_ref, w1_ref, s2_ref, b2_ref, w2_ref,
               mask_ref, o_ref):
        # ---- BN1 -> ReLU on the contiguous "concat" slab (f32, VPU) ----
        a = jnp.maximum(feat_ref[...] * s1_ref[...] + b1_ref[...], 0.0)

        # ---- 1x1 conv: one full-K matmul, bf16 operands, f32 accumulate ----
        h = jnp.dot(w1_ref[...], a.astype(jnp.bfloat16),
                    preferred_element_type=jnp.float32)            # (Cmid, L)

        # ---- BN2 -> ReLU (f32) ----
        h = jnp.maximum(h * s2_ref[...] + b2_ref[...], 0.0)

        # ---- 3x3 SAME conv: 9 tap-accumulated matmuls (no im2col scratch) ----
        # Tap (dy, dx) needs h[:, p + dy*W + dx], masked by image bounds.
        # pltpu.roll has jnp.roll semantics (out[i] = x[i - shift]) so the
        # shift is -(dy*W + dx) mod L; any cross-image / wraparound read only
        # happens where the boundary mask is zero.
        acc = jnp.zeros((G, L), jnp.float32)
        for t in range(9):
            dy, dx = t // 3 - 1, t % 3 - 1
            off = dy * W + dx
            shifted = h if off == 0 else pltpu.roll(h, (-off) % L, axis=1)
            if dy == 0 and dx == 0:
                tap = shifted.astype(jnp.bfloat16)          # center mask == 1
            else:
                tap = (shifted * mask_ref[t]).astype(jnp.bfloat16)
            acc = acc + jnp.dot(w2_ref[t], tap,
                                preferred_element_type=jnp.float32)
        o_ref[...] = acc.astype(o_ref.dtype)

    return kernel


def _dense_layer_apply(feats, p, cin, G, W, mask):
    """Run one Dense_layer, writing its G new channels in place at row `cin`.

    feats : (C_total, L) f32 buffer holding the block's growing feature map
            (rows [0, cin) are valid).  The returned array aliases this buffer.
    """
    C_total, L = feats.shape
    Cmid = p["w1"].shape[0]
    # Sublane/lane alignment + in-place channel-offset requirements.
    assert cin % 8 == 0 and Cmid % 8 == 0 and G % 8 == 0 and L % 128 == 0
    assert cin % G == 0, "in-place channel write needs cin to be a multiple of G"

    s1 = p["bn1_scale"].reshape(cin, 1)
    b1 = p["bn1_bias"].reshape(cin, 1)
    w1 = p["w1"].astype(jnp.bfloat16)                              # (Cmid, cin)
    s2 = p["bn2_scale"].reshape(Cmid, 1)
    b2 = p["bn2_bias"].reshape(Cmid, 1)
    # OIHW (G, Cmid, 3, 3) -> tap-major (9, G, Cmid); tap t = ky*3 + kx.
    w2 = jnp.transpose(p["w2"], (2, 3, 0, 1)).reshape(9, G, Cmid)
    w2 = w2.astype(jnp.bfloat16)

    kernel = _make_dense_layer_kernel(W, L, Cmid, G)
    out_block = cin // G                  # write rows [cin, cin + G)

    return pl.pallas_call(
        kernel,
        out_shape=jax.ShapeDtypeStruct((C_total, L), jnp.float32),
        grid=(1,),
        in_specs=[
            pl.BlockSpec((cin, L), lambda i: (0, 0)),         # feature slab [0:cin)
            pl.BlockSpec((cin, 1), lambda i: (0, 0)),         # bn1 scale
            pl.BlockSpec((cin, 1), lambda i: (0, 0)),         # bn1 bias
            pl.BlockSpec((Cmid, cin), lambda i: (0, 0)),      # w1 (1x1 conv)
            pl.BlockSpec((Cmid, 1), lambda i: (0, 0)),        # bn2 scale
            pl.BlockSpec((Cmid, 1), lambda i: (0, 0)),        # bn2 bias
            pl.BlockSpec((9, G, Cmid), lambda i: (0, 0, 0)),  # w2 (tap-major)
            pl.BlockSpec((9, 1, L), lambda i: (0, 0, 0)),     # boundary masks
        ],
        out_specs=pl.BlockSpec((G, L), lambda i: (out_block, 0)),
        input_output_aliases={0: 0},      # write the new channels in place
        compiler_params=pltpu.CompilerParams(
            dimension_semantics=("arbitrary",)),
    )(feats, s1, b1, w1, s2, b2, w2, mask)


def _boundary_masks(N, H, W):
    """(9, 1, N*H*W) f32 masks: 1 where the 3x3 tap stays inside its image."""
    M = H * W
    pos = jnp.arange(N * M, dtype=jnp.int32) % M
    y, x = pos // W, pos % W
    rows = []
    for t in range(9):
        dy, dx = t // 3 - 1, t % 3 - 1
        yy, xx = y + dy, x + dx
        valid = (yy >= 0) & (yy < H) & (xx >= 0) & (xx < W)
        rows.append(valid.astype(jnp.float32))
    return jnp.stack(rows).reshape(9, 1, N * M)


def dense_block_apply(x_nchw, params_list):
    """Pallas forward of Dense_block == torch.cat([x, f1, f2, ...], dim=1)."""
    N, C0, H, W = x_nchw.shape
    M, L = H * W, N * H * W
    G = params_list[0]["w2"].shape[0]
    C_total = C0 + len(params_list) * G

    # Channel-major feature buffer with the batch folded into the lane axis.
    x_cm = jnp.transpose(x_nchw.reshape(N, C0, M), (1, 0, 2)).reshape(C0, L)
    feats = jnp.concatenate(
        [x_cm, jnp.zeros((C_total - C0, L), jnp.float32)], axis=0)
    mask = _boundary_masks(N, H, W)

    cin = C0
    for p in params_list:
        feats = _dense_layer_apply(feats, p, cin, G, W, mask)  # in-place rows
        cin += G
    # TODO(synk): F.dropout with drop_rate > 0 in training mode not implemented
    # (drop_rate = 0 here => identity, matching eval-mode semantics).
    out = jnp.transpose(feats.reshape(C_total, N, M), (1, 0, 2))
    return out.reshape(N, C_total, H, W)


# ---------- Deterministic parameter init (eval-mode BN folded) ----------
def init_params(key, num_layers, num_input_features, growth_rate, bn_size):
    eps = 1e-5
    params = []
    for i in range(num_layers):
        cin = num_input_features + i * growth_rate
        cmid = bn_size * growth_rate
        key, *ks = jax.random.split(key, 11)
        g1 = jax.random.uniform(ks[0], (cin,), minval=0.5, maxval=1.5)
        be1 = jax.random.normal(ks[1], (cin,)) * 0.1
        mu1 = jax.random.normal(ks[2], (cin,)) * 0.1
        v1 = jax.random.uniform(ks[3], (cin,), minval=0.5, maxval=1.5)
        w1 = jax.random.normal(ks[4], (cmid, cin)) * 0.1                 # 1x1 conv (O, I)
        g2 = jax.random.uniform(ks[5], (cmid,), minval=0.5, maxval=1.5)
        be2 = jax.random.normal(ks[6], (cmid,)) * 0.1
        mu2 = jax.random.normal(ks[7], (cmid,)) * 0.1
        v2 = jax.random.uniform(ks[8], (cmid,), minval=0.5, maxval=1.5)
        w2 = jax.random.normal(ks[9], (growth_rate, cmid, 3, 3)) * 0.1   # 3x3 conv OIHW

        s1 = g1 / jnp.sqrt(v1 + eps)
        b1 = be1 - mu1 * s1
        s2 = g2 / jnp.sqrt(v2 + eps)
        b2 = be2 - mu2 * s2
        params.append(dict(
            bn1_scale=s1.astype(jnp.float32), bn1_bias=b1.astype(jnp.float32),
            w1=w1.astype(jnp.float32),
            bn2_scale=s2.astype(jnp.float32), bn2_bias=b2.astype(jnp.float32),
            w2=w2.astype(jnp.float32),
        ))
    return params


# ---------- Pure-JAX f32 reference (for correctness check) ----------
def reference(x_nchw, params_list):
    feats = x_nchw
    for p in params_list:
        cin = feats.shape[1]
        a = jnp.maximum(feats * p["bn1_scale"].reshape(1, cin, 1, 1)
                        + p["bn1_bias"].reshape(1, cin, 1, 1), 0.0)
        h = lax.conv_general_dilated(
            a, p["w1"][:, :, None, None], (1, 1), "VALID",
            dimension_numbers=("NCHW", "OIHW", "NCHW"))
        cmid = h.shape[1]
        h = jnp.maximum(h * p["bn2_scale"].reshape(1, cmid, 1, 1)
                        + p["bn2_bias"].reshape(1, cmid, 1, 1), 0.0)
        new = lax.conv_general_dilated(
            h, p["w2"], (1, 1), [(1, 1), (1, 1)],
            dimension_numbers=("NCHW", "OIHW", "NCHW"))
        feats = jnp.concatenate([feats, new], axis=1)
    return feats


if __name__ == "__main__":
    # Dense_block(num_layers=2, num_input_features=8, growth_rate=8, bn_size=2, drop_rate=0)
    N, C0, H, W = 2, 8, 16, 16            # N*H*W = 512 -> lane-dense tiles
    num_layers, growth_rate, bn_size = 2, 8, 2

    key = jax.random.PRNGKey(0)
    kx, kp = jax.random.split(key)
    x = jax.random.normal(kx, (N, C0, H, W), dtype=jnp.float32)   # PyTorch-style NCHW
    params = init_params(kp, num_layers, C0, growth_rate, bn_size)

    out = jax.jit(dense_block_apply)(x, params)
    out = jax.block_until_ready(out)

    assert out.shape == (N, C0 + num_layers * growth_rate, H, W), out.shape
    ref = reference(x, params)
    # Tolerance loosened vs. f32: matmul operands are bf16 (f32 accumulation).
    if not jnp.allclose(out, ref, atol=2e-2, rtol=2e-2):
        err = float(jnp.max(jnp.abs(out - ref)))
        raise AssertionError(f"Pallas output does not match reference (max |err| = {err})")
    print("KERNEL_OK")
</pallas_src>

<mosaic_0001>
module attributes {stable_mosaic.version = 11 : i64} {
  func.func @kernel(%arg0: i32, %arg1: memref<8x512xf32, #tpu.memory_space<vmem>>, %arg2: memref<8x1xf32, #tpu.memory_space<vmem>>, %arg3: memref<8x1xf32, #tpu.memory_space<vmem>>, %arg4: memref<16x8xbf16, #tpu.memory_space<vmem>>, %arg5: memref<16x1xf32, #tpu.memory_space<vmem>>, %arg6: memref<16x1xf32, #tpu.memory_space<vmem>>, %arg7: memref<9x8x16xbf16, #tpu.memory_space<vmem>>, %arg8: memref<9x1x512xf32, #tpu.memory_space<vmem>>, %arg9: memref<8x512xf32, #tpu.memory_space<vmem>>) attributes {dimension_semantics = [#tpu.dimension_semantics<arbitrary>], iteration_bounds = array<i64: 1>, scalar_prefetch = 0 : i64, scratch_operands = 0 : i64, tpu.core_type = #tpu.core_type<tc>, window_params = [{transform_indices = @transform_0, window_bounds = array<i64: 8, 512>}, {pipeline_mode = #tpu.pipeline_mode<synchronous>, transform_indices = @transform_1, window_bounds = array<i64: 8, 1>}, {pipeline_mode = #tpu.pipeline_mode<synchronous>, transform_indices = @transform_2, window_bounds = array<i64: 8, 1>}, {pipeline_mode = #tpu.pipeline_mode<synchronous>, transform_indices = @transform_3, window_bounds = array<i64: 16, 8>}, {pipeline_mode = #tpu.pipeline_mode<synchronous>, transform_indices = @transform_4, window_bounds = array<i64: 16, 1>}, {pipeline_mode = #tpu.pipeline_mode<synchronous>, transform_indices = @transform_5, window_bounds = array<i64: 16, 1>}, {pipeline_mode = #tpu.pipeline_mode<synchronous>, transform_indices = @transform_6, window_bounds = array<i64: 9, 8, 16>}, {pipeline_mode = #tpu.pipeline_mode<synchronous>, transform_indices = @transform_7, window_bounds = array<i64: 9, 1, 512>}, {transform_indices = @transform_8, window_bounds = array<i64: 8, 512>}]} {
    %c0 = arith.constant 0 : index
    %c0_0 = arith.constant 0 : index
    %0 = vector.load %arg1[%c0, %c0_0] : memref<8x512xf32, #tpu.memory_space<vmem>>, vector<8x512xf32>
    %c0_1 = arith.constant 0 : index
    %c0_2 = arith.constant 0 : index
    %1 = vector.load %arg2[%c0_1, %c0_2] : memref<8x1xf32, #tpu.memory_space<vmem>>, vector<8x1xf32>
    %2 = vector.broadcast %1 : vector<8x1xf32> to vector<8x512xf32>
    %3 = arith.mulf %0, %2 : vector<8x512xf32>
    %c0_3 = arith.constant 0 : index
    %c0_4 = arith.constant 0 : index
    %4 = vector.load %arg3[%c0_3, %c0_4] : memref<8x1xf32, #tpu.memory_space<vmem>>, vector<8x1xf32>
    %5 = vector.broadcast %4 : vector<8x1xf32> to vector<8x512xf32>
    %6 = arith.addf %3, %5 : vector<8x512xf32>
    %cst = arith.constant 0.000000e+00 : f32
    %7 = vector.broadcast %cst : f32 to vector<8x512xf32>
    %8 = arith.maximumf %6, %7 : vector<8x512xf32>
    %c0_5 = arith.constant 0 : index
    %c0_6 = arith.constant 0 : index
    %9 = vector.load %arg4[%c0_5, %c0_6] : memref<16x8xbf16, #tpu.memory_space<vmem>>, vector<16x8xbf16>
    %10 = arith.truncf %8 : vector<8x512xf32> to vector<8x512xbf16>
    %cst_7 = arith.constant dense<0.000000e+00> : vector<16x512xf32>
    %11 = tpu.matmul %9, %10, %cst_7 {dimension_numbers = #tpu.dot_dimension_numbers<[1], [0], [0], [1], [0, 0, 1, 1], [], []>} : vector<16x8xbf16>, vector<8x512xbf16>, vector<16x512xf32> -> vector<16x512xf32>
    %c0_8 = arith.constant 0 : index
    %c0_9 = arith.constant 0 : index
    %12 = vector.load %arg5[%c0_8, %c0_9] : memref<16x1xf32, #tpu.memory_space<vmem>>, vector<16x1xf32>
    %13 = vector.broadcast %12 : vector<16x1xf32> to vector<16x512xf32>
    %14 = arith.mulf %11, %13 : vector<16x512xf32>
    %c0_10 = arith.constant 0 : index
    %c0_11 = arith.constant 0 : index
    %15 = vector.load %arg6[%c0_10, %c0_11] : memref<16x1xf32, #tpu.memory_space<vmem>>, vector<16x1xf32>
    %16 = vector.broadcast %15 : vector<16x1xf32> to vector<16x512xf32>
    %17 = arith.addf %14, %16 : vector<16x512xf32>
    %cst_12 = arith.constant 0.000000e+00 : f32
    %18 = vector.broadcast %cst_12 : f32 to vector<16x512xf32>
    %19 = arith.maximumf %17, %18 : vector<16x512xf32>
    %cst_13 = arith.constant 0.000000e+00 : f32
    %20 = vector.broadcast %cst_13 : f32 to vector<8x512xf32>
    %c17_i32 = arith.constant 17 : i32
    %21 = tpu.dynamic_rotate %19 by %c17_i32 dim 1 : vector<16x512xf32>, i32 -> vector<16x512xf32>
    %c0_14 = arith.constant 0 : index
    %c0_15 = arith.constant 0 : index
    %c0_16 = arith.constant 0 : index
    %22 = vector.load %arg8[%c0_14, %c0_15, %c0_16] : memref<9x1x512xf32, #tpu.memory_space<vmem>>, vector<1x1x512xf32>
    %23 = vector.shape_cast %22 : vector<1x1x512xf32> to vector<1x512xf32>
    %24 = vector.broadcast %23 : vector<1x512xf32> to vector<16x512xf32>
    %25 = arith.mulf %21, %24 : vector<16x512xf32>
    %26 = arith.truncf %25 : vector<16x512xf32> to vector<16x512xbf16>
    %c0_17 = arith.constant 0 : index
    %c0_18 = arith.constant 0 : index
    %c0_19 = arith.constant 0 : index
    %27 = vector.load %arg7[%c0_17, %c0_18, %c0_19] : memref<9x8x16xbf16, #tpu.memory_space<vmem>>, vector<1x8x16xbf16>
    %28 = vector.shape_cast %27 : vector<1x8x16xbf16> to vector<8x16xbf16>
    %cst_20 = arith.constant dense<0.000000e+00> : vector<8x512xf32>
    %29 = tpu.matmul %28, %26, %cst_20 {dimension_numbers = #tpu.dot_dimension_numbers<[1], [0], [0], [1], [0, 0, 1, 1], [], []>} : vector<8x16xbf16>, vector<16x512xbf16>, vector<8x512xf32> -> vector<8x512xf32>
    %30 = arith.addf %20, %29 : vector<8x512xf32>
    %c16_i32 = arith.constant 16 : i32
    %31 = tpu.dynamic_rotate %19 by %c16_i32 dim 1 : vector<16x512xf32>, i32 -> vector<16x512xf32>
    %c1 = arith.constant 1 : index
    %c0_21 = arith.constant 0 : index
    %c0_22 = arith.constant 0 : index
    %32 = vector.load %arg8[%c1, %c0_21, %c0_22] : memref<9x1x512xf32, #tpu.memory_space<vmem>>, vector<1x1x512xf32>
    %33 = vector.shape_cast %32 : vector<1x1x512xf32> to vector<1x512xf32>
    %34 = vector.broadcast %33 : vector<1x512xf32> to vector<16x512xf32>
    %35 = arith.mulf %31, %34 : vector<16x512xf32>
    %36 = arith.truncf %35 : vector<16x512xf32> to vector<16x512xbf16>
    %c1_23 = arith.constant 1 : index
    %c0_24 = arith.constant 0 : index
    %c0_25 = arith.constant 0 : index
    %37 = vector.load %arg7[%c1_23, %c0_24, %c0_25] : memref<9x8x16xbf16, #tpu.memory_space<vmem>>, vector<1x8x16xbf16>
    %38 = vector.shape_cast %37 : vector<1x8x16xbf16> to vector<8x16xbf16>
    %cst_26 = arith.constant dense<0.000000e+00> : vector<8x512xf32>
    %39 = tpu.matmul %38, %36, %cst_26 {dimension_numbers = #tpu.dot_dimension_numbers<[1], [0], [0], [1], [0, 0, 1, 1], [], []>} : vector<8x16xbf16>, vector<16x512xbf16>, vector<8x512xf32> -> vector<8x512xf32>
    %40 = arith.addf %30, %39 : vector<8x512xf32>
    %c15_i32 = arith.constant 15 : i32
    %41 = tpu.dynamic_rotate %19 by %c15_i32 dim 1 : vector<16x512xf32>, i32 -> vector<16x512xf32>
    %c2 = arith.constant 2 : index
    %c0_27 = arith.constant 0 : index
    %c0_28 = arith.constant 0 : index
    %42 = vector.load %arg8[%c2, %c0_27, %c0_28] : memref<9x1x512xf32, #tpu.memory_space<vmem>>, vector<1x1x512xf32>
    %43 = vector.shape_cast %42 : vector<1x1x512xf32> to vector<1x512xf32>
    %44 = vector.broadcast %43 : vector<1x512xf32> to vector<16x512xf32>
    %45 = arith.mulf %41, %44 : vector<16x512xf32>
    %46 = arith.truncf %45 : vector<16x512xf32> to vector<16x512xbf16>
    %c2_29 = arith.constant 2 : index
    %c0_30 = arith.constant 0 : index
    %c0_31 = arith.constant 0 : index
    %47 = vector.load %arg7[%c2_29, %c0_30, %c0_31] : memref<9x8x16xbf16, #tpu.memory_space<vmem>>, vector<1x8x16xbf16>
    %48 = vector.shape_cast %47 : vector<1x8x16xbf16> to vector<8x16xbf16>
    %cst_32 = arith.constant dense<0.000000e+00> : vector<8x512xf32>
    %49 = tpu.matmul %48, %46, %cst_32 {dimension_numbers = #tpu.dot_dimension_numbers<[1], [0], [0], [1], [0, 0, 1, 1], [], []>} : vector<8x16xbf16>, vector<16x512xbf16>, vector<8x512xf32> -> vector<8x512xf32>
    %50 = arith.addf %40, %49 : vector<8x512xf32>
    %c1_i32 = arith.constant 1 : i32
    %51 = tpu.dynamic_rotate %19 by %c1_i32 dim 1 : vector<16x512xf32>, i32 -> vector<16x512xf32>
    %c3 = arith.constant 3 : index
    %c0_33 = arith.constant 0 : index
    %c0_34 = arith.constant 0 : index
    %52 = vector.load %arg8[%c3, %c0_33, %c0_34] : memref<9x1x512xf32, #tpu.memory_space<vmem>>, vector<1x1x512xf32>
    %53 = vector.shape_cast %52 : vector<1x1x512xf32> to vector<1x512xf32>
    %54 = vector.broadcast %53 : vector<1x512xf32> to vector<16x512xf32>
    %55 = arith.mulf %51, %54 : vector<16x512xf32>
    %56 = arith.truncf %55 : vector<16x512xf32> to vector<16x512xbf16>
    %c3_35 = arith.constant 3 : index
    %c0_36 = arith.constant 0 : index
    %c0_37 = arith.constant 0 : index
    %57 = vector.load %arg7[%c3_35, %c0_36, %c0_37] : memref<9x8x16xbf16, #tpu.memory_space<vmem>>, vector<1x8x16xbf16>
    %58 = vector.shape_cast %57 : vector<1x8x16xbf16> to vector<8x16xbf16>
    %cst_38 = arith.constant dense<0.000000e+00> : vector<8x512xf32>
    %59 = tpu.matmul %58, %56, %cst_38 {dimension_numbers = #tpu.dot_dimension_numbers<[1], [0], [0], [1], [0, 0, 1, 1], [], []>} : vector<8x16xbf16>, vector<16x512xbf16>, vector<8x512xf32> -> vector<8x512xf32>
    %60 = arith.addf %50, %59 : vector<8x512xf32>
    %61 = arith.truncf %19 : vector<16x512xf32> to vector<16x512xbf16>
    %c4 = arith.constant 4 : index
    %c0_39 = arith.constant 0 : index
    %c0_40 = arith.constant 0 : index
    %62 = vector.load %arg7[%c4, %c0_39, %c0_40] : memref<9x8x16xbf16, #tpu.memory_space<vmem>>, vector<1x8x16xbf16>
    %63 = vector.shape_cast %62 : vector<1x8x16xbf16> to vector<8x16xbf16>
    %cst_41 = arith.constant dense<0.000000e+00> : vector<8x512xf32>
    %64 = tpu.matmul %63, %61, %cst_41 {dimension_numbers = #tpu.dot_dimension_numbers<[1], [0], [0], [1], [0, 0, 1, 1], [], []>} : vector<8x16xbf16>, vector<16x512xbf16>, vector<8x512xf32> -> vector<8x512xf32>
    %65 = arith.addf %60, %64 : vector<8x512xf32>
    %c511_i32 = arith.constant 511 : i32
    %66 = tpu.dynamic_rotate %19 by %c511_i32 dim 1 : vector<16x512xf32>, i32 -> vector<16x512xf32>
    %c5 = arith.constant 5 : index
    %c0_42 = arith.constant 0 : index
    %c0_43 = arith.constant 0 : index
    %67 = vector.load %arg8[%c5, %c0_42, %c0_43] : memref<9x1x512xf32, #tpu.memory_space<vmem>>, vector<1x1x512xf32>
    %68 = vector.shape_cast %67 : vector<1x1x512xf32> to vector<1x512xf32>
    %69 = vector.broadcast %68 : vector<1x512xf32> to vector<16x512xf32>
    %70 = arith.mulf %66, %69 : vector<16x512xf32>
    %71 = arith.truncf %70 : vector<16x512xf32> to vector<16x512xbf16>
    %c5_44 = arith.constant 5 : index
    %c0_45 = arith.constant 0 : index
    %c0_46 = arith.constant 0 : index
    %72 = vector.load %arg7[%c5_44, %c0_45, %c0_46] : memref<9x8x16xbf16, #tpu.memory_space<vmem>>, vector<1x8x16xbf16>
    %73 = vector.shape_cast %72 : vector<1x8x16xbf16> to vector<8x16xbf16>
    %cst_47 = arith.constant dense<0.000000e+00> : vector<8x512xf32>
    %74 = tpu.matmul %73, %71, %cst_47 {dimension_numbers = #tpu.dot_dimension_numbers<[1], [0], [0], [1], [0, 0, 1, 1], [], []>} : vector<8x16xbf16>, vector<16x512xbf16>, vector<8x512xf32> -> vector<8x512xf32>
    %75 = arith.addf %65, %74 : vector<8x512xf32>
    %c497_i32 = arith.constant 497 : i32
    %76 = tpu.dynamic_rotate %19 by %c497_i32 dim 1 : vector<16x512xf32>, i32 -> vector<16x512xf32>
    %c6 = arith.constant 6 : index
    %c0_48 = arith.constant 0 : index
    %c0_49 = arith.constant 0 : index
    %77 = vector.load %arg8[%c6, %c0_48, %c0_49] : memref<9x1x512xf32, #tpu.memory_space<vmem>>, vector<1x1x512xf32>
    %78 = vector.shape_cast %77 : vector<1x1x512xf32> to vector<1x512xf32>
    %79 = vector.broadcast %78 : vector<1x512xf32> to vector<16x512xf32>
    %80 = arith.mulf %76, %79 : vector<16x512xf32>
    %81 = arith.truncf %80 : vector<16x512xf32> to vector<16x512xbf16>
    %c6_50 = arith.constant 6 : index
    %c0_51 = arith.constant 0 : index
    %c0_52 = arith.constant 0 : index
    %82 = vector.load %arg7[%c6_50, %c0_51, %c0_52] : memref<9x8x16xbf16, #tpu.memory_space<vmem>>, vector<1x8x16xbf16>
    %83 = vector.shape_cast %82 : vector<1x8x16xbf16> to vector<8x16xbf16>
    %cst_53 = arith.constant dense<0.000000e+00> : vector<8x512xf32>
    %84 = tpu.matmul %83, %81, %cst_53 {dimension_numbers = #tpu.dot_dimension_numbers<[1], [0], [0], [1], [0, 0, 1, 1], [], []>} : vector<8x16xbf16>, vector<16x512xbf16>, vector<8x512xf32> -> vector<8x512xf32>
    %85 = arith.addf %75, %84 : vector<8x512xf32>
    %c496_i32 = arith.constant 496 : i32
    %86 = tpu.dynamic_rotate %19 by %c496_i32 dim 1 : vector<16x512xf32>, i32 -> vector<16x512xf32>
    %c7 = arith.constant 7 : index
    %c0_54 = arith.constant 0 : index
    %c0_55 = arith.constant 0 : index
    %87 = vector.load %arg8[%c7, %c0_54, %c0_55] : memref<9x1x512xf32, #tpu.memory_space<vmem>>, vector<1x1x512xf32>
    %88 = vector.shape_cast %87 : vector<1x1x512xf32> to vector<1x512xf32>
    %89 = vector.broadcast %88 : vector<1x512xf32> to vector<16x512xf32>
    %90 = arith.mulf %86, %89 : vector<16x512xf32>
    %91 = arith.truncf %90 : vector<16x512xf32> to vector<16x512xbf16>
    %c7_56 = arith.constant 7 : index
    %c0_57 = arith.constant 0 : index
    %c0_58 = arith.constant 0 : index
    %92 = vector.load %arg7[%c7_56, %c0_57, %c0_58] : memref<9x8x16xbf16, #tpu.memory_space<vmem>>, vector<1x8x16xbf16>
    %93 = vector.shape_cast %92 : vector<1x8x16xbf16> to vector<8x16xbf16>
    %cst_59 = arith.constant dense<0.000000e+00> : vector<8x512xf32>
    %94 = tpu.matmul %93, %91, %cst_59 {dimension_numbers = #tpu.dot_dimension_numbers<[1], [0], [0], [1], [0, 0, 1, 1], [], []>} : vector<8x16xbf16>, vector<16x512xbf16>, vector<8x512xf32> -> vector<8x512xf32>
    %95 = arith.addf %85, %94 : vector<8x512xf32>
    %c495_i32 = arith.constant 495 : i32
    %96 = tpu.dynamic_rotate %19 by %c495_i32 dim 1 : vector<16x512xf32>, i32 -> vector<16x512xf32>
    %c8 = arith.constant 8 : index
    %c0_60 = arith.constant 0 : index
    %c0_61 = arith.constant 0 : index
    %97 = vector.load %arg8[%c8, %c0_60, %c0_61] : memref<9x1x512xf32, #tpu.memory_space<vmem>>, vector<1x1x512xf32>
    %98 = vector.shape_cast %97 : vector<1x1x512xf32> to vector<1x512xf32>
    %99 = vector.broadcast %98 : vector<1x512xf32> to vector<16x512xf32>
    %100 = arith.mulf %96, %99 : vector<16x512xf32>
    %101 = arith.truncf %100 : vector<16x512xf32> to vector<16x512xbf16>
    %c8_62 = arith.constant 8 : index
    %c0_63 = arith.constant 0 : index
    %c0_64 = arith.constant 0 : index
    %102 = vector.load %arg7[%c8_62, %c0_63, %c0_64] : memref<9x8x16xbf16, #tpu.memory_space<vmem>>, vector<1x8x16xbf16>
    %103 = vector.shape_cast %102 : vector<1x8x16xbf16> to vector<8x16xbf16>
    %cst_65 = arith.constant dense<0.000000e+00> : vector<8x512xf32>
    %104 = tpu.matmul %103, %101, %cst_65 {dimension_numbers = #tpu.dot_dimension_numbers<[1], [0], [0], [1], [0, 0, 1, 1], [], []>} : vector<8x16xbf16>, vector<16x512xbf16>, vector<8x512xf32> -> vector<8x512xf32>
    %105 = arith.addf %95, %104 : vector<8x512xf32>
    %c0_66 = arith.constant 0 : index
    %c0_67 = arith.constant 0 : index
    %106 = vector.load %arg9[%c0_66, %c0_67] : memref<8x512xf32, #tpu.memory_space<vmem>>, vector<8x512xf32>
    tpu.vector_store %arg9[%c0_66, %c0_67], %105 {strides = array<i32>} : memref<8x512xf32, #tpu.memory_space<vmem>>, vector<8x512xf32>,
    return
  }
  func.func @transform_0(%arg0: i32) -> (i32, i32) {
    %c0_i32 = arith.constant 0 : i32
    %c0_i32_0 = arith.constant 0 : i32
    %c0_i32_1 = arith.constant 0 : i32
    return %c0_i32, %c0_i32_0 : i32, i32
  }
  func.func @transform_1(%arg0: i32) -> (i32, i32) {
    %c0_i32 = arith.constant 0 : i32
    %c0_i32_0 = arith.constant 0 : i32
    %c0_i32_1 = arith.constant 0 : i32
    return %c0_i32, %c0_i32_0 : i32, i32
  }
  func.func @transform_2(%arg0: i32) -> (i32, i32) {
    %c0_i32 = arith.constant 0 : i32
    %c0_i32_0 = arith.constant 0 : i32
    %c0_i32_1 = arith.constant 0 : i32
    return %c0_i32, %c0_i32_0 : i32, i32
  }
  func.func @transform_3(%arg0: i32) -> (i32, i32) {
    %c0_i32 = arith.constant 0 : i32
    %c0_i32_0 = arith.constant 0 : i32
    %c0_i32_1 = arith.constant 0 : i32
    return %c0_i32, %c0_i32_0 : i32, i32
  }
  func.func @transform_4(%arg0: i32) -> (i32, i32) {
    %c0_i32 = arith.constant 0 : i32
    %c0_i32_0 = arith.constant 0 : i32
    %c0_i32_1 = arith.constant 0 : i32
    return %c0_i32, %c0_i32_0 : i32, i32
  }
  func.func @transform_5(%arg0: i32) -> (i32, i32) {
    %c0_i32 = arith.constant 0 : i32
    %c0_i32_0 = arith.constant 0 : i32
    %c0_i32_1 = arith.constant 0 : i32
    return %c0_i32, %c0_i32_0 : i32, i32
  }
  func.func @transform_6(%arg0: i32) -> (i32, i32, i32) {
    %c0_i32 = arith.constant 0 : i32
    %c0_i32_0 = arith.constant 0 : i32
    %c0_i32_1 = arith.constant 0 : i32
    %c0_i32_2 = arith.constant 0 : i32
    return %c0_i32, %c0_i32_0, %c0_i32_1 : i32, i32, i32
  }
  func.func @transform_7(%arg0: i32) -> (i32, i32, i32) {
    %c0_i32 = arith.constant 0 : i32
    %c0_i32_0 = arith.constant 0 : i32
    %c0_i32_1 = arith.constant 0 : i32
    %c0_i32_2 = arith.constant 0 : i32
    return %c0_i32, %c0_i32_0, %c0_i32_1 : i32, i32, i32
  }
  func.func @transform_8(%arg0: i32) -> (i32, i32) {
    %c1_i32 = arith.constant 1 : i32
    %c0_i32 = arith.constant 0 : i32
    %c0_i32_0 = arith.constant 0 : i32
    return %c1_i32, %c0_i32 : i32, i32
  }
}

module attributes {stable_mosaic.version = 11 : i64} {
  func.func @kernel(%arg0: i32, %arg1: memref<16x512xf32, #tpu.memory_space<vmem>>, %arg2: memref<16x1xf32, #tpu.memory_space<vmem>>, %arg3: memref<16x1xf32, #tpu.memory_space<vmem>>, %arg4: memref<16x16xbf16, #tpu.memory_space<vmem>>, %arg5: memref<16x1xf32, #tpu.memory_space<vmem>>, %arg6: memref<16x1xf32, #tpu.memory_space<vmem>>, %arg7: memref<9x8x16xbf16, #tpu.memory_space<vmem>>, %arg8: memref<9x1x512xf32, #tpu.memory_space<vmem>>, %arg9: memref<8x512xf32, #tpu.memory_space<vmem>>) attributes {dimension_semantics = [#tpu.dimension_semantics<arbitrary>], iteration_bounds = array<i64: 1>, scalar_prefetch = 0 : i64, scratch_operands = 0 : i64, tpu.core_type = #tpu.core_type<tc>, window_params = [{transform_indices = @transform_0, window_bounds = array<i64: 16, 512>}, {pipeline_mode = #tpu.pipeline_mode<synchronous>, transform_indices = @transform_1, window_bounds = array<i64: 16, 1>}, {pipeline_mode = #tpu.pipeline_mode<synchronous>, transform_indices = @transform_2, window_bounds = array<i64: 16, 1>}, {pipeline_mode = #tpu.pipeline_mode<synchronous>, transform_indices = @transform_3, window_bounds = array<i64: 16, 16>}, {pipeline_mode = #tpu.pipeline_mode<synchronous>, transform_indices = @transform_4, window_bounds = array<i64: 16, 1>}, {pipeline_mode = #tpu.pipeline_mode<synchronous>, transform_indices = @transform_5, window_bounds = array<i64: 16, 1>}, {pipeline_mode = #tpu.pipeline_mode<synchronous>, transform_indices = @transform_6, window_bounds = array<i64: 9, 8, 16>}, {pipeline_mode = #tpu.pipeline_mode<synchronous>, transform_indices = @transform_7, window_bounds = array<i64: 9, 1, 512>}, {transform_indices = @transform_8, window_bounds = array<i64: 8, 512>}]} {
    %c0 = arith.constant 0 : index
    %c0_0 = arith.constant 0 : index
    %0 = vector.load %arg1[%c0, %c0_0] : memref<16x512xf32, #tpu.memory_space<vmem>>, vector<16x512xf32>
    %c0_1 = arith.constant 0 : index
    %c0_2 = arith.constant 0 : index
    %1 = vector.load %arg2[%c0_1, %c0_2] : memref<16x1xf32, #tpu.memory_space<vmem>>, vector<16x1xf32>
    %2 = vector.broadcast %1 : vector<16x1xf32> to vector<16x512xf32>
    %3 = arith.mulf %0, %2 : vector<16x512xf32>
    %c0_3 = arith.constant 0 : index
    %c0_4 = arith.constant 0 : index
    %4 = vector.load %arg3[%c0_3, %c0_4] : memref<16x1xf32, #tpu.memory_space<vmem>>, vector<16x1xf32>
    %5 = vector.broadcast %4 : vector<16x1xf32> to vector<16x512xf32>
    %6 = arith.addf %3, %5 : vector<16x512xf32>
    %cst = arith.constant 0.000000e+00 : f32
    %7 = vector.broadcast %cst : f32 to vector<16x512xf32>
    %8 = arith.maximumf %6, %7 : vector<16x512xf32>
    %c0_5 = arith.constant 0 : index
    %c0_6 = arith.constant 0 : index
    %9 = vector.load %arg4[%c0_5, %c0_6] : memref<16x16xbf16, #tpu.memory_space<vmem>>, vector<16x16xbf16>
    %10 = arith.truncf %8 : vector<16x512xf32> to vector<16x512xbf16>
    %cst_7 = arith.constant dense<0.000000e+00> : vector<16x512xf32>
    %11 = tpu.matmul %9, %10, %cst_7 {dimension_numbers = #tpu.dot_dimension_numbers<[1], [0], [0], [1], [0, 0, 1, 1], [], []>} : vector<16x16xbf16>, vector<16x512xbf16>, vector<16x512xf32> -> vector<16x512xf32>
    %c0_8 = arith.constant 0 : index
    %c0_9 = arith.constant 0 : index
    %12 = vector.load %arg5[%c0_8, %c0_9] : memref<16x1xf32, #tpu.memory_space<vmem>>, vector<16x1xf32>
    %13 = vector.broadcast %12 : vector<16x1xf32> to vector<16x512xf32>
    %14 = arith.mulf %11, %13 : vector<16x512xf32>
    %c0_10 = arith.constant 0 : index
    %c0_11 = arith.constant 0 : index
    %15 = vector.load %arg6[%c0_10, %c0_11] : memref<16x1xf32, #tpu.memory_space<vmem>>, vector<16x1xf32>
    %16 = vector.broadcast %15 : vector<16x1xf32> to vector<16x512xf32>
    %17 = arith.addf %14, %16 : vector<16x512xf32>
    %cst_12 = arith.constant 0.000000e+00 : f32
    %18 = vector.broadcast %cst_12 : f32 to vector<16x512xf32>
    %19 = arith.maximumf %17, %18 : vector<16x512xf32>
    %cst_13 = arith.constant 0.000000e+00 : f32
    %20 = vector.broadcast %cst_13 : f32 to vector<8x512xf32>
    %c17_i32 = arith.constant 17 : i32
    %21 = tpu.dynamic_rotate %19 by %c17_i32 dim 1 : vector<16x512xf32>, i32 -> vector<16x512xf32>
    %c0_14 = arith.constant 0 : index
    %c0_15 = arith.constant 0 : index
    %c0_16 = arith.constant 0 : index
    %22 = vector.load %arg8[%c0_14, %c0_15, %c0_16] : memref<9x1x512xf32, #tpu.memory_space<vmem>>, vector<1x1x512xf32>
    %23 = vector.shape_cast %22 : vector<1x1x512xf32> to vector<1x512xf32>
    %24 = vector.broadcast %23 : vector<1x512xf32> to vector<16x512xf32>
    %25 = arith.mulf %21, %24 : vector<16x512xf32>
    %26 = arith.truncf %25 : vector<16x512xf32> to vector<16x512xbf16>
    %c0_17 = arith.constant 0 : index
    %c0_18 = arith.constant 0 : index
    %c0_19 = arith.constant 0 : index
    %27 = vector.load %arg7[%c0_17, %c0_18, %c0_19] : memref<9x8x16xbf16, #tpu.memory_space<vmem>>, vector<1x8x16xbf16>
    %28 = vector.shape_cast %27 : vector<1x8x16xbf16> to vector<8x16xbf16>
    %cst_20 = arith.constant dense<0.000000e+00> : vector<8x512xf32>
    %29 = tpu.matmul %28, %26, %cst_20 {dimension_numbers = #tpu.dot_dimension_numbers<[1], [0], [0], [1], [0, 0, 1, 1], [], []>} : vector<8x16xbf16>, vector<16x512xbf16>, vector<8x512xf32> -> vector<8x512xf32>
    %30 = arith.addf %20, %29 : vector<8x512xf32>
    %c16_i32 = arith.constant 16 : i32
    %31 = tpu.dynamic_rotate %19 by %c16_i32 dim 1 : vector<16x512xf32>, i32 -> vector<16x512xf32>
    %c1 = arith.constant 1 : index
    %c0_21 = arith.constant 0 : index
    %c0_22 = arith.constant 0 : index
    %32 = vector.load %arg8[%c1, %c0_21, %c0_22] : memref<9x1x512xf32, #tpu.memory_space<vmem>>, vector<1x1x512xf32>
    %33 = vector.shape_cast %32 : vector<1x1x512xf32> to vector<1x512xf32>
    %34 = vector.broadcast %33 : vector<1x512xf32> to vector<16x512xf32>
    %35 = arith.mulf %31, %34 : vector<16x512xf32>
    %36 = arith.truncf %35 : vector<16x512xf32> to vector<16x512xbf16>
    %c1_23 = arith.constant 1 : index
    %c0_24 = arith.constant 0 : index
    %c0_25 = arith.constant 0 : index
    %37 = vector.load %arg7[%c1_23, %c0_24, %c0_25] : memref<9x8x16xbf16, #tpu.memory_space<vmem>>, vector<1x8x16xbf16>
    %38 = vector.shape_cast %37 : vector<1x8x16xbf16> to vector<8x16xbf16>
    %cst_26 = arith.constant dense<0.000000e+00> : vector<8x512xf32>
    %39 = tpu.matmul %38, %36, %cst_26 {dimension_numbers = #tpu.dot_dimension_numbers<[1], [0], [0], [1], [0, 0, 1, 1], [], []>} : vector<8x16xbf16>, vector<16x512xbf16>, vector<8x512xf32> -> vector<8x512xf32>
    %40 = arith.addf %30, %39 : vector<8x512xf32>
    %c15_i32 = arith.constant 15 : i32
    %41 = tpu.dynamic_rotate %19 by %c15_i32 dim 1 : vector<16x512xf32>, i32 -> vector<16x512xf32>
    %c2 = arith.constant 2 : index
    %c0_27 = arith.constant 0 : index
    %c0_28 = arith.constant 0 : index
    %42 = vector.load %arg8[%c2, %c0_27, %c0_28] : memref<9x1x512xf32, #tpu.memory_space<vmem>>, vector<1x1x512xf32>
    %43 = vector.shape_cast %42 : vector<1x1x512xf32> to vector<1x512xf32>
    %44 = vector.broadcast %43 : vector<1x512xf32> to vector<16x512xf32>
    %45 = arith.mulf %41, %44 : vector<16x512xf32>
    %46 = arith.truncf %45 : vector<16x512xf32> to vector<16x512xbf16>
    %c2_29 = arith.constant 2 : index
    %c0_30 = arith.constant 0 : index
    %c0_31 = arith.constant 0 : index
    %47 = vector.load %arg7[%c2_29, %c0_30, %c0_31] : memref<9x8x16xbf16, #tpu.memory_space<vmem>>, vector<1x8x16xbf16>
    %48 = vector.shape_cast %47 : vector<1x8x16xbf16> to vector<8x16xbf16>
    %cst_32 = arith.constant dense<0.000000e+00> : vector<8x512xf32>
    %49 = tpu.matmul %48, %46, %cst_32 {dimension_numbers = #tpu.dot_dimension_numbers<[1], [0], [0], [1], [0, 0, 1, 1], [], []>} : vector<8x16xbf16>, vector<16x512xbf16>, vector<8x512xf32> -> vector<8x512xf32>
    %50 = arith.addf %40, %49 : vector<8x512xf32>
    %c1_i32 = arith.constant 1 : i32
    %51 = tpu.dynamic_rotate %19 by %c1_i32 dim 1 : vector<16x512xf32>, i32 -> vector<16x512xf32>
    %c3 = arith.constant 3 : index
    %c0_33 = arith.constant 0 : index
    %c0_34 = arith.constant 0 : index
    %52 = vector.load %arg8[%c3, %c0_33, %c0_34] : memref<9x1x512xf32, #tpu.memory_space<vmem>>, vector<1x1x512xf32>
    %53 = vector.shape_cast %52 : vector<1x1x512xf32> to vector<1x512xf32>
    %54 = vector.broadcast %53 : vector<1x512xf32> to vector<16x512xf32>
    %55 = arith.mulf %51, %54 : vector<16x512xf32>
    %56 = arith.truncf %55 : vector<16x512xf32> to vector<16x512xbf16>
    %c3_35 = arith.constant 3 : index
    %c0_36 = arith.constant 0 : index
    %c0_37 = arith.constant 0 : index
    %57 = vector.load %arg7[%c3_35, %c0_36, %c0_37] : memref<9x8x16xbf16, #tpu.memory_space<vmem>>, vector<1x8x16xbf16>
    %58 = vector.shape_cast %57 : vector<1x8x16xbf16> to vector<8x16xbf16>
    %cst_38 = arith.constant dense<0.000000e+00> : vector<8x512xf32>
    %59 = tpu.matmul %58, %56, %cst_38 {dimension_numbers = #tpu.dot_dimension_numbers<[1], [0], [0], [1], [0, 0, 1, 1], [], []>} : vector<8x16xbf16>, vector<16x512xbf16>, vector<8x512xf32> -> vector<8x512xf32>
    %60 = arith.addf %50, %59 : vector<8x512xf32>
    %61 = arith.truncf %19 : vector<16x512xf32> to vector<16x512xbf16>
    %c4 = arith.constant 4 : index
    %c0_39 = arith.constant 0 : index
    %c0_40 = arith.constant 0 : index
    %62 = vector.load %arg7[%c4, %c0_39, %c0_40] : memref<9x8x16xbf16, #tpu.memory_space<vmem>>, vector<1x8x16xbf16>
    %63 = vector.shape_cast %62 : vector<1x8x16xbf16> to vector<8x16xbf16>
    %cst_41 = arith.constant dense<0.000000e+00> : vector<8x512xf32>
    %64 = tpu.matmul %63, %61, %cst_41 {dimension_numbers = #tpu.dot_dimension_numbers<[1], [0], [0], [1], [0, 0, 1, 1], [], []>} : vector<8x16xbf16>, vector<16x512xbf16>, vector<8x512xf32> -> vector<8x512xf32>
    %65 = arith.addf %60, %64 : vector<8x512xf32>
    %c511_i32 = arith.constant 511 : i32
    %66 = tpu.dynamic_rotate %19 by %c511_i32 dim 1 : vector<16x512xf32>, i32 -> vector<16x512xf32>
    %c5 = arith.constant 5 : index
    %c0_42 = arith.constant 0 : index
    %c0_43 = arith.constant 0 : index
    %67 = vector.load %arg8[%c5, %c0_42, %c0_43] : memref<9x1x512xf32, #tpu.memory_space<vmem>>, vector<1x1x512xf32>
    %68 = vector.shape_cast %67 : vector<1x1x512xf32> to vector<1x512xf32>
    %69 = vector.broadcast %68 : vector<1x512xf32> to vector<16x512xf32>
    %70 = arith.mulf %66, %69 : vector<16x512xf32>
    %71 = arith.truncf %70 : vector<16x512xf32> to vector<16x512xbf16>
    %c5_44 = arith.constant 5 : index
    %c0_45 = arith.constant 0 : index
    %c0_46 = arith.constant 0 : index
    %72 = vector.load %arg7[%c5_44, %c0_45, %c0_46] : memref<9x8x16xbf16, #tpu.memory_space<vmem>>, vector<1x8x16xbf16>
    %73 = vector.shape_cast %72 : vector<1x8x16xbf16> to vector<8x16xbf16>
    %cst_47 = arith.constant dense<0.000000e+00> : vector<8x512xf32>
    %74 = tpu.matmul %73, %71, %cst_47 {dimension_numbers = #tpu.dot_dimension_numbers<[1], [0], [0], [1], [0, 0, 1, 1], [], []>} : vector<8x16xbf16>, vector<16x512xbf16>, vector<8x512xf32> -> vector<8x512xf32>
    %75 = arith.addf %65, %74 : vector<8x512xf32>
    %c497_i32 = arith.constant 497 : i32
    %76 = tpu.dynamic_rotate %19 by %c497_i32 dim 1 : vector<16x512xf32>, i32 -> vector<16x512xf32>
    %c6 = arith.constant 6 : index
    %c0_48 = arith.constant 0 : index
    %c0_49 = arith.constant 0 : index
    %77 = vector.load %arg8[%c6, %c0_48, %c0_49] : memref<9x1x512xf32, #tpu.memory_space<vmem>>, vector<1x1x512xf32>
    %78 = vector.shape_cast %77 : vector<1x1x512xf32> to vector<1x512xf32>
    %79 = vector.broadcast %78 : vector<1x512xf32> to vector<16x512xf32>
    %80 = arith.mulf %76, %79 : vector<16x512xf32>
    %81 = arith.truncf %80 : vector<16x512xf32> to vector<16x512xbf16>
    %c6_50 = arith.constant 6 : index
    %c0_51 = arith.constant 0 : index
    %c0_52 = arith.constant 0 : index
    %82 = vector.load %arg7[%c6_50, %c0_51, %c0_52] : memref<9x8x16xbf16, #tpu.memory_space<vmem>>, vector<1x8x16xbf16>
    %83 = vector.shape_cast %82 : vector<1x8x16xbf16> to vector<8x16xbf16>
    %cst_53 = arith.constant dense<0.000000e+00> : vector<8x512xf32>
    %84 = tpu.matmul %83, %81, %cst_53 {dimension_numbers = #tpu.dot_dimension_numbers<[1], [0], [0], [1], [0, 0, 1, 1], [], []>} : vector<8x16xbf16>, vector<16x512xbf16>, vector<8x512xf32> -> vector<8x512xf32>
    %85 = arith.addf %75, %84 : vector<8x512xf32>
    %c496_i32 = arith.constant 496 : i32
    %86 = tpu.dynamic_rotate %19 by %c496_i32 dim 1 : vector<16x512xf32>, i32 -> vector<16x512xf32>
    %c7 = arith.constant 7 : index
    %c0_54 = arith.constant 0 : index
    %c0_55 = arith.constant 0 : index
    %87 = vector.load %arg8[%c7, %c0_54, %c0_55] : memref<9x1x512xf32, #tpu.memory_space<vmem>>, vector<1x1x512xf32>
    %88 = vector.shape_cast %87 : vector<1x1x512xf32> to vector<1x512xf32>
    %89 = vector.broadcast %88 : vector<1x512xf32> to vector<16x512xf32>
    %90 = arith.mulf %86, %89 : vector<16x512xf32>
    %91 = arith.truncf %90 : vector<16x512xf32> to vector<16x512xbf16>
    %c7_56 = arith.constant 7 : index
    %c0_57 = arith.constant 0 : index
    %c0_58 = arith.constant 0 : index
    %92 = vector.load %arg7[%c7_56, %c0_57, %c0_58] : memref<9x8x16xbf16, #tpu.memory_space<vmem>>, vector<1x8x16xbf16>
    %93 = vector.shape_cast %92 : vector<1x8x16xbf16> to vector<8x16xbf16>
    %cst_59 = arith.constant dense<0.000000e+00> : vector<8x512xf32>
    %94 = tpu.matmul %93, %91, %cst_59 {dimension_numbers = #tpu.dot_dimension_numbers<[1], [0], [0], [1], [0, 0, 1, 1], [], []>} : vector<8x16xbf16>, vector<16x512xbf16>, vector<8x512xf32> -> vector<8x512xf32>
    %95 = arith.addf %85, %94 : vector<8x512xf32>
    %c495_i32 = arith.constant 495 : i32
    %96 = tpu.dynamic_rotate %19 by %c495_i32 dim 1 : vector<16x512xf32>, i32 -> vector<16x512xf32>
    %c8 = arith.constant 8 : index
    %c0_60 = arith.constant 0 : index
    %c0_61 = arith.constant 0 : index
    %97 = vector.load %arg8[%c8, %c0_60, %c0_61] : memref<9x1x512xf32, #tpu.memory_space<vmem>>, vector<1x1x512xf32>
    %98 = vector.shape_cast %97 : vector<1x1x512xf32> to vector<1x512xf32>
    %99 = vector.broadcast %98 : vector<1x512xf32> to vector<16x512xf32>
    %100 = arith.mulf %96, %99 : vector<16x512xf32>
    %101 = arith.truncf %100 : vector<16x512xf32> to vector<16x512xbf16>
    %c8_62 = arith.constant 8 : index
    %c0_63 = arith.constant 0 : index
    %c0_64 = arith.constant 0 : index
    %102 = vector.load %arg7[%c8_62, %c0_63, %c0_64] : memref<9x8x16xbf16, #tpu.memory_space<vmem>>, vector<1x8x16xbf16>
    %103 = vector.shape_cast %102 : vector<1x8x16xbf16> to vector<8x16xbf16>
    %cst_65 = arith.constant dense<0.000000e+00> : vector<8x512xf32>
    %104 = tpu.matmul %103, %101, %cst_65 {dimension_numbers = #tpu.dot_dimension_numbers<[1], [0], [0], [1], [0, 0, 1, 1], [], []>} : vector<8x16xbf16>, vector<16x512xbf16>, vector<8x512xf32> -> vector<8x512xf32>
    %105 = arith.addf %95, %104 : vector<8x512xf32>
    %c0_66 = arith.constant 0 : index
    %c0_67 = arith.constant 0 : index
    %106 = vector.load %arg9[%c0_66, %c0_67] : memref<8x512xf32, #tpu.memory_space<vmem>>, vector<8x512xf32>
    tpu.vector_store %arg9[%c0_66, %c0_67], %105 {strides = array<i32>} : memref<8x512xf32, #tpu.memory_space<vmem>>, vector<8x512xf32>,
    return
  }
  func.func @transform_0(%arg0: i32) -> (i32, i32) {
    %c0_i32 = arith.constant 0 : i32
    %c0_i32_0 = arith.constant 0 : i32
    %c0_i32_1 = arith.constant 0 : i32
    return %c0_i32, %c0_i32_0 : i32, i32
  }
  func.func @transform_1(%arg0: i32) -> (i32, i32) {
    %c0_i32 = arith.constant 0 : i32
    %c0_i32_0 = arith.constant 0 : i32
    %c0_i32_1 = arith.constant 0 : i32
    return %c0_i32, %c0_i32_0 : i32, i32
  }
  func.func @transform_2(%arg0: i32) -> (i32, i32) {
    %c0_i32 = arith.constant 0 : i32
    %c0_i32_0 = arith.constant 0 : i32
    %c0_i32_1 = arith.constant 0 : i32
    return %c0_i32, %c0_i32_0 : i32, i32
  }
  func.func @transform_3(%arg0: i32) -> (i32, i32) {
    %c0_i32 = arith.constant 0 : i32
    %c0_i32_0 = arith.constant 0 : i32
    %c0_i32_1 = arith.constant 0 : i32
    return %c0_i32, %c0_i32_0 : i32, i32
  }
  func.func @transform_4(%arg0: i32) -> (i32, i32) {
    %c0_i32 = arith.constant 0 : i32
    %c0_i32_0 = arith.constant 0 : i32
    %c0_i32_1 = arith.constant 0 : i32
    return %c0_i32, %c0_i32_0 : i32, i32
  }
  func.func @transform_5(%arg0: i32) -> (i32, i32) {
    %c0_i32 = arith.constant 0 : i32
    %c0_i32_0 = arith.constant 0 : i32
    %c0_i32_1 = arith.constant 0 : i32
    return %c0_i32, %c0_i32_0 : i32, i32
  }
  func.func @transform_6(%arg0: i32) -> (i32, i32, i32) {
    %c0_i32 = arith.constant 0 : i32
    %c0_i32_0 = arith.constant 0 : i32
    %c0_i32_1 = arith.constant 0 : i32
    %c0_i32_2 = arith.constant 0 : i32
    return %c0_i32, %c0_i32_0, %c0_i32_1 : i32, i32, i32
  }
  func.func @transform_7(%arg0: i32) -> (i32, i32, i32) {
    %c0_i32 = arith.constant 0 : i32
    %c0_i32_0 = arith.constant 0 : i32
    %c0_i32_1 = arith.constant 0 : i32
    %c0_i32_2 = arith.constant 0 : i32
    return %c0_i32, %c0_i32_0, %c0_i32_1 : i32, i32, i32
  }
  func.func @transform_8(%arg0: i32) -> (i32, i32) {
    %c2_i32 = arith.constant 2 : i32
    %c0_i32 = arith.constant 0 : i32
    %c0_i32_0 = arith.constant 0 : i32
    return %c2_i32, %c0_i32 : i32, i32
  }
}

</mosaic_0001>

<llo_original>
// kernel: dense_block_apply.3
$region0: #{dense_block_apply.3}
  #allocation0 [shape = 'u32[]', space=smem, size = 0x4, offset = 0x4, fixed_abs, tag = 'smem constant byte address 0x4 - core index']
  #allocation1 [shape = 'u32[144,128]{1,0:T(1,128)}', space=vmem, size = 0x12000, scoped, tag = 'internal scratch']
  %s0 = inlined_call_operand.vmem [shape: f32[24,512], index: 0, kind: input, shape index: {}, may-alias: {0,8}]
  %s1 = inlined_call_operand.vmem [shape: f32[16,1], index: 1, kind: input, shape index: {}]
  %s2 = inlined_call_operand.vmem [shape: f32[16,1], index: 2, kind: input, shape index: {}]
  %s3 = inlined_call_operand.vmem [shape: bf16[16,16], index: 3, kind: input, shape index: {}]
  %s4 = inlined_call_operand.vmem [shape: f32[16,1], index: 4, kind: input, shape index: {}]
  %s5 = inlined_call_operand.vmem [shape: f32[16,1], index: 5, kind: input, shape index: {}]
  %s6 = inlined_call_operand.vmem [shape: bf16[9,8,16], index: 6, kind: input, shape index: {}]
  %s7 = inlined_call_operand.vmem [shape: f32[9,1,512], index: 7, kind: input, shape index: {}]
  %s8 = inlined_call_operand.vmem [shape: f32[24,512], index: 8, kind: output, shape index: {}, may-alias: {0,8}]
  %s9 = sld [smem:[#allocation0]]
  $region42: #{dense_block_apply.3} parent=0
    _
  %s11 = ssub.s32 1, %s9
  %s12 = scalar_select 0, %s11, %s9
  // Predicated region
  $region2: #{dense_block_apply.3} parent=0 // pred_check
    _
  $region3: #{dense_block_apply.3} parent=0 // pred_check_branch
    %14 = sbr.rel (0) target = $region5
  $region4: #{dense_block_apply.3} parent=0 // pred_region
    _
  $region5: #{dense_block_apply.3} parent=0 // pred_fallthru
    _
  // Predicated region
  $region6: #{dense_block_apply.3} parent=0 // pred_check
    _
  $region7: #{dense_block_apply.3} parent=0 // pred_check_branch
    %16 = sbr.rel (0) target = $region9
  $region8: #{dense_block_apply.3} parent=0 // pred_region
    _
  $region9: #{dense_block_apply.3} parent=0 // pred_fallthru
    _
  // Predicated region
  $region10: #{dense_block_apply.3} parent=0 // pred_check
    _
  $region11: #{dense_block_apply.3} parent=0 // pred_check_branch
    %18 = sbr.rel (0) target = $region13
  $region12: #{dense_block_apply.3} parent=0 // pred_region
    _
  $region13: #{dense_block_apply.3} parent=0 // pred_fallthru
    _
  // Predicated region
  $region14: #{dense_block_apply.3} parent=0 // pred_check
    _
  $region15: #{dense_block_apply.3} parent=0 // pred_check_branch
    %20 = sbr.rel (0) target = $region17
  $region16: #{dense_block_apply.3} parent=0 // pred_region
    _
  $region17: #{dense_block_apply.3} parent=0 // pred_fallthru
    _
  // Predicated region
  $region18: #{dense_block_apply.3} parent=0 // pred_check
    _
  $region19: #{dense_block_apply.3} parent=0 // pred_check_branch
    %22 = sbr.rel (0) target = $region21
  $region20: #{dense_block_apply.3} parent=0 // pred_region
    _
  $region21: #{dense_block_apply.3} parent=0 // pred_fallthru
    _
  // Predicated region
  $region22: #{dense_block_apply.3} parent=0 // pred_check
    _
  $region23: #{dense_block_apply.3} parent=0 // pred_check_branch
    %24 = sbr.rel (0) target = $region25
  $region24: #{dense_block_apply.3} parent=0 // pred_region
    _
  $region25: #{dense_block_apply.3} parent=0 // pred_fallthru
    _
  // Predicated region
  $region26: #{dense_block_apply.3} parent=0 // pred_check
    _
  $region27: #{dense_block_apply.3} parent=0 // pred_check_branch
    %26 = sbr.rel (0) target = $region29
  $region28: #{dense_block_apply.3} parent=0 // pred_region
    _
  $region29: #{dense_block_apply.3} parent=0 // pred_fallthru
    _
  // Predicated region
  $region30: #{dense_block_apply.3} parent=0 // pred_check
    _
  $region31: #{dense_block_apply.3} parent=0 // pred_check_branch
    %28 = sbr.rel (0) target = $region33
  $region32: #{dense_block_apply.3} parent=0 // pred_region
    _
  $region33: #{dense_block_apply.3} parent=0 // pred_fallthru
    _
  %s29 = scalar_lea.vmem %s8, 64
  %s30 = scalar_lea.vmem %s8, 64
  %v32 = vld [vmem:[%s0] sm:$0xff]
  %v33 = vld [vmem:[%s0 + $0x8] sm:$0xff]
  %v34 = vld [vmem:[%s0 + $0x10] sm:$0xff]
  %v35 = vld [vmem:[%s0 + $0x18] sm:$0xff]
  %v36 = vld [vmem:[%s0 + $0x20] sm:$0xff]
  %v37 = vld [vmem:[%s0 + $0x28] sm:$0xff]
  %v38 = vld [vmem:[%s0 + $0x30] sm:$0xff]
  %v39 = vld [vmem:[%s0 + $0x38] sm:$0xff]
  %v40 = vld [vmem:[%s1] sm:$0xff]
  %v41 = vld [vmem:[%s1 + $0x8] sm:$0xff]
  %43 = vset.pattern.permute.xlu0 0
  %44 = vperm.xlu0 %43, %v40
  %v45 = vpop.permute.xlu0 %44
  %48 = vset.pattern.permute.xlu0 0
  %49 = vperm.xlu0 %48, %v41
  %v50 = vpop.permute.xlu0 %49
  %v52 = vmul.f32 %v32, %v45
  %v53 = vmul.f32 %v33, %v45
  %v54 = vmul.f32 %v34, %v45
  %v55 = vmul.f32 %v35, %v45
  %v56 = vmul.f32 %v36, %v50
  %v57 = vmul.f32 %v37, %v50
  %v58 = vmul.f32 %v38, %v50
  %v59 = vmul.f32 %v39, %v50
  %v60 = vld [vmem:[%s2] sm:$0xff]
  %v61 = vld [vmem:[%s2 + $0x8] sm:$0xff]
  %63 = vset.pattern.permute.xlu0 0
  %64 = vperm.xlu0 %63, %v60
  %v65 = vpop.permute.xlu0 %64
  %68 = vset.pattern.permute.xlu0 0
  %69 = vperm.xlu0 %68, %v61
  %v70 = vpop.permute.xlu0 %69
  %v72 = vadd.f32 %v52, %v65
  %v73 = vadd.f32 %v53, %v65
  %v74 = vadd.f32 %v54, %v65
  %v75 = vadd.f32 %v55, %v65
  %v76 = vadd.f32 %v56, %v70
  %v77 = vadd.f32 %v57, %v70
  %v78 = vadd.f32 %v58, %v70
  %v79 = vadd.f32 %v59, %v70
  %v80 = vmax.f32 %v72, 0.0
  %v81 = vmax.f32 %v73, 0.0
  %v82 = vmax.f32 %v74, 0.0
  %v83 = vmax.f32 %v75, 0.0
  %v84 = vmax.f32 %v76, 0.0
  %v85 = vmax.f32 %v77, 0.0
  %v86 = vmax.f32 %v78, 0.0
  %v87 = vmax.f32 %v79, 0.0
  %v88 = vld [vmem:[%s3] sm:$0xf]
  %v89 = vld [vmem:[%s3 + $0x4] sm:$0xf]
  %v90 = vpack.c.bf16 %v84, %v80
  %v91 = vpack.c.bf16 %v85, %v81
  %v92 = vpack.c.bf16 %v86, %v82
  %v93 = vpack.c.bf16 %v87, %v83
  %v96 = vunpack.c.l.b16 %v88
  %v97 = vunpack.c.l.b16 %v89
  %v98 = vpack.c.b16 %v97, %v96
  %vm99 = vcmask 130048
  %v101 = vsel %vm99, %v98, 0
  %103 = vmatprep.subr.bf16.mxu0 %v91
  %104 = vmatpush1.bf16.msra.mxu0 %v90
  %105 = vmatprep.subr.bf16.mxu0 0
  %106 = vmatpush1.bf16.msra.mxu0 0
  %107 = vmatprep.subr.bf16.mxu0 0
  %108 = vmatpush1.bf16.msra.mxu0 0
  %109 = vmatprep.subr.bf16.mxu0 0
  %110 = vmatpush1.bf16.msra.mxu0 0
  %111 = vmatprep.subr.bf16.mxu0 0
  %112 = vmatpush1.bf16.msra.mxu0 0
  %113 = vmatprep.subr.bf16.mxu0 0
  %114 = vmatpush1.bf16.msra.mxu0 0
  %115 = vmatprep.subr.bf16.mxu0 0
  %116 = vmatpush1.bf16.msra.mxu0 0
  %117 = vmatprep.subr.bf16.mxu0 0
  %118 = vmatpush1.bf16.msra.mxu0 0
  %119 = vmatprep.subr.bf16.mxu0 0
  %120 = vmatpush1.bf16.msra.mxu0 0
  %121 = vmatprep.subr.bf16.mxu0 0
  %122 = vmatpush1.bf16.msra.mxu0 0
  %123 = vmatprep.subr.bf16.mxu0 0
  %124 = vmatpush1.bf16.msra.mxu0 0
  %125 = vmatprep.subr.bf16.mxu0 0
  %126 = vmatpush1.bf16.msra.mxu0 0
  %127 = vmatprep.subr.bf16.mxu0 0
  %128 = vmatpush1.bf16.msra.mxu0 0
  %129 = vmatprep.subr.bf16.mxu0 0
  %130 = vmatpush1.bf16.msra.mxu0 0
  %131 = vmatprep.subr.bf16.mxu0 0
  %132 = vmatpush1.bf16.msra.mxu0 0
  %133 = vmatprep.subr.bf16.mxu0 0
  %134 = vmatpush1.bf16.msra.mxu0 0
  %135 = vmatprep.mubr.bf16.mxu0 0
  %136 = vmatmul.mubr.bf16.gmra.mrb[0].mxu0 %v101
  %v137 = vpop.f32.mrb[0].mxu0
  %v138 = vadd.f32 0.0, %v137
  %v139 = vpop.f32.mrb[0].mxu0
  %v140 = vadd.f32 0.0, %v139
  %v141 = vpop.f32.mrb[0].mxu0
  %v142 = vadd.f32 0.0, %v141
  %v143 = vpop.f32.mrb[0].mxu0
  %v144 = vadd.f32 0.0, %v143
  %145 = vdwg.mxu0
  %146 = vmatprep.subr.bf16.mxu0 %v93
  %147 = vmatpush1.bf16.msra.mxu0 %v92
  %148 = vmatprep.subr.bf16.mxu0 0
  %149 = vmatpush1.bf16.msra.mxu0 0
  %150 = vmatprep.subr.bf16.mxu0 0
  %151 = vmatpush1.bf16.msra.mxu0 0
  %152 = vmatprep.subr.bf16.mxu0 0
  %153 = vmatpush1.bf16.msra.mxu0 0
  %154 = vmatprep.subr.bf16.mxu0 0
  %155 = vmatpush1.bf16.msra.mxu0 0
  %156 = vmatprep.subr.bf16.mxu0 0
  %157 = vmatpush1.bf16.msra.mxu0 0
  %158 = vmatprep.subr.bf16.mxu0 0
  %159 = vmatpush1.bf16.msra.mxu0 0
  %160 = vmatprep.subr.bf16.mxu0 0
  %161 = vmatpush1.bf16.msra.mxu0 0
  %162 = vmatprep.subr.bf16.mxu0 0
  %163 = vmatpush1.bf16.msra.mxu0 0
  %164 = vmatprep.subr.bf16.mxu0 0
  %165 = vmatpush1.bf16.msra.mxu0 0
  %166 = vmatprep.subr.bf16.mxu0 0
  %167 = vmatpush1.bf16.msra.mxu0 0
  %168 = vmatprep.subr.bf16.mxu0 0
  %169 = vmatpush1.bf16.msra.mxu0 0
  %170 = vmatprep.subr.bf16.mxu0 0
  %171 = vmatpush1.bf16.msra.mxu0 0
  %172 = vmatprep.subr.bf16.mxu0 0
  %173 = vmatpush1.bf16.msra.mxu0 0
  %174 = vmatprep.subr.bf16.mxu0 0
  %175 = vmatpush1.bf16.msra.mxu0 0
  %176 = vmatprep.subr.bf16.mxu0 0
  %177 = vmatpush1.bf16.msra.mxu0 0
  %178 = vmatprep.mubr.bf16.mxu0 0
  %179 = vmatmul.mubr.bf16.gmra.mrb[0].mxu0 %v101
  %v180 = vpop.f32.mrb[0].mxu0
  %v181 = vadd.f32 0.0, %v180
  %v182 = vpop.f32.mrb[0].mxu0
  %v183 = vadd.f32 0.0, %v182
  %v184 = vpop.f32.mrb[0].mxu0
  %v185 = vadd.f32 0.0, %v184
  %v186 = vpop.f32.mrb[0].mxu0
  %v187 = vadd.f32 0.0, %v186
  %188 = vdwg.mxu0
  %v189 = vld [vmem:[%s4] sm:$0xff]
  %v190 = vld [vmem:[%s4 + $0x8] sm:$0xff]
  %192 = vset.pattern.permute.xlu0 0
  %193 = vperm.xlu0 %192, %v189
  %v194 = vpop.permute.xlu0 %193
  %197 = vset.pattern.permute.xlu0 0
  %198 = vperm.xlu0 %197, %v190
  %v199 = vpop.permute.xlu0 %198
  %v201 = vmul.f32 %v138, %v194
  %v202 = vmul.f32 %v140, %v194
  %v203 = vmul.f32 %v181, %v194
  %v204 = vmul.f32 %v183, %v194
  %v205 = vmul.f32 %v142, %v199
  %v206 = vmul.f32 %v144, %v199
  %v207 = vmul.f32 %v185, %v199
  %v208 = vmul.f32 %v187, %v199
  %v209 = vld [vmem:[%s5] sm:$0xff]
  %v210 = vld [vmem:[%s5 + $0x8] sm:$0xff]
  %212 = vset.pattern.permute.xlu0 0
  %213 = vperm.xlu0 %212, %v209
  %v214 = vpop.permute.xlu0 %213
  %217 = vset.pattern.permute.xlu0 0
  %218 = vperm.xlu0 %217, %v210
  %v219 = vpop.permute.xlu0 %218
  %v221 = vadd.f32 %v201, %v214
  %v222 = vadd.f32 %v202, %v214
  %v223 = vadd.f32 %v203, %v214
  %v224 = vadd.f32 %v204, %v214
  %v225 = vadd.f32 %v205, %v219
  %v226 = vadd.f32 %v206, %v219
  %v227 = vadd.f32 %v207, %v219
  %v228 = vadd.f32 %v208, %v219
  %v229 = vmax.f32 %v221, 0.0
  %v230 = vmax.f32 %v222, 0.0
  %v231 = vmax.f32 %v223, 0.0
  %v232 = vmax.f32 %v224, 0.0
  %v233 = vmax.f32 %v225, 0.0
  %v234 = vmax.f32 %v226, 0.0
  %v235 = vmax.f32 %v227, 0.0
  %v236 = vmax.f32 %v228, 0.0
  %237 = vrot.lane.b32.xlu0 %v229, 17
  %v238 = vpop.permute.xlu0 %237
  %239 = vrot.lane.b32.xlu0 %v233, 17
  %v240 = vpop.permute.xlu0 %239
  %241 = vrot.lane.b32.xlu0 %v230, 17
  %v242 = vpop.permute.xlu0 %241
  %243 = vrot.lane.b32.xlu0 %v234, 17
  %v244 = vpop.permute.xlu0 %243
  %245 = vrot.lane.b32.xlu0 %v231, 17
  %v246 = vpop.permute.xlu0 %245
  %247 = vrot.lane.b32.xlu0 %v235, 17
  %v248 = vpop.permute.xlu0 %247
  %249 = vrot.lane.b32.xlu0 %v232, 17
  %v250 = vpop.permute.xlu0 %249
  %251 = vrot.lane.b32.xlu0 %v236, 17
  %v252 = vpop.permute.xlu0 %251
  %v253 = vlaneseq
  %v254 = vand.u32 %v253, 127
  %vm255 = vcmp.lt.s32.totalorder %v254, 17
  %v256 = vsel %vm255, %v246, %v250
  %v257 = vsel %vm255, %v248, %v252
  %v258 = vsel %vm255, %v242, %v246
  %v259 = vsel %vm255, %v244, %v248
  %v260 = vsel %vm255, %v238, %v242
  %v261 = vsel %vm255, %v240, %v244
  %v262 = vsel %vm255, %v250, %v238
  %v263 = vsel %vm255, %v252, %v240
  %v264 = vld [vmem:[%s7] sm:$0xf]
  %v266 = vlaneseq
  %v267 = vshrl.u32 %v266, 7
  %v268 = vsub.s32 0, %v267
  %v269 = vrot.slane %v264, %v268
  %v270 = vlaneseq
  %v271 = vshrl.u32 %v270, 7
  %v272 = vsub.s32 1, %v271
  %v273 = vrot.slane %v264, %v272
  %v274 = vlaneseq
  %v275 = vshrl.u32 %v274, 7
  %v276 = vsub.s32 2, %v275
  %v277 = vrot.slane %v264, %v276
  %v278 = vlaneseq
  %v279 = vshrl.u32 %v278, 7
  %v280 = vsub.s32 3, %v279
  %v281 = vrot.slane %v264, %v280
  %v286 = vmul.f32 %v262, %v269
  %v287 = vmul.f32 %v260, %v273
  %v288 = vmul.f32 %v258, %v277
  %v289 = vmul.f32 %v256, %v281
  %v290 = vmul.f32 %v263, %v269
  %v291 = vmul.f32 %v261, %v273
  %v292 = vmul.f32 %v259, %v277
  %v293 = vmul.f32 %v257, %v281
  %v294 = vpack.c.bf16 %v290, %v286
  %v295 = vpack.c.bf16 %v291, %v287
  %v296 = vpack.c.bf16 %v292, %v288
  %v297 = vpack.c.bf16 %v293, %v289
  %v298 = vld [vmem:[%s6] sm:$0xf]
  %299 = vrot.lane.b32.xlu0 %v229, 16
  %v300 = vpop.permute.xlu0 %299
  %301 = vrot.lane.b32.xlu0 %v233, 16
  %v302 = vpop.permute.xlu0 %301
  %303 = vrot.lane.b32.xlu0 %v230, 16
  %v304 = vpop.permute.xlu0 %303
  %305 = vrot.lane.b32.xlu0 %v234, 16
  %v306 = vpop.permute.xlu0 %305
  %307 = vrot.lane.b32.xlu0 %v231, 16
  %v308 = vpop.permute.xlu0 %307
  %309 = vrot.lane.b32.xlu0 %v235, 16
  %v310 = vpop.permute.xlu0 %309
  %311 = vrot.lane.b32.xlu0 %v232, 16
  %v312 = vpop.permute.xlu0 %311
  %313 = vrot.lane.b32.xlu0 %v236, 16
  %v314 = vpop.permute.xlu0 %313
  %vm315 = vcmp.lt.s32.totalorder %v254, 16
  %v316 = vsel %vm315, %v308, %v312
  %v317 = vsel %vm315, %v310, %v314
  %v318 = vsel %vm315, %v304, %v308
  %v319 = vsel %vm315, %v306, %v310
  %v320 = vsel %vm315, %v300, %v304
  %v321 = vsel %vm315, %v302, %v306
  %v322 = vsel %vm315, %v312, %v300
  %v323 = vsel %vm315, %v314, %v302
  %s324 = scalar_lea.vmem %s7, 4
  %v325 = vld [vmem:[%s324] sm:$0xf]
  %v327 = vlaneseq
  %v328 = vshrl.u32 %v327, 7
  %v329 = vsub.s32 0, %v328
  %v330 = vrot.slane %v325, %v329
  %v331 = vlaneseq
  %v332 = vshrl.u32 %v331, 7
  %v333 = vsub.s32 1, %v332
  %v334 = vrot.slane %v325, %v333
  %v335 = vlaneseq
  %v336 = vshrl.u32 %v335, 7
  %v337 = vsub.s32 2, %v336
  %v338 = vrot.slane %v325, %v337
  %v339 = vlaneseq
  %v340 = vshrl.u32 %v339, 7
  %v341 = vsub.s32 3, %v340
  %v342 = vrot.slane %v325, %v341
  %v347 = vmul.f32 %v322, %v330
  %v348 = vmul.f32 %v320, %v334
  %v349 = vmul.f32 %v318, %v338
  %v350 = vmul.f32 %v316, %v342
  %v351 = vmul.f32 %v323, %v330
  %v352 = vmul.f32 %v321, %v334
  %v353 = vmul.f32 %v319, %v338
  %v354 = vmul.f32 %v317, %v342
  %v355 = vpack.c.bf16 %v351, %v347
  %v356 = vpack.c.bf16 %v352, %v348
  %v357 = vpack.c.bf16 %v353, %v349
  %v358 = vpack.c.bf16 %v354, %v350
  %s359 = scalar_lea.vmem %s6, 4
  %v360 = vld [vmem:[%s359] sm:$0xf]
  %v362 = vsel %vm99, %v360, 0
  %364 = vmatprep.subr.bf16.mxu0 %v356
  %365 = vmatpush1.bf16.msra.mxu0 %v355
  %366 = vmatprep.subr.bf16.mxu0 0
  %367 = vmatpush1.bf16.msra.mxu0 0
  %368 = vmatprep.subr.bf16.mxu0 0
  %369 = vmatpush1.bf16.msra.mxu0 0
  %370 = vmatprep.subr.bf16.mxu0 0
  %371 = vmatpush1.bf16.msra.mxu0 0
  %372 = vmatprep.subr.bf16.mxu0 0
  %373 = vmatpush1.bf16.msra.mxu0 0
  %374 = vmatprep.subr.bf16.mxu0 0
  %375 = vmatpush1.bf16.msra.mxu0 0
  %376 = vmatprep.subr.bf16.mxu0 0
  %377 = vmatpush1.bf16.msra.mxu0 0
  %378 = vmatprep.subr.bf16.mxu0 0
  %379 = vmatpush1.bf16.msra.mxu0 0
  %380 = vmatprep.subr.bf16.mxu0 0
  %381 = vmatpush1.bf16.msra.mxu0 0
  %382 = vmatprep.subr.bf16.mxu0 0
  %383 = vmatpush1.bf16.msra.mxu0 0
  %384 = vmatprep.subr.bf16.mxu0 0
  %385 = vmatpush1.bf16.msra.mxu0 0
  %386 = vmatprep.subr.bf16.mxu0 0
  %387 = vmatpush1.bf16.msra.mxu0 0
  %388 = vmatprep.subr.bf16.mxu0 0
  %389 = vmatpush1.bf16.msra.mxu0 0
  %390 = vmatprep.subr.bf16.mxu0 0
  %391 = vmatpush1.bf16.msra.mxu0 0
  %392 = vmatprep.subr.bf16.mxu0 0
  %393 = vmatpush1.bf16.msra.mxu0 0
  %394 = vmatprep.subr.bf16.mxu0 0
  %395 = vmatpush1.bf16.msra.mxu0 0
  %396 = vmatprep.mubr.bf16.mxu0 0
  %397 = vmatmul.mubr.bf16.gmra.mrb[0].mxu0 %v362
  %v398 = vpop.f32.mrb[0].mxu0
  %v399 = vadd.f32 0.0, %v398
  %v400 = vpop.f32.mrb[0].mxu0
  %v401 = vadd.f32 0.0, %v400
  %v402 = vpop.f32.mrb[0].mxu0
  %v403 = vpop.f32.mrb[0].mxu0
  %404 = vdwg.mxu0
  %405 = vmatprep.subr.bf16.mxu0 %v358
  %406 = vmatpush1.bf16.msra.mxu0 %v357
  %407 = vmatprep.subr.bf16.mxu0 0
  %408 = vmatpush1.bf16.msra.mxu0 0
  %409 = vmatprep.subr.bf16.mxu0 0
  %410 = vmatpush1.bf16.msra.mxu0 0
  %411 = vmatprep.subr.bf16.mxu0 0
  %412 = vmatpush1.bf16.msra.mxu0 0
  %413 = vmatprep.subr.bf16.mxu0 0
  %414 = vmatpush1.bf16.msra.mxu0 0
  %415 = vmatprep.subr.bf16.mxu0 0
  %416 = vmatpush1.bf16.msra.mxu0 0
  %417 = vmatprep.subr.bf16.mxu0 0
  %418 = vmatpush1.bf16.msra.mxu0 0
  %419 = vmatprep.subr.bf16.mxu0 0
  %420 = vmatpush1.bf16.msra.mxu0 0
  %421 = vmatprep.subr.bf16.mxu0 0
  %422 = vmatpush1.bf16.msra.mxu0 0
  %423 = vmatprep.subr.bf16.mxu0 0
  %424 = vmatpush1.bf16.msra.mxu0 0
  %425 = vmatprep.subr.bf16.mxu0 0
  %426 = vmatpush1.bf16.msra.mxu0 0
  %427 = vmatprep.subr.bf16.mxu0 0
  %428 = vmatpush1.bf16.msra.mxu0 0
  %429 = vmatprep.subr.bf16.mxu0 0
  %430 = vmatpush1.bf16.msra.mxu0 0
  %431 = vmatprep.subr.bf16.mxu0 0
  %432 = vmatpush1.bf16.msra.mxu0 0
  %433 = vmatprep.subr.bf16.mxu0 0
  %434 = vmatpush1.bf16.msra.mxu0 0
  %435 = vmatprep.subr.bf16.mxu0 0
  %436 = vmatpush1.bf16.msra.mxu0 0
  %437 = vmatprep.mubr.bf16.mxu0 0
  %438 = vmatmul.mubr.bf16.gmra.mrb[0].mxu0 %v362
  %v439 = vpop.f32.mrb[0].mxu0
  %v440 = vadd.f32 0.0, %v439
  %v441 = vpop.f32.mrb[0].mxu0
  %v442 = vadd.f32 0.0, %v441
  %v443 = vpop.f32.mrb[0].mxu0
  %v444 = vpop.f32.mrb[0].mxu0
  %445 = vdwg.mxu0
  %v447 = vsel %vm99, %v298, 0
  %449 = vmatprep.subr.bf16.mxu0 %v295
  %450 = vmatpush1.bf16.msra.mxu0 %v294
  %451 = vmatprep.subr.bf16.mxu0 0
  %452 = vmatpush1.bf16.msra.mxu0 0
  %453 = vmatprep.subr.bf16.mxu0 0
  %454 = vmatpush1.bf16.msra.mxu0 0
  %455 = vmatprep.subr.bf16.mxu0 0
  %456 = vmatpush1.bf16.msra.mxu0 0
  %457 = vmatprep.subr.bf16.mxu0 0
  %458 = vmatpush1.bf16.msra.mxu0 0
  %459 = vmatprep.subr.bf16.mxu0 0
  %460 = vmatpush1.bf16.msra.mxu0 0
  %461 = vmatprep.subr.bf16.mxu0 0
  %462 = vmatpush1.bf16.msra.mxu0 0
  %463 = vmatprep.subr.bf16.mxu0 0
  %464 = vmatpush1.bf16.msra.mxu0 0
  %465 = vmatprep.subr.bf16.mxu0 0
  %466 = vmatpush1.bf16.msra.mxu0 0
  %467 = vmatprep.subr.bf16.mxu0 0
  %468 = vmatpush1.bf16.msra.mxu0 0
  %469 = vmatprep.subr.bf16.mxu0 0
  %470 = vmatpush1.bf16.msra.mxu0 0
  %471 = vmatprep.subr.bf16.mxu0 0
  %472 = vmatpush1.bf16.msra.mxu0 0
  %473 = vmatprep.subr.bf16.mxu0 0
  %474 = vmatpush1.bf16.msra.mxu0 0
  %475 = vmatprep.subr.bf16.mxu0 0
  %476 = vmatpush1.bf16.msra.mxu0 0
  %477 = vmatprep.subr.bf16.mxu0 0
  %478 = vmatpush1.bf16.msra.mxu0 0
  %479 = vmatprep.subr.bf16.mxu0 0
  %480 = vmatpush1.bf16.msra.mxu0 0
  %481 = vmatprep.mubr.bf16.mxu0 0
  %482 = vmatmul.mubr.bf16.gmra.mrb[0].mxu0 %v447
  %v483 = vpop.f32.mrb[0].mxu0
  %v484 = vadd.f32 %v399, %v483
  %v485 = vpop.f32.mrb[0].mxu0
  %v486 = vadd.f32 %v401, %v485
  %v487 = vpop.f32.mrb[0].mxu0
  %v488 = vpop.f32.mrb[0].mxu0
  %489 = vdwg.mxu0
  %490 = vmatprep.subr.bf16.mxu0 %v297
  %491 = vmatpush1.bf16.msra.mxu0 %v296
  %492 = vmatprep.subr.bf16.mxu0 0
  %493 = vmatpush1.bf16.msra.mxu0 0
  %494 = vmatprep.subr.bf16.mxu0 0
  %495 = vmatpush1.bf16.msra.mxu0 0
  %496 = vmatprep.subr.bf16.mxu0 0
  %497 = vmatpush1.bf16.msra.mxu0 0
  %498 = vmatprep.subr.bf16.mxu0 0
  %499 = vmatpush1.bf16.msra.mxu0 0
  %500 = vmatprep.subr.bf16.mxu0 0
  %501 = vmatpush1.bf16.msra.mxu0 0
  %502 = vmatprep.subr.bf16.mxu0 0
  %503 = vmatpush1.bf16.msra.mxu0 0
  %504 = vmatprep.subr.bf16.mxu0 0
  %505 = vmatpush1.bf16.msra.mxu0 0
  %506 = vmatprep.subr.bf16.mxu0 0
  %507 = vmatpush1.bf16.msra.mxu0 0
  %508 = vmatprep.subr.bf16.mxu0 0
  %509 = vmatpush1.bf16.msra.mxu0 0
  %510 = vmatprep.subr.bf16.mxu0 0
  %511 = vmatpush1.bf16.msra.mxu0 0
  %512 = vmatprep.subr.bf16.mxu0 0
  %513 = vmatpush1.bf16.msra.mxu0 0
  %514 = vmatprep.subr.bf16.mxu0 0
  %515 = vmatpush1.bf16.msra.mxu0 0
  %516 = vmatprep.subr.bf16.mxu0 0
  %517 = vmatpush1.bf16.msra.mxu0 0
  %518 = vmatprep.subr.bf16.mxu0 0
  %519 = vmatpush1.bf16.msra.mxu0 0
  %520 = vmatprep.subr.bf16.mxu0 0
  %521 = vmatpush1.bf16.msra.mxu0 0
  %522 = vmatprep.mubr.bf16.mxu0 0
  %523 = vmatmul.mubr.bf16.gmra.mrb[0].mxu0 %v447
  %v524 = vpop.f32.mrb[0].mxu0
  %v525 = vadd.f32 %v440, %v524
  %v526 = vpop.f32.mrb[0].mxu0
  %v527 = vadd.f32 %v442, %v526
  %v528 = vpop.f32.mrb[0].mxu0
  %v529 = vpop.f32.mrb[0].mxu0
  %530 = vdwg.mxu0
  %531 = vrot.lane.b32.xlu0 %v229, 15
  %v532 = vpop.permute.xlu0 %531
  %533 = vrot.lane.b32.xlu0 %v233, 15
  %v534 = vpop.permute.xlu0 %533
  %535 = vrot.lane.b32.xlu0 %v230, 15
  %v536 = vpop.permute.xlu0 %535
  %537 = vrot.lane.b32.xlu0 %v234, 15
  %v538 = vpop.permute.xlu0 %537
  %539 = vrot.lane.b32.xlu0 %v231, 15
  %v540 = vpop.permute.xlu0 %539
  %541 = vrot.lane.b32.xlu0 %v235, 15
  %v542 = vpop.permute.xlu0 %541
  %543 = vrot.lane.b32.xlu0 %v232, 15
  %v544 = vpop.permute.xlu0 %543
  %545 = vrot.lane.b32.xlu0 %v236, 15
  %v546 = vpop.permute.xlu0 %545
  %vm547 = vcmp.lt.s32.totalorder %v254, 15
  %v548 = vsel %vm547, %v540, %v544
  %v549 = vsel %vm547, %v542, %v546
  %v550 = vsel %vm547, %v536, %v540
  %v551 = vsel %vm547, %v538, %v542
  %v552 = vsel %vm547, %v532, %v536
  %v553 = vsel %vm547, %v534, %v538
  %v554 = vsel %vm547, %v544, %v532
  %v555 = vsel %vm547, %v546, %v534
  %s556 = scalar_lea.vmem %s7, 8
  %v557 = vld [vmem:[%s556] sm:$0xf]
  %v559 = vlaneseq
  %v560 = vshrl.u32 %v559, 7
  %v561 = vsub.s32 0, %v560
  %v562 = vrot.slane %v557, %v561
  %v563 = vlaneseq
  %v564 = vshrl.u32 %v563, 7
  %v565 = vsub.s32 1, %v564
  %v566 = vrot.slane %v557, %v565
  %v567 = vlaneseq
  %v568 = vshrl.u32 %v567, 7
  %v569 = vsub.s32 2, %v568
  %v570 = vrot.slane %v557, %v569
  %v571 = vlaneseq
  %v572 = vshrl.u32 %v571, 7
  %v573 = vsub.s32 3, %v572
  %v574 = vrot.slane %v557, %v573
  %v579 = vmul.f32 %v554, %v562
  %v580 = vmul.f32 %v552, %v566
  %v581 = vmul.f32 %v550, %v570
  %v582 = vmul.f32 %v548, %v574
  %v583 = vmul.f32 %v555, %v562
  %v584 = vmul.f32 %v553, %v566
  %v585 = vmul.f32 %v551, %v570
  %v586 = vmul.f32 %v549, %v574
  %v587 = vpack.c.bf16 %v583, %v579
  %v588 = vpack.c.bf16 %v584, %v580
  %v589 = vpack.c.bf16 %v585, %v581
  %v590 = vpack.c.bf16 %v586, %v582
  %s591 = scalar_lea.vmem %s6, 8
  %v592 = vld [vmem:[%s591] sm:$0xf]
  %v594 = vsel %vm99, %v592, 0
  %596 = vmatprep.subr.bf16.mxu0 %v588
  %597 = vmatpush1.bf16.msra.mxu0 %v587
  %598 = vmatprep.subr.bf16.mxu0 0
  %599 = vmatpush1.bf16.msra.mxu0 0
  %600 = vmatprep.subr.bf16.mxu0 0
  %601 = vmatpush1.bf16.msra.mxu0 0
  %602 = vmatprep.subr.bf16.mxu0 0
  %603 = vmatpush1.bf16.msra.mxu0 0
  %604 = vmatprep.subr.bf16.mxu0 0
  %605 = vmatpush1.bf16.msra.mxu0 0
  %606 = vmatprep.subr.bf16.mxu0 0
  %607 = vmatpush1.bf16.msra.mxu0 0
  %608 = vmatprep.subr.bf16.mxu0 0
  %609 = vmatpush1.bf16.msra.mxu0 0
  %610 = vmatprep.subr.bf16.mxu0 0
  %611 = vmatpush1.bf16.msra.mxu0 0
  %612 = vmatprep.subr.bf16.mxu0 0
  %613 = vmatpush1.bf16.msra.mxu0 0
  %614 = vmatprep.subr.bf16.mxu0 0
  %615 = vmatpush1.bf16.msra.mxu0 0
  %616 = vmatprep.subr.bf16.mxu0 0
  %617 = vmatpush1.bf16.msra.mxu0 0
  %618 = vmatprep.subr.bf16.mxu0 0
  %619 = vmatpush1.bf16.msra.mxu0 0
  %620 = vmatprep.subr.bf16.mxu0 0
  %621 = vmatpush1.bf16.msra.mxu0 0
  %622 = vmatprep.subr.bf16.mxu0 0
  %623 = vmatpush1.bf16.msra.mxu0 0
  %624 = vmatprep.subr.bf16.mxu0 0
  %625 = vmatpush1.bf16.msra.mxu0 0
  %626 = vmatprep.subr.bf16.mxu0 0
  %627 = vmatpush1.bf16.msra.mxu0 0
  %628 = vmatprep.mubr.bf16.mxu0 0
  %629 = vmatmul.mubr.bf16.gmra.mrb[0].mxu0 %v594
  %v630 = vpop.f32.mrb[0].mxu0
  %v631 = vadd.f32 0.0, %v630
  %v632 = vpop.f32.mrb[0].mxu0
  %v633 = vadd.f32 0.0, %v632
  %v634 = vpop.f32.mrb[0].mxu0
  %v635 = vpop.f32.mrb[0].mxu0
  %636 = vdwg.mxu0
  %637 = vmatprep.subr.bf16.mxu0 %v590
  %638 = vmatpush1.bf16.msra.mxu0 %v589
  %639 = vmatprep.subr.bf16.mxu0 0
  %640 = vmatpush1.bf16.msra.mxu0 0
  %641 = vmatprep.subr.bf16.mxu0 0
  %642 = vmatpush1.bf16.msra.mxu0 0
  %643 = vmatprep.subr.bf16.mxu0 0
  %644 = vmatpush1.bf16.msra.mxu0 0
  %645 = vmatprep.subr.bf16.mxu0 0
  %646 = vmatpush1.bf16.msra.mxu0 0
  %647 = vmatprep.subr.bf16.mxu0 0
  %648 = vmatpush1.bf16.msra.mxu0 0
  %649 = vmatprep.subr.bf16.mxu0 0
  %650 = vmatpush1.bf16.msra.mxu0 0
  %651 = vmatprep.subr.bf16.mxu0 0
  %652 = vmatpush1.bf16.msra.mxu0 0
  %653 = vmatprep.subr.bf16.mxu0 0
  %654 = vmatpush1.bf16.msra.mxu0 0
  %655 = vmatprep.subr.bf16.mxu0 0
  %656 = vmatpush1.bf16.msra.mxu0 0
  %657 = vmatprep.subr.bf16.mxu0 0
  %658 = vmatpush1.bf16.msra.mxu0 0
  %659 = vmatprep.subr.bf16.mxu0 0
  %660 = vmatpush1.bf16.msra.mxu0 0
  %661 = vmatprep.subr.bf16.mxu0 0
  %662 = vmatpush1.bf16.msra.mxu0 0
  %663 = vmatprep.subr.bf16.mxu0 0
  %664 = vmatpush1.bf16.msra.mxu0 0
  %665 = vmatprep.subr.bf16.mxu0 0
  %666 = vmatpush1.bf16.msra.mxu0 0
  %667 = vmatprep.subr.bf16.mxu0 0
  %668 = vmatpush1.bf16.msra.mxu0 0
  %669 = vmatprep.mubr.bf16.mxu0 0
  %670 = vmatmul.mubr.bf16.gmra.mrb[0].mxu0 %v594
  %v671 = vpop.f32.mrb[0].mxu0
  %v672 = vadd.f32 0.0, %v671
  %v673 = vpop.f32.mrb[0].mxu0
  %v674 = vadd.f32 0.0, %v673
  %v675 = vpop.f32.mrb[0].mxu0
  %v676 = vpop.f32.mrb[0].mxu0
  %677 = vdwg.mxu0
  %v678 = vadd.f32 %v484, %v631
  %v679 = vadd.f32 %v486, %v633
  %v680 = vadd.f32 %v525, %v672
  %v681 = vadd.f32 %v527, %v674
  %682 = vrot.lane.b32.xlu0 %v229, 1
  %v683 = vpop.permute.xlu0 %682
  %684 = vrot.lane.b32.xlu0 %v233, 1
  %v685 = vpop.permute.xlu0 %684
  %686 = vrot.lane.b32.xlu0 %v230, 1
  %v687 = vpop.permute.xlu0 %686
  %688 = vrot.lane.b32.xlu0 %v234, 1
  %v689 = vpop.permute.xlu0 %688
  %690 = vrot.lane.b32.xlu0 %v231, 1
  %v691 = vpop.permute.xlu0 %690
  %692 = vrot.lane.b32.xlu0 %v235, 1
  %v693 = vpop.permute.xlu0 %692
  %694 = vrot.lane.b32.xlu0 %v232, 1
  %v695 = vpop.permute.xlu0 %694
  %696 = vrot.lane.b32.xlu0 %v236, 1
  %v697 = vpop.permute.xlu0 %696
  %vm698 = vcmp.lt.s32.totalorder %v254, 1
  %v699 = vsel %vm698, %v691, %v695
  %v700 = vsel %vm698, %v693, %v697
  %v701 = vsel %vm698, %v687, %v691
  %v702 = vsel %vm698, %v689, %v693
  %v703 = vsel %vm698, %v683, %v687
  %v704 = vsel %vm698, %v685, %v689
  %v705 = vsel %vm698, %v695, %v683
  %v706 = vsel %vm698, %v697, %v685
  %s707 = scalar_lea.vmem %s7, 12
  %v708 = vld [vmem:[%s707] sm:$0xf]
  %v710 = vlaneseq
  %v711 = vshrl.u32 %v710, 7
  %v712 = vsub.s32 0, %v711
  %v713 = vrot.slane %v708, %v712
  %v714 = vlaneseq
  %v715 = vshrl.u32 %v714, 7
  %v716 = vsub.s32 1, %v715
  %v717 = vrot.slane %v708, %v716
  %v718 = vlaneseq
  %v719 = vshrl.u32 %v718, 7
  %v720 = vsub.s32 2, %v719
  %v721 = vrot.slane %v708, %v720
  %v722 = vlaneseq
  %v723 = vshrl.u32 %v722, 7
  %v724 = vsub.s32 3, %v723
  %v725 = vrot.slane %v708, %v724
  %v730 = vmul.f32 %v705, %v713
  %v731 = vmul.f32 %v703, %v717
  %v732 = vmul.f32 %v701, %v721
  %v733 = vmul.f32 %v699, %v725
  %v734 = vmul.f32 %v706, %v713
  %v735 = vmul.f32 %v704, %v717
  %v736 = vmul.f32 %v702, %v721
  %v737 = vmul.f32 %v700, %v725
  %v738 = vpack.c.bf16 %v734, %v730
  %v739 = vpack.c.bf16 %v735, %v731
  %v740 = vpack.c.bf16 %v736, %v732
  %v741 = vpack.c.bf16 %v737, %v733
  %s742 = scalar_lea.vmem %s6, 12
  %v743 = vld [vmem:[%s742] sm:$0xf]
  %v745 = vsel %vm99, %v743, 0
  %747 = vmatprep.subr.bf16.mxu0 %v739
  %748 = vmatpush1.bf16.msra.mxu0 %v738
  %749 = vmatprep.subr.bf16.mxu0 0
  %750 = vmatpush1.bf16.msra.mxu0 0
  %751 = vmatprep.subr.bf16.mxu0 0
  %752 = vmatpush1.bf16.msra.mxu0 0
  %753 = vmatprep.subr.bf16.mxu0 0
  %754 = vmatpush1.bf16.msra.mxu0 0
  %755 = vmatprep.subr.bf16.mxu0 0
  %756 = vmatpush1.bf16.msra.mxu0 0
  %757 = vmatprep.subr.bf16.mxu0 0
  %758 = vmatpush1.bf16.msra.mxu0 0
  %759 = vmatprep.subr.bf16.mxu0 0
  %760 = vmatpush1.bf16.msra.mxu0 0
  %761 = vmatprep.subr.bf16.mxu0 0
  %762 = vmatpush1.bf16.msra.mxu0 0
  %763 = vmatprep.subr.bf16.mxu0 0
  %764 = vmatpush1.bf16.msra.mxu0 0
  %765 = vmatprep.subr.bf16.mxu0 0
  %766 = vmatpush1.bf16.msra.mxu0 0
  %767 = vmatprep.subr.bf16.mxu0 0
  %768 = vmatpush1.bf16.msra.mxu0 0
  %769 = vmatprep.subr.bf16.mxu0 0
  %770 = vmatpush1.bf16.msra.mxu0 0
  %771 = vmatprep.subr.bf16.mxu0 0
  %772 = vmatpush1.bf16.msra.mxu0 0
  %773 = vmatprep.subr.bf16.mxu0 0
  %774 = vmatpush1.bf16.msra.mxu0 0
  %775 = vmatprep.subr.bf16.mxu0 0
  %776 = vmatpush1.bf16.msra.mxu0 0
  %777 = vmatprep.subr.bf16.mxu0 0
  %778 = vmatpush1.bf16.msra.mxu0 0
  %779 = vmatprep.mubr.bf16.mxu0 0
  %780 = vmatmul.mubr.bf16.gmra.mrb[0].mxu0 %v745
  %v781 = vpop.f32.mrb[0].mxu0
  %v782 = vadd.f32 0.0, %v781
  %v783 = vpop.f32.mrb[0].mxu0
  %v784 = vadd.f32 0.0, %v783
  %v785 = vpop.f32.mrb[0].mxu0
  %v786 = vpop.f32.mrb[0].mxu0
  %787 = vdwg.mxu0
  %788 = vmatprep.subr.bf16.mxu0 %v741
  %789 = vmatpush1.bf16.msra.mxu0 %v740
  %790 = vmatprep.subr.bf16.mxu0 0
  %791 = vmatpush1.bf16.msra.mxu0 0
  %792 = vmatprep.subr.bf16.mxu0 0
  %793 = vmatpush1.bf16.msra.mxu0 0
  %794 = vmatprep.subr.bf16.mxu0 0
  %795 = vmatpush1.bf16.msra.mxu0 0
  %796 = vmatprep.subr.bf16.mxu0 0
  %797 = vmatpush1.bf16.msra.mxu0 0
  %798 = vmatprep.subr.bf16.mxu0 0
  %799 = vmatpush1.bf16.msra.mxu0 0
  %800 = vmatprep.subr.bf16.mxu0 0
  %801 = vmatpush1.bf16.msra.mxu0 0
  %802 = vmatprep.subr.bf16.mxu0 0
  %803 = vmatpush1.bf16.msra.mxu0 0
  %804 = vmatprep.subr.bf16.mxu0 0
  %805 = vmatpush1.bf16.msra.mxu0 0
  %806 = vmatprep.subr.bf16.mxu0 0
  %807 = vmatpush1.bf16.msra.mxu0 0
  %808 = vmatprep.subr.bf16.mxu0 0
  %809 = vmatpush1.bf16.msra.mxu0 0
  %810 = vmatprep.subr.bf16.mxu0 0
  %811 = vmatpush1.bf16.msra.mxu0 0
  %812 = vmatprep.subr.bf16.mxu0 0
  %813 = vmatpush1.bf16.msra.mxu0 0
  %814 = vmatprep.subr.bf16.mxu0 0
  %815 = vmatpush1.bf16.msra.mxu0 0
  %816 = vmatprep.subr.bf16.mxu0 0
  %817 = vmatpush1.bf16.msra.mxu0 0
  %818 = vmatprep.subr.bf16.mxu0 0
  %819 = vmatpush1.bf16.msra.mxu0 0
  %820 = vmatprep.mubr.bf16.mxu0 0
  %821 = vmatmul.mubr.bf16.gmra.mrb[0].mxu0 %v745
  %v822 = vpop.f32.mrb[0].mxu0
  %v823 = vadd.f32 0.0, %v822
  %v824 = vpop.f32.mrb[0].mxu0
  %v825 = vadd.f32 0.0, %v824
  %v826 = vpop.f32.mrb[0].mxu0
  %v827 = vpop.f32.mrb[0].mxu0
  %828 = vdwg.mxu0
  %v829 = vadd.f32 %v678, %v782
  %v830 = vadd.f32 %v679, %v784
  %v831 = vadd.f32 %v680, %v823
  %v832 = vadd.f32 %v681, %v825
  %v833 = vpack.c.bf16 %v233, %v229
  %v834 = vpack.c.bf16 %v234, %v230
  %v835 = vpack.c.bf16 %v235, %v231
  %v836 = vpack.c.bf16 %v236, %v232
  %s837 = scalar_lea.vmem %s6, 16
  %v838 = vld [vmem:[%s837] sm:$0xf]
  %v840 = vsel %vm99, %v838, 0
  %842 = vmatprep.subr.bf16.mxu0 %v834
  %843 = vmatpush1.bf16.msra.mxu0 %v833
  %844 = vmatprep.subr.bf16.mxu0 0
  %845 = vmatpush1.bf16.msra.mxu0 0
  %846 = vmatprep.subr.bf16.mxu0 0
  %847 = vmatpush1.bf16.msra.mxu0 0
  %848 = vmatprep.subr.bf16.mxu0 0
  %849 = vmatpush1.bf16.msra.mxu0 0
  %850 = vmatprep.subr.bf16.mxu0 0
  %851 = vmatpush1.bf16.msra.mxu0 0
  %852 = vmatprep.subr.bf16.mxu0 0
  %853 = vmatpush1.bf16.msra.mxu0 0
  %854 = vmatprep.subr.bf16.mxu0 0
  %855 = vmatpush1.bf16.msra.mxu0 0
  %856 = vmatprep.subr.bf16.mxu0 0
  %857 = vmatpush1.bf16.msra.mxu0 0
  %858 = vmatprep.subr.bf16.mxu0 0
  %859 = vmatpush1.bf16.msra.mxu0 0
  %860 = vmatprep.subr.bf16.mxu0 0
  %861 = vmatpush1.bf16.msra.mxu0 0
  %862 = vmatprep.subr.bf16.mxu0 0
  %863 = vmatpush1.bf16.msra.mxu0 0
  %864 = vmatprep.subr.bf16.mxu0 0
  %865 = vmatpush1.bf16.msra.mxu0 0
  %866 = vmatprep.subr.bf16.mxu0 0
  %867 = vmatpush1.bf16.msra.mxu0 0
  %868 = vmatprep.subr.bf16.mxu0 0
  %869 = vmatpush1.bf16.msra.mxu0 0
  %870 = vmatprep.subr.bf16.mxu0 0
  %871 = vmatpush1.bf16.msra.mxu0 0
  %872 = vmatprep.subr.bf16.mxu0 0
  %873 = vmatpush1.bf16.msra.mxu0 0
  %874 = vmatprep.mubr.bf16.mxu0 0
  %875 = vmatmul.mubr.bf16.gmra.mrb[0].mxu0 %v840
  %v876 = vpop.f32.mrb[0].mxu0
  %v877 = vadd.f32 0.0, %v876
  %v878 = vpop.f32.mrb[0].mxu0
  %v879 = vadd.f32 0.0, %v878
  %v880 = vpop.f32.mrb[0].mxu0
  %v881 = vpop.f32.mrb[0].mxu0
  %882 = vdwg.mxu0
  %883 = vmatprep.subr.bf16.mxu0 %v836
  %884 = vmatpush1.bf16.msra.mxu0 %v835
  %885 = vmatprep.subr.bf16.mxu0 0
  %886 = vmatpush1.bf16.msra.mxu0 0
  %887 = vmatprep.subr.bf16.mxu0 0
  %888 = vmatpush1.bf16.msra.mxu0 0
  %889 = vmatprep.subr.bf16.mxu0 0
  %890 = vmatpush1.bf16.msra.mxu0 0
  %891 = vmatprep.subr.bf16.mxu0 0
  %892 = vmatpush1.bf16.msra.mxu0 0
  %893 = vmatprep.subr.bf16.mxu0 0
  %894 = vmatpush1.bf16.msra.mxu0 0
  %895 = vmatprep.subr.bf16.mxu0 0
  %896 = vmatpush1.bf16.msra.mxu0 0
  %897 = vmatprep.subr.bf16.mxu0 0
  %898 = vmatpush1.bf16.msra.mxu0 0
  %899 = vmatprep.subr.bf16.mxu0 0
  %900 = vmatpush1.bf16.msra.mxu0 0
  %901 = vmatprep.subr.bf16.mxu0 0
  %902 = vmatpush1.bf16.msra.mxu0 0
  %903 = vmatprep.subr.bf16.mxu0 0
  %904 = vmatpush1.bf16.msra.mxu0 0
  %905 = vmatprep.subr.bf16.mxu0 0
  %906 = vmatpush1.bf16.msra.mxu0 0
  %907 = vmatprep.subr.bf16.mxu0 0
  %908 = vmatpush1.bf16.msra.mxu0 0
  %909 = vmatprep.subr.bf16.mxu0 0
  %910 = vmatpush1.bf16.msra.mxu0 0
  %911 = vmatprep.subr.bf16.mxu0 0
  %912 = vmatpush1.bf16.msra.mxu0 0
  %913 = vmatprep.subr.bf16.mxu0 0
  %914 = vmatpush1.bf16.msra.mxu0 0
  %915 = vmatprep.mubr.bf16.mxu0 0
  %916 = vmatmul.mubr.bf16.gmra.mrb[0].mxu0 %v840
  %v917 = vpop.f32.mrb[0].mxu0
  %v918 = vadd.f32 0.0, %v917
  %v919 = vpop.f32.mrb[0].mxu0
  %v920 = vadd.f32 0.0, %v919
  %v921 = vpop.f32.mrb[0].mxu0
  %v922 = vpop.f32.mrb[0].mxu0
  %923 = vdwg.mxu0
  %v924 = vadd.f32 %v829, %v877
  %v925 = vadd.f32 %v830, %v879
  %v926 = vadd.f32 %v831, %v918
  %v927 = vadd.f32 %v832, %v920
  %928 = vrot.lane.b32.xlu0 %v229, 127
  %v929 = vpop.permute.xlu0 %928
  %930 = vrot.lane.b32.xlu0 %v233, 127
  %v931 = vpop.permute.xlu0 %930
  %932 = vrot.lane.b32.xlu0 %v230, 127
  %v933 = vpop.permute.xlu0 %932
  %934 = vrot.lane.b32.xlu0 %v234, 127
  %v935 = vpop.permute.xlu0 %934
  %936 = vrot.lane.b32.xlu0 %v231, 127
  %v937 = vpop.permute.xlu0 %936
  %938 = vrot.lane.b32.xlu0 %v235, 127
  %v939 = vpop.permute.xlu0 %938
  %940 = vrot.lane.b32.xlu0 %v232, 127
  %v941 = vpop.permute.xlu0 %940
  %942 = vrot.lane.b32.xlu0 %v236, 127
  %v943 = vpop.permute.xlu0 %942
  %vm944 = vcmp.lt.s32.totalorder %v254, 127
  %v945 = vsel %vm944, %v937, %v941
  %v946 = vsel %vm944, %v939, %v943
  %v947 = vsel %vm944, %v933, %v937
  %v948 = vsel %vm944, %v935, %v939
  %v949 = vsel %vm944, %v929, %v933
  %v950 = vsel %vm944, %v931, %v935
  %v951 = vsel %vm944, %v941, %v929
  %v952 = vsel %vm944, %v943, %v931
  %s953 = scalar_lea.vmem %s7, 20
  %v954 = vld [vmem:[%s953] sm:$0xf]
  %v956 = vlaneseq
  %v957 = vshrl.u32 %v956, 7
  %v958 = vsub.s32 0, %v957
  %v959 = vrot.slane %v954, %v958
  %v960 = vlaneseq
  %v961 = vshrl.u32 %v960, 7
  %v962 = vsub.s32 1, %v961
  %v963 = vrot.slane %v954, %v962
  %v964 = vlaneseq
  %v965 = vshrl.u32 %v964, 7
  %v966 = vsub.s32 2, %v965
  %v967 = vrot.slane %v954, %v966
  %v968 = vlaneseq
  %v969 = vshrl.u32 %v968, 7
  %v970 = vsub.s32 3, %v969
  %v971 = vrot.slane %v954, %v970
  %v976 = vmul.f32 %v949, %v959
  %v977 = vmul.f32 %v947, %v963
  %v978 = vmul.f32 %v945, %v967
  %v979 = vmul.f32 %v951, %v971
  %v980 = vmul.f32 %v950, %v959
  %v981 = vmul.f32 %v948, %v963
  %v982 = vmul.f32 %v946, %v967
  %v983 = vmul.f32 %v952, %v971
  %v984 = vpack.c.bf16 %v980, %v976
  %v985 = vpack.c.bf16 %v981, %v977
  %v986 = vpack.c.bf16 %v982, %v978
  %v987 = vpack.c.bf16 %v983, %v979
  %s988 = scalar_lea.vmem %s6, 20
  %v989 = vld [vmem:[%s988] sm:$0xf]
  %v991 = vsel %vm99, %v989, 0
  %993 = vmatprep.subr.bf16.mxu0 %v985
  %994 = vmatpush1.bf16.msra.mxu0 %v984
  %995 = vmatprep.subr.bf16.mxu0 0
  %996 = vmatpush1.bf16.msra.mxu0 0
  %997 = vmatprep.subr.bf16.mxu0 0
  %998 = vmatpush1.bf16.msra.mxu0 0
  %999 = vmatprep.subr.bf16.mxu0 0
  %1000 = vmatpush1.bf16.msra.mxu0 0
  %1001 = vmatprep.subr.bf16.mxu0 0
  %1002 = vmatpush1.bf16.msra.mxu0 0
  %1003 = vmatprep.subr.bf16.mxu0 0
  %1004 = vmatpush1.bf16.msra.mxu0 0
  %1005 = vmatprep.subr.bf16.mxu0 0
  %1006 = vmatpush1.bf16.msra.mxu0 0
  %1007 = vmatprep.subr.bf16.mxu0 0
  %1008 = vmatpush1.bf16.msra.mxu0 0
  %1009 = vmatprep.subr.bf16.mxu0 0
  %1010 = vmatpush1.bf16.msra.mxu0 0
  %1011 = vmatprep.subr.bf16.mxu0 0
  %1012 = vmatpush1.bf16.msra.mxu0 0
  %1013 = vmatprep.subr.bf16.mxu0 0
  %1014 = vmatpush1.bf16.msra.mxu0 0
  %1015 = vmatprep.subr.bf16.mxu0 0
  %1016 = vmatpush1.bf16.msra.mxu0 0
  %1017 = vmatprep.subr.bf16.mxu0 0
  %1018 = vmatpush1.bf16.msra.mxu0 0
  %1019 = vmatprep.subr.bf16.mxu0 0
  %1020 = vmatpush1.bf16.msra.mxu0 0
  %1021 = vmatprep.subr.bf16.mxu0 0
  %1022 = vmatpush1.bf16.msra.mxu0 0
  %1023 = vmatprep.subr.bf16.mxu0 0
  %1024 = vmatpush1.bf16.msra.mxu0 0
  %1025 = vmatprep.mubr.bf16.mxu0 0
  %1026 = vmatmul.mubr.bf16.gmra.mrb[0].mxu0 %v991
  %v1027 = vpop.f32.mrb[0].mxu0
  %v1028 = vadd.f32 0.0, %v1027
  %v1029 = vpop.f32.mrb[0].mxu0
  %v1030 = vadd.f32 0.0, %v1029
  %v1031 = vpop.f32.mrb[0].mxu0
  %v1032 = vpop.f32.mrb[0].mxu0
  %1033 = vdwg.mxu0
  %1034 = vmatprep.subr.bf16.mxu0 %v987
  %1035 = vmatpush1.bf16.msra.mxu0 %v986
  %1036 = vmatprep.subr.bf16.mxu0 0
  %1037 = vmatpush1.bf16.msra.mxu0 0
  %1038 = vmatprep.subr.bf16.mxu0 0
  %1039 = vmatpush1.bf16.msra.mxu0 0
  %1040 = vmatprep.subr.bf16.mxu0 0
  %1041 = vmatpush1.bf16.msra.mxu0 0
  %1042 = vmatprep.subr.bf16.mxu0 0
  %1043 = vmatpush1.bf16.msra.mxu0 0
  %1044 = vmatprep.subr.bf16.mxu0 0
  %1045 = vmatpush1.bf16.msra.mxu0 0
  %1046 = vmatprep.subr.bf16.mxu0 0
  %1047 = vmatpush1.bf16.msra.mxu0 0
  %1048 = vmatprep.subr.bf16.mxu0 0
  %1049 = vmatpush1.bf16.msra.mxu0 0
  %1050 = vmatprep.subr.bf16.mxu0 0
  %1051 = vmatpush1.bf16.msra.mxu0 0
  %1052 = vmatprep.subr.bf16.mxu0 0
  %1053 = vmatpush1.bf16.msra.mxu0 0
  %1054 = vmatprep.subr.bf16.mxu0 0
  %1055 = vmatpush1.bf16.msra.mxu0 0
  %1056 = vmatprep.subr.bf16.mxu0 0
  %1057 = vmatpush1.bf16.msra.mxu0 0
  %1058 = vmatprep.subr.bf16.mxu0 0
  %1059 = vmatpush1.bf16.msra.mxu0 0
  %1060 = vmatprep.subr.bf16.mxu0 0
  %1061 = vmatpush1.bf16.msra.mxu0 0
  %1062 = vmatprep.subr.bf16.mxu0 0
  %1063 = vmatpush1.bf16.msra.mxu0 0
  %1064 = vmatprep.subr.bf16.mxu0 0
  %1065 = vmatpush1.bf16.msra.mxu0 0
  %1066 = vmatprep.mubr.bf16.mxu0 0
  %1067 = vmatmul.mubr.bf16.gmra.mrb[0].mxu0 %v991
  %v1068 = vpop.f32.mrb[0].mxu0
  %v1069 = vadd.f32 0.0, %v1068
  %v1070 = vpop.f32.mrb[0].mxu0
  %v1071 = vadd.f32 0.0, %v1070
  %v1072 = vpop.f32.mrb[0].mxu0
  %v1073 = vpop.f32.mrb[0].mxu0
  %1074 = vdwg.mxu0
  %v1075 = vadd.f32 %v924, %v1028
  %v1076 = vadd.f32 %v925, %v1030
  %v1077 = vadd.f32 %v926, %v1069
  %v1078 = vadd.f32 %v927, %v1071
  %1079 = vrot.lane.b32.xlu0 %v229, 113
  %v1080 = vpop.permute.xlu0 %1079
  %1081 = vrot.lane.b32.xlu0 %v233, 113
  %v1082 = vpop.permute.xlu0 %1081
  %1083 = vrot.lane.b32.xlu0 %v230, 113
  %v1084 = vpop.permute.xlu0 %1083
  %1085 = vrot.lane.b32.xlu0 %v234, 113
  %v1086 = vpop.permute.xlu0 %1085
  %1087 = vrot.lane.b32.xlu0 %v231, 113
  %v1088 = vpop.permute.xlu0 %1087
  %1089 = vrot.lane.b32.xlu0 %v235, 113
  %v1090 = vpop.permute.xlu0 %1089
  %1091 = vrot.lane.b32.xlu0 %v232, 113
  %v1092 = vpop.permute.xlu0 %1091
  %1093 = vrot.lane.b32.xlu0 %v236, 113
  %v1094 = vpop.permute.xlu0 %1093
  %vm1095 = vcmp.lt.s32.totalorder %v254, 113
  %v1096 = vsel %vm1095, %v1088, %v1092
  %v1097 = vsel %vm1095, %v1090, %v1094
  %v1098 = vsel %vm1095, %v1084, %v1088
  %v1099 = vsel %vm1095, %v1086, %v1090
  %v1100 = vsel %vm1095, %v1080, %v1084
  %v1101 = vsel %vm1095, %v1082, %v1086
  %v1102 = vsel %vm1095, %v1092, %v1080
  %v1103 = vsel %vm1095, %v1094, %v1082
  %s1104 = scalar_lea.vmem %s7, 24
  %v1105 = vld [vmem:[%s1104] sm:$0xf]
  %v1107 = vlaneseq
  %v1108 = vshrl.u32 %v1107, 7
  %v1109 = vsub.s32 0, %v1108
  %v1110 = vrot.slane %v1105, %v1109
  %v1111 = vlaneseq
  %v1112 = vshrl.u32 %v1111, 7
  %v1113 = vsub.s32 1, %v1112
  %v1114 = vrot.slane %v1105, %v1113
  %v1115 = vlaneseq
  %v1116 = vshrl.u32 %v1115, 7
  %v1117 = vsub.s32 2, %v1116
  %v1118 = vrot.slane %v1105, %v1117
  %v1119 = vlaneseq
  %v1120 = vshrl.u32 %v1119, 7
  %v1121 = vsub.s32 3, %v1120
  %v1122 = vrot.slane %v1105, %v1121
  %v1127 = vmul.f32 %v1100, %v1110
  %v1128 = vmul.f32 %v1098, %v1114
  %v1129 = vmul.f32 %v1096, %v1118
  %v1130 = vmul.f32 %v1102, %v1122
  %v1131 = vmul.f32 %v1101, %v1110
  %v1132 = vmul.f32 %v1099, %v1114
  %v1133 = vmul.f32 %v1097, %v1118
  %v1134 = vmul.f32 %v1103, %v1122
  %v1135 = vpack.c.bf16 %v1131, %v1127
  %v1136 = vpack.c.bf16 %v1132, %v1128
  %v1137 = vpack.c.bf16 %v1133, %v1129
  %v1138 = vpack.c.bf16 %v1134, %v1130
  %s1139 = scalar_lea.vmem %s6, 24
  %v1140 = vld [vmem:[%s1139] sm:$0xf]
  %v1142 = vsel %vm99, %v1140, 0
  %1144 = vmatprep.subr.bf16.mxu0 %v1136
  %1145 = vmatpush1.bf16.msra.mxu0 %v1135
  %1146 = vmatprep.subr.bf16.mxu0 0
  %1147 = vmatpush1.bf16.msra.mxu0 0
  %1148 = vmatprep.subr.bf16.mxu0 0
  %1149 = vmatpush1.bf16.msra.mxu0 0
  %1150 = vmatprep.subr.bf16.mxu0 0
  %1151 = vmatpush1.bf16.msra.mxu0 0
  %1152 = vmatprep.subr.bf16.mxu0 0
  %1153 = vmatpush1.bf16.msra.mxu0 0
  %1154 = vmatprep.subr.bf16.mxu0 0
  %1155 = vmatpush1.bf16.msra.mxu0 0
  %1156 = vmatprep.subr.bf16.mxu0 0
  %1157 = vmatpush1.bf16.msra.mxu0 0
  %1158 = vmatprep.subr.bf16.mxu0 0
  %1159 = vmatpush1.bf16.msra.mxu0 0
  %1160 = vmatprep.subr.bf16.mxu0 0
  %1161 = vmatpush1.bf16.msra.mxu0 0
  %1162 = vmatprep.subr.bf16.mxu0 0
  %1163 = vmatpush1.bf16.msra.mxu0 0
  %1164 = vmatprep.subr.bf16.mxu0 0
  %1165 = vmatpush1.bf16.msra.mxu0 0
  %1166 = vmatprep.subr.bf16.mxu0 0
  %1167 = vmatpush1.bf16.msra.mxu0 0
  %1168 = vmatprep.subr.bf16.mxu0 0
  %1169 = vmatpush1.bf16.msra.mxu0 0
  %1170 = vmatprep.subr.bf16.mxu0 0
  %1171 = vmatpush1.bf16.msra.mxu0 0
  %1172 = vmatprep.subr.bf16.mxu0 0
  %1173 = vmatpush1.bf16.msra.mxu0 0
  %1174 = vmatprep.subr.bf16.mxu0 0
  %1175 = vmatpush1.bf16.msra.mxu0 0
  %1176 = vmatprep.mubr.bf16.mxu0 0
  %1177 = vmatmul.mubr.bf16.gmra.mrb[0].mxu0 %v1142
  %v1178 = vpop.f32.mrb[0].mxu0
  %v1179 = vadd.f32 0.0, %v1178
  %v1180 = vpop.f32.mrb[0].mxu0
  %v1181 = vadd.f32 0.0, %v1180
  %v1182 = vpop.f32.mrb[0].mxu0
  %v1183 = vpop.f32.mrb[0].mxu0
  %1184 = vdwg.mxu0
  %1185 = vmatprep.subr.bf16.mxu0 %v1138
  %1186 = vmatpush1.bf16.msra.mxu0 %v1137
  %1187 = vmatprep.subr.bf16.mxu0 0
  %1188 = vmatpush1.bf16.msra.mxu0 0
  %1189 = vmatprep.subr.bf16.mxu0 0
  %1190 = vmatpush1.bf16.msra.mxu0 0
  %1191 = vmatprep.subr.bf16.mxu0 0
  %1192 = vmatpush1.bf16.msra.mxu0 0
  %1193 = vmatprep.subr.bf16.mxu0 0
  %1194 = vmatpush1.bf16.msra.mxu0 0
  %1195 = vmatprep.subr.bf16.mxu0 0
  %1196 = vmatpush1.bf16.msra.mxu0 0
  %1197 = vmatprep.subr.bf16.mxu0 0
  %1198 = vmatpush1.bf16.msra.mxu0 0
  %1199 = vmatprep.subr.bf16.mxu0 0
  %1200 = vmatpush1.bf16.msra.mxu0 0
  %1201 = vmatprep.subr.bf16.mxu0 0
  %1202 = vmatpush1.bf16.msra.mxu0 0
  %1203 = vmatprep.subr.bf16.mxu0 0
  %1204 = vmatpush1.bf16.msra.mxu0 0
  %1205 = vmatprep.subr.bf16.mxu0 0
  %1206 = vmatpush1.bf16.msra.mxu0 0
  %1207 = vmatprep.subr.bf16.mxu0 0
  %1208 = vmatpush1.bf16.msra.mxu0 0
  %1209 = vmatprep.subr.bf16.mxu0 0
  %1210 = vmatpush1.bf16.msra.mxu0 0
  %1211 = vmatprep.subr.bf16.mxu0 0
  %1212 = vmatpush1.bf16.msra.mxu0 0
  %1213 = vmatprep.subr.bf16.mxu0 0
  %1214 = vmatpush1.bf16.msra.mxu0 0
  %1215 = vmatprep.subr.bf16.mxu0 0
  %1216 = vmatpush1.bf16.msra.mxu0 0
  %1217 = vmatprep.mubr.bf16.mxu0 0
  %1218 = vmatmul.mubr.bf16.gmra.mrb[0].mxu0 %v1142
  %v1219 = vpop.f32.mrb[0].mxu0
  %v1220 = vadd.f32 0.0, %v1219
  %v1221 = vpop.f32.mrb[0].mxu0
  %v1222 = vadd.f32 0.0, %v1221
  %v1223 = vpop.f32.mrb[0].mxu0
  %v1224 = vpop.f32.mrb[0].mxu0
  %1225 = vdwg.mxu0
  %v1226 = vadd.f32 %v1075, %v1179
  %v1227 = vadd.f32 %v1076, %v1181
  %v1228 = vadd.f32 %v1077, %v1220
  %v1229 = vadd.f32 %v1078, %v1222
  %1230 = vrot.lane.b32.xlu0 %v229, 112
  %v1231 = vpop.permute.xlu0 %1230
  %1232 = vrot.lane.b32.xlu0 %v233, 112
  %v1233 = vpop.permute.xlu0 %1232
  %1234 = vrot.lane.b32.xlu0 %v230, 112
  %v1235 = vpop.permute.xlu0 %1234
  %1236 = vrot.lane.b32.xlu0 %v234, 112
  %v1237 = vpop.permute.xlu0 %1236
  %1238 = vrot.lane.b32.xlu0 %v231, 112
  %v1239 = vpop.permute.xlu0 %1238
  %1240 = vrot.lane.b32.xlu0 %v235, 112
  %v1241 = vpop.permute.xlu0 %1240
  %1242 = vrot.lane.b32.xlu0 %v232, 112
  %v1243 = vpop.permute.xlu0 %1242
  %1244 = vrot.lane.b32.xlu0 %v236, 112
  %v1245 = vpop.permute.xlu0 %1244
  %vm1246 = vcmp.lt.s32.totalorder %v254, 112
  %v1247 = vsel %vm1246, %v1239, %v1243
  %v1248 = vsel %vm1246, %v1241, %v1245
  %v1249 = vsel %vm1246, %v1235, %v1239
  %v1250 = vsel %vm1246, %v1237, %v1241
  %v1251 = vsel %vm1246, %v1231, %v1235
  %v1252 = vsel %vm1246, %v1233, %v1237
  %v1253 = vsel %vm1246, %v1243, %v1231
  %v1254 = vsel %vm1246, %v1245, %v1233
  %s1255 = scalar_lea.vmem %s7, 28
  %v1256 = vld [vmem:[%s1255] sm:$0xf]
  %v1258 = vlaneseq
  %v1259 = vshrl.u32 %v1258, 7
  %v1260 = vsub.s32 0, %v1259
  %v1261 = vrot.slane %v1256, %v1260
  %v1262 = vlaneseq
  %v1263 = vshrl.u32 %v1262, 7
  %v1264 = vsub.s32 1, %v1263
  %v1265 = vrot.slane %v1256, %v1264
  %v1266 = vlaneseq
  %v1267 = vshrl.u32 %v1266, 7
  %v1268 = vsub.s32 2, %v1267
  %v1269 = vrot.slane %v1256, %v1268
  %v1270 = vlaneseq
  %v1271 = vshrl.u32 %v1270, 7
  %v1272 = vsub.s32 3, %v1271
  %v1273 = vrot.slane %v1256, %v1272
  %v1278 = vmul.f32 %v1251, %v1261
  %v1279 = vmul.f32 %v1249, %v1265
  %v1280 = vmul.f32 %v1247, %v1269
  %v1281 = vmul.f32 %v1253, %v1273
  %v1282 = vmul.f32 %v1252, %v1261
  %v1283 = vmul.f32 %v1250, %v1265
  %v1284 = vmul.f32 %v1248, %v1269
  %v1285 = vmul.f32 %v1254, %v1273
  %v1286 = vpack.c.bf16 %v1282, %v1278
  %v1287 = vpack.c.bf16 %v1283, %v1279
  %v1288 = vpack.c.bf16 %v1284, %v1280
  %v1289 = vpack.c.bf16 %v1285, %v1281
  %s1290 = scalar_lea.vmem %s6, 28
  %v1291 = vld [vmem:[%s1290] sm:$0xf]
  %v1293 = vsel %vm99, %v1291, 0
  %1295 = vmatprep.subr.bf16.mxu0 %v1287
  %1296 = vmatpush1.bf16.msra.mxu0 %v1286
  %1297 = vmatprep.subr.bf16.mxu0 0
  %1298 = vmatpush1.bf16.msra.mxu0 0
  %1299 = vmatprep.subr.bf16.mxu0 0
  %1300 = vmatpush1.bf16.msra.mxu0 0
  %1301 = vmatprep.subr.bf16.mxu0 0
  %1302 = vmatpush1.bf16.msra.mxu0 0
  %1303 = vmatprep.subr.bf16.mxu0 0
  %1304 = vmatpush1.bf16.msra.mxu0 0
  %1305 = vmatprep.subr.bf16.mxu0 0
  %1306 = vmatpush1.bf16.msra.mxu0 0
  %1307 = vmatprep.subr.bf16.mxu0 0
  %1308 = vmatpush1.bf16.msra.mxu0 0
  %1309 = vmatprep.subr.bf16.mxu0 0
  %1310 = vmatpush1.bf16.msra.mxu0 0
  %1311 = vmatprep.subr.bf16.mxu0 0
  %1312 = vmatpush1.bf16.msra.mxu0 0
  %1313 = vmatprep.subr.bf16.mxu0 0
  %1314 = vmatpush1.bf16.msra.mxu0 0
  %1315 = vmatprep.subr.bf16.mxu0 0
  %1316 = vmatpush1.bf16.msra.mxu0 0
  %1317 = vmatprep.subr.bf16.mxu0 0
  %1318 = vmatpush1.bf16.msra.mxu0 0
  %1319 = vmatprep.subr.bf16.mxu0 0
  %1320 = vmatpush1.bf16.msra.mxu0 0
  %1321 = vmatprep.subr.bf16.mxu0 0
  %1322 = vmatpush1.bf16.msra.mxu0 0
  %1323 = vmatprep.subr.bf16.mxu0 0
  %1324 = vmatpush1.bf16.msra.mxu0 0
  %1325 = vmatprep.subr.bf16.mxu0 0
  %1326 = vmatpush1.bf16.msra.mxu0 0
  %1327 = vmatprep.mubr.bf16.mxu0 0
  %1328 = vmatmul.mubr.bf16.gmra.mrb[0].mxu0 %v1293
  %v1329 = vpop.f32.mrb[0].mxu0
  %v1330 = vadd.f32 0.0, %v1329
  %v1331 = vpop.f32.mrb[0].mxu0
  %v1332 = vadd.f32 0.0, %v1331
  %v1333 = vpop.f32.mrb[0].mxu0
  %v1334 = vpop.f32.mrb[0].mxu0
  %1335 = vdwg.mxu0
  %1336 = vmatprep.subr.bf16.mxu0 %v1289
  %1337 = vmatpush1.bf16.msra.mxu0 %v1288
  %1338 = vmatprep.subr.bf16.mxu0 0
  %1339 = vmatpush1.bf16.msra.mxu0 0
  %1340 = vmatprep.subr.bf16.mxu0 0
  %1341 = vmatpush1.bf16.msra.mxu0 0
  %1342 = vmatprep.subr.bf16.mxu0 0
  %1343 = vmatpush1.bf16.msra.mxu0 0
  %1344 = vmatprep.subr.bf16.mxu0 0
  %1345 = vmatpush1.bf16.msra.mxu0 0
  %1346 = vmatprep.subr.bf16.mxu0 0
  %1347 = vmatpush1.bf16.msra.mxu0 0
  %1348 = vmatprep.subr.bf16.mxu0 0
  %1349 = vmatpush1.bf16.msra.mxu0 0
  %1350 = vmatprep.subr.bf16.mxu0 0
  %1351 = vmatpush1.bf16.msra.mxu0 0
  %1352 = vmatprep.subr.bf16.mxu0 0
  %1353 = vmatpush1.bf16.msra.mxu0 0
  %1354 = vmatprep.subr.bf16.mxu0 0
  %1355 = vmatpush1.bf16.msra.mxu0 0
  %1356 = vmatprep.subr.bf16.mxu0 0
  %1357 = vmatpush1.bf16.msra.mxu0 0
  %1358 = vmatprep.subr.bf16.mxu0 0
  %1359 = vmatpush1.bf16.msra.mxu0 0
  %1360 = vmatprep.subr.bf16.mxu0 0
  %1361 = vmatpush1.bf16.msra.mxu0 0
  %1362 = vmatprep.subr.bf16.mxu0 0
  %1363 = vmatpush1.bf16.msra.mxu0 0
  %1364 = vmatprep.subr.bf16.mxu0 0
  %1365 = vmatpush1.bf16.msra.mxu0 0
  %1366 = vmatprep.subr.bf16.mxu0 0
  %1367 = vmatpush1.bf16.msra.mxu0 0
  %1368 = vmatprep.mubr.bf16.mxu0 0
  %1369 = vmatmul.mubr.bf16.gmra.mrb[0].mxu0 %v1293
  %v1370 = vpop.f32.mrb[0].mxu0
  %v1371 = vadd.f32 0.0, %v1370
  %v1372 = vpop.f32.mrb[0].mxu0
  %v1373 = vadd.f32 0.0, %v1372
  %v1374 = vpop.f32.mrb[0].mxu0
  %v1375 = vpop.f32.mrb[0].mxu0
  %1376 = vdwg.mxu0
  %v1377 = vadd.f32 %v1226, %v1330
  %v1378 = vadd.f32 %v1227, %v1332
  %v1379 = vadd.f32 %v1228, %v1371
  %v1380 = vadd.f32 %v1229, %v1373
  %1381 = vrot.lane.b32.xlu0 %v229, 111
  %v1382 = vpop.permute.xlu0 %1381
  %1383 = vrot.lane.b32.xlu0 %v233, 111
  %v1384 = vpop.permute.xlu0 %1383
  %1385 = vrot.lane.b32.xlu0 %v230, 111
  %v1386 = vpop.permute.xlu0 %1385
  %1387 = vrot.lane.b32.xlu0 %v234, 111
  %v1388 = vpop.permute.xlu0 %1387
  %1389 = vrot.lane.b32.xlu0 %v231, 111
  %v1390 = vpop.permute.xlu0 %1389
  %1391 = vrot.lane.b32.xlu0 %v235, 111
  %v1392 = vpop.permute.xlu0 %1391
  %1393 = vrot.lane.b32.xlu0 %v232, 111
  %v1394 = vpop.permute.xlu0 %1393
  %1395 = vrot.lane.b32.xlu0 %v236, 111
  %v1396 = vpop.permute.xlu0 %1395
  %vm1397 = vcmp.lt.s32.totalorder %v254, 111
  %v1398 = vsel %vm1397, %v1390, %v1394
  %v1399 = vsel %vm1397, %v1392, %v1396
  %v1400 = vsel %vm1397, %v1386, %v1390
  %v1401 = vsel %vm1397, %v1388, %v1392
  %v1402 = vsel %vm1397, %v1382, %v1386
  %v1403 = vsel %vm1397, %v1384, %v1388
  %v1404 = vsel %vm1397, %v1394, %v1382
  %v1405 = vsel %vm1397, %v1396, %v1384
  %s1406 = scalar_lea.vmem %s7, 32
  %v1407 = vld [vmem:[%s1406] sm:$0xf]
  %v1409 = vlaneseq
  %v1410 = vshrl.u32 %v1409, 7
  %v1411 = vsub.s32 0, %v1410
  %v1412 = vrot.slane %v1407, %v1411
  %v1413 = vlaneseq
  %v1414 = vshrl.u32 %v1413, 7
  %v1415 = vsub.s32 1, %v1414
  %v1416 = vrot.slane %v1407, %v1415
  %v1417 = vlaneseq
  %v1418 = vshrl.u32 %v1417, 7
  %v1419 = vsub.s32 2, %v1418
  %v1420 = vrot.slane %v1407, %v1419
  %v1421 = vlaneseq
  %v1422 = vshrl.u32 %v1421, 7
  %v1423 = vsub.s32 3, %v1422
  %v1424 = vrot.slane %v1407, %v1423
  %v1429 = vmul.f32 %v1402, %v1412
  %v1430 = vmul.f32 %v1400, %v1416
  %v1431 = vmul.f32 %v1398, %v1420
  %v1432 = vmul.f32 %v1404, %v1424
  %v1433 = vmul.f32 %v1403, %v1412
  %v1434 = vmul.f32 %v1401, %v1416
  %v1435 = vmul.f32 %v1399, %v1420
  %v1436 = vmul.f32 %v1405, %v1424
  %v1437 = vpack.c.bf16 %v1433, %v1429
  %v1438 = vpack.c.bf16 %v1434, %v1430
  %v1439 = vpack.c.bf16 %v1435, %v1431
  %v1440 = vpack.c.bf16 %v1436, %v1432
  %s1441 = scalar_lea.vmem %s6, 32
  %v1442 = vld [vmem:[%s1441] sm:$0xf]
  %v1444 = vsel %vm99, %v1442, 0
  %1446 = vmatprep.subr.bf16.mxu0 %v1438
  %1447 = vmatpush1.bf16.msra.mxu0 %v1437
  %1448 = vmatprep.subr.bf16.mxu0 0
  %1449 = vmatpush1.bf16.msra.mxu0 0
  %1450 = vmatprep.subr.bf16.mxu0 0
  %1451 = vmatpush1.bf16.msra.mxu0 0
  %1452 = vmatprep.subr.bf16.mxu0 0
  %1453 = vmatpush1.bf16.msra.mxu0 0
  %1454 = vmatprep.subr.bf16.mxu0 0
  %1455 = vmatpush1.bf16.msra.mxu0 0
  %1456 = vmatprep.subr.bf16.mxu0 0
  %1457 = vmatpush1.bf16.msra.mxu0 0
  %1458 = vmatprep.subr.bf16.mxu0 0
  %1459 = vmatpush1.bf16.msra.mxu0 0
  %1460 = vmatprep.subr.bf16.mxu0 0
  %1461 = vmatpush1.bf16.msra.mxu0 0
  %1462 = vmatprep.subr.bf16.mxu0 0
  %1463 = vmatpush1.bf16.msra.mxu0 0
  %1464 = vmatprep.subr.bf16.mxu0 0
  %1465 = vmatpush1.bf16.msra.mxu0 0
  %1466 = vmatprep.subr.bf16.mxu0 0
  %1467 = vmatpush1.bf16.msra.mxu0 0
  %1468 = vmatprep.subr.bf16.mxu0 0
  %1469 = vmatpush1.bf16.msra.mxu0 0
  %1470 = vmatprep.subr.bf16.mxu0 0
  %1471 = vmatpush1.bf16.msra.mxu0 0
  %1472 = vmatprep.subr.bf16.mxu0 0
  %1473 = vmatpush1.bf16.msra.mxu0 0
  %1474 = vmatprep.subr.bf16.mxu0 0
  %1475 = vmatpush1.bf16.msra.mxu0 0
  %1476 = vmatprep.subr.bf16.mxu0 0
  %1477 = vmatpush1.bf16.msra.mxu0 0
  %1478 = vmatprep.mubr.bf16.mxu0 0
  %1479 = vmatmul.mubr.bf16.gmra.mrb[0].mxu0 %v1444
  %v1480 = vpop.f32.mrb[0].mxu0
  %v1481 = vadd.f32 0.0, %v1480
  %v1482 = vpop.f32.mrb[0].mxu0
  %v1483 = vadd.f32 0.0, %v1482
  %v1484 = vpop.f32.mrb[0].mxu0
  %v1485 = vpop.f32.mrb[0].mxu0
  %1486 = vdwg.mxu0
  %1487 = vmatprep.subr.bf16.mxu0 %v1440
  %1488 = vmatpush1.bf16.msra.mxu0 %v1439
  %1489 = vmatprep.subr.bf16.mxu0 0
  %1490 = vmatpush1.bf16.msra.mxu0 0
  %1491 = vmatprep.subr.bf16.mxu0 0
  %1492 = vmatpush1.bf16.msra.mxu0 0
  %1493 = vmatprep.subr.bf16.mxu0 0
  %1494 = vmatpush1.bf16.msra.mxu0 0
  %1495 = vmatprep.subr.bf16.mxu0 0
  %1496 = vmatpush1.bf16.msra.mxu0 0
  %1497 = vmatprep.subr.bf16.mxu0 0
  %1498 = vmatpush1.bf16.msra.mxu0 0
  %1499 = vmatprep.subr.bf16.mxu0 0
  %1500 = vmatpush1.bf16.msra.mxu0 0
  %1501 = vmatprep.subr.bf16.mxu0 0
  %1502 = vmatpush1.bf16.msra.mxu0 0
  %1503 = vmatprep.subr.bf16.mxu0 0
  %1504 = vmatpush1.bf16.msra.mxu0 0
  %1505 = vmatprep.subr.bf16.mxu0 0
  %1506 = vmatpush1.bf16.msra.mxu0 0
  %1507 = vmatprep.subr.bf16.mxu0 0
  %1508 = vmatpush1.bf16.msra.mxu0 0
  %1509 = vmatprep.subr.bf16.mxu0 0
  %1510 = vmatpush1.bf16.msra.mxu0 0
  %1511 = vmatprep.subr.bf16.mxu0 0
  %1512 = vmatpush1.bf16.msra.mxu0 0
  %1513 = vmatprep.subr.bf16.mxu0 0
  %1514 = vmatpush1.bf16.msra.mxu0 0
  %1515 = vmatprep.subr.bf16.mxu0 0
  %1516 = vmatpush1.bf16.msra.mxu0 0
  %1517 = vmatprep.subr.bf16.mxu0 0
  %1518 = vmatpush1.bf16.msra.mxu0 0
  %1519 = vmatprep.mubr.bf16.mxu0 0
  %1520 = vmatmul.mubr.bf16.gmra.mrb[0].mxu0 %v1444
  %v1521 = vpop.f32.mrb[0].mxu0
  %v1522 = vadd.f32 0.0, %v1521
  %v1523 = vpop.f32.mrb[0].mxu0
  %v1524 = vadd.f32 0.0, %v1523
  %v1525 = vpop.f32.mrb[0].mxu0
  %v1526 = vpop.f32.mrb[0].mxu0
  %1527 = vdwg.mxu0
  %v1528 = vadd.f32 %v1377, %v1481
  %v1529 = vadd.f32 %v1378, %v1483
  %v1530 = vadd.f32 %v1379, %v1522
  %v1531 = vadd.f32 %v1380, %v1524
  %1532 = vst [vmem:[%s30] sm:$0xff] %v1528
  %1533 = vst [vmem:[%s30 + $0x8] sm:$0xff] %v1529
  %1534 = vst [vmem:[%s30 + $0x10] sm:$0xff] %v1530
  %1535 = vst [vmem:[%s30 + $0x18] sm:$0xff] %v1531
  %s1536 = scalar_lea.vmem %s8, 64
  // Predicated region
  $region34: #{dense_block_apply.3} parent=0 // pred_check
    _
  $region35: #{dense_block_apply.3} parent=0 // pred_check_branch
    %1538 = sbr.rel (0) target = $region37
  $region36: #{dense_block_apply.3} parent=0 // pred_region
    _
  $region37: #{dense_block_apply.3} parent=0 // pred_fallthru
    _
  // Predicated region
  $region38: #{dense_block_apply.3} parent=0 // pred_check
    _
  $region39: #{dense_block_apply.3} parent=0 // pred_check_branch
    %1540 = sbr.rel (0) target = $region41
  $region40: #{dense_block_apply.3} parent=0 // pred_region
    %s1541 = scalar_lea.vmem %s8, 64
  $region41: #{dense_block_apply.3} parent=0 // pred_fallthru
    _

// kernel: dense_block_apply.2
$region0: #{dense_block_apply.2}
  #allocation0 [shape = 'u32[]', space=smem, size = 0x4, offset = 0x4, fixed_abs, tag = 'smem constant byte address 0x4 - core index']
  #allocation1 [shape = 'u32[144,128]{1,0:T(1,128)}', space=vmem, size = 0x12000, scoped, tag = 'internal scratch']
  %s0 = inlined_call_operand.vmem [shape: f32[24,512], index: 0, kind: input, shape index: {}, may-alias: {0,8}]
  %s1 = inlined_call_operand.vmem [shape: f32[8,1], index: 1, kind: input, shape index: {}]
  %s2 = inlined_call_operand.vmem [shape: f32[8,1], index: 2, kind: input, shape index: {}]
  %s3 = inlined_call_operand.vmem [shape: bf16[16,8], index: 3, kind: input, shape index: {}]
  %s4 = inlined_call_operand.vmem [shape: f32[16,1], index: 4, kind: input, shape index: {}]
  %s5 = inlined_call_operand.vmem [shape: f32[16,1], index: 5, kind: input, shape index: {}]
  %s6 = inlined_call_operand.vmem [shape: bf16[9,8,16], index: 6, kind: input, shape index: {}]
  %s7 = inlined_call_operand.vmem [shape: f32[9,1,512], index: 7, kind: input, shape index: {}]
  %s8 = inlined_call_operand.vmem [shape: f32[24,512], index: 8, kind: output, shape index: {}, may-alias: {0,8}]
  %s9 = sld [smem:[#allocation0]]
  $region42: #{dense_block_apply.2} parent=0
    _
  %s11 = ssub.s32 1, %s9
  %s12 = scalar_select 0, %s11, %s9
  // Predicated region
  $region2: #{dense_block_apply.2} parent=0 // pred_check
    _
  $region3: #{dense_block_apply.2} parent=0 // pred_check_branch
    %14 = sbr.rel (0) target = $region5
  $region4: #{dense_block_apply.2} parent=0 // pred_region
    _
  $region5: #{dense_block_apply.2} parent=0 // pred_fallthru
    _
  // Predicated region
  $region6: #{dense_block_apply.2} parent=0 // pred_check
    _
  $region7: #{dense_block_apply.2} parent=0 // pred_check_branch
    %16 = sbr.rel (0) target = $region9
  $region8: #{dense_block_apply.2} parent=0 // pred_region
    _
  $region9: #{dense_block_apply.2} parent=0 // pred_fallthru
    _
  // Predicated region
  $region10: #{dense_block_apply.2} parent=0 // pred_check
    _
  $region11: #{dense_block_apply.2} parent=0 // pred_check_branch
    %18 = sbr.rel (0) target = $region13
  $region12: #{dense_block_apply.2} parent=0 // pred_region
    _
  $region13: #{dense_block_apply.2} parent=0 // pred_fallthru
    _
  // Predicated region
  $region14: #{dense_block_apply.2} parent=0 // pred_check
    _
  $region15: #{dense_block_apply.2} parent=0 // pred_check_branch
    %20 = sbr.rel (0) target = $region17
  $region16: #{dense_block_apply.2} parent=0 // pred_region
    _
  $region17: #{dense_block_apply.2} parent=0 // pred_fallthru
    _
  // Predicated region
  $region18: #{dense_block_apply.2} parent=0 // pred_check
    _
  $region19: #{dense_block_apply.2} parent=0 // pred_check_branch
    %22 = sbr.rel (0) target = $region21
  $region20: #{dense_block_apply.2} parent=0 // pred_region
    _
  $region21: #{dense_block_apply.2} parent=0 // pred_fallthru
    _
  // Predicated region
  $region22: #{dense_block_apply.2} parent=0 // pred_check
    _
  $region23: #{dense_block_apply.2} parent=0 // pred_check_branch
    %24 = sbr.rel (0) target = $region25
  $region24: #{dense_block_apply.2} parent=0 // pred_region
    _
  $region25: #{dense_block_apply.2} parent=0 // pred_fallthru
    _
  // Predicated region
  $region26: #{dense_block_apply.2} parent=0 // pred_check
    _
  $region27: #{dense_block_apply.2} parent=0 // pred_check_branch
    %26 = sbr.rel (0) target = $region29
  $region28: #{dense_block_apply.2} parent=0 // pred_region
    _
  $region29: #{dense_block_apply.2} parent=0 // pred_fallthru
    _
  // Predicated region
  $region30: #{dense_block_apply.2} parent=0 // pred_check
    _
  $region31: #{dense_block_apply.2} parent=0 // pred_check_branch
    %28 = sbr.rel (0) target = $region33
  $region32: #{dense_block_apply.2} parent=0 // pred_region
    _
  $region33: #{dense_block_apply.2} parent=0 // pred_fallthru
    _
  %s29 = scalar_lea.vmem %s8, 32
  %s30 = scalar_lea.vmem %s8, 32
  %v32 = vld [vmem:[%s0] sm:$0xff]
  %v33 = vld [vmem:[%s0 + $0x8] sm:$0xff]
  %v34 = vld [vmem:[%s0 + $0x10] sm:$0xff]
  %v35 = vld [vmem:[%s0 + $0x18] sm:$0xff]
  %v36 = vld [vmem:[%s1] sm:$0xff]
  %38 = vset.pattern.permute.xlu0 0
  %39 = vperm.xlu0 %38, %v36
  %v40 = vpop.permute.xlu0 %39
  %v42 = vmul.f32 %v32, %v40
  %v43 = vmul.f32 %v33, %v40
  %v44 = vmul.f32 %v34, %v40
  %v45 = vmul.f32 %v35, %v40
  %v46 = vld [vmem:[%s2] sm:$0xff]
  %48 = vset.pattern.permute.xlu0 0
  %49 = vperm.xlu0 %48, %v46
  %v50 = vpop.permute.xlu0 %49
  %v52 = vadd.f32 %v42, %v50
  %v53 = vadd.f32 %v43, %v50
  %v54 = vadd.f32 %v44, %v50
  %v55 = vadd.f32 %v45, %v50
  %v56 = vmax.f32 %v52, 0.0
  %v57 = vmax.f32 %v53, 0.0
  %v58 = vmax.f32 %v54, 0.0
  %v59 = vmax.f32 %v55, 0.0
  %v60 = vld [vmem:[%s3] sm:$0xf]
  %v61 = vld [vmem:[%s3 + $0x4] sm:$0xf]
  %v62 = vpack.c.bf16 %v56, %v56
  %v63 = vpack.c.bf16 %v57, %v57
  %v64 = vpack.c.bf16 %v58, %v58
  %v65 = vpack.c.bf16 %v59, %v59
  %v68 = vunpack.c.l.b16 %v60
  %v69 = vunpack.c.l.b16 %v61
  %v70 = vpack.c.b16 %v69, %v68
  %vm71 = vcmask 64512
  %v73 = vsel %vm71, %v70, 0
  %vm75 = vcmask 1043456
  %v77 = vsel %vm75, %v62, 0
  %v80 = vsel %vm75, %v63, 0
  %v83 = vsel %vm75, %v64, 0
  %v86 = vsel %vm75, %v65, 0
  %88 = vmatprep.subr.bf16.mxu0 %v80
  %89 = vmatpush1.bf16.msra.mxu0 %v77
  %90 = vmatprep.subr.bf16.mxu0 0
  %91 = vmatpush1.bf16.msra.mxu0 0
  %92 = vmatprep.subr.bf16.mxu0 0
  %93 = vmatpush1.bf16.msra.mxu0 0
  %94 = vmatprep.subr.bf16.mxu0 0
  %95 = vmatpush1.bf16.msra.mxu0 0
  %96 = vmatprep.subr.bf16.mxu0 0
  %97 = vmatpush1.bf16.msra.mxu0 0
  %98 = vmatprep.subr.bf16.mxu0 0
  %99 = vmatpush1.bf16.msra.mxu0 0
  %100 = vmatprep.subr.bf16.mxu0 0
  %101 = vmatpush1.bf16.msra.mxu0 0
  %102 = vmatprep.subr.bf16.mxu0 0
  %103 = vmatpush1.bf16.msra.mxu0 0
  %104 = vmatprep.subr.bf16.mxu0 0
  %105 = vmatpush1.bf16.msra.mxu0 0
  %106 = vmatprep.subr.bf16.mxu0 0
  %107 = vmatpush1.bf16.msra.mxu0 0
  %108 = vmatprep.subr.bf16.mxu0 0
  %109 = vmatpush1.bf16.msra.mxu0 0
  %110 = vmatprep.subr.bf16.mxu0 0
  %111 = vmatpush1.bf16.msra.mxu0 0
  %112 = vmatprep.subr.bf16.mxu0 0
  %113 = vmatpush1.bf16.msra.mxu0 0
  %114 = vmatprep.subr.bf16.mxu0 0
  %115 = vmatpush1.bf16.msra.mxu0 0
  %116 = vmatprep.subr.bf16.mxu0 0
  %117 = vmatpush1.bf16.msra.mxu0 0
  %118 = vmatprep.subr.bf16.mxu0 0
  %119 = vmatpush1.bf16.msra.mxu0 0
  %120 = vmatprep.mubr.bf16.mxu0 0
  %121 = vmatmul.mubr.bf16.gmra.mrb[0].mxu0 %v73
  %v122 = vpop.f32.mrb[0].mxu0
  %v123 = vadd.f32 0.0, %v122
  %v124 = vpop.f32.mrb[0].mxu0
  %v125 = vadd.f32 0.0, %v124
  %v126 = vpop.f32.mrb[0].mxu0
  %v127 = vadd.f32 0.0, %v126
  %v128 = vpop.f32.mrb[0].mxu0
  %v129 = vadd.f32 0.0, %v128
  %130 = vdwg.mxu0
  %131 = vmatprep.subr.bf16.mxu0 %v86
  %132 = vmatpush1.bf16.msra.mxu0 %v83
  %133 = vmatprep.subr.bf16.mxu0 0
  %134 = vmatpush1.bf16.msra.mxu0 0
  %135 = vmatprep.subr.bf16.mxu0 0
  %136 = vmatpush1.bf16.msra.mxu0 0
  %137 = vmatprep.subr.bf16.mxu0 0
  %138 = vmatpush1.bf16.msra.mxu0 0
  %139 = vmatprep.subr.bf16.mxu0 0
  %140 = vmatpush1.bf16.msra.mxu0 0
  %141 = vmatprep.subr.bf16.mxu0 0
  %142 = vmatpush1.bf16.msra.mxu0 0
  %143 = vmatprep.subr.bf16.mxu0 0
  %144 = vmatpush1.bf16.msra.mxu0 0
  %145 = vmatprep.subr.bf16.mxu0 0
  %146 = vmatpush1.bf16.msra.mxu0 0
  %147 = vmatprep.subr.bf16.mxu0 0
  %148 = vmatpush1.bf16.msra.mxu0 0
  %149 = vmatprep.subr.bf16.mxu0 0
  %150 = vmatpush1.bf16.msra.mxu0 0
  %151 = vmatprep.subr.bf16.mxu0 0
  %152 = vmatpush1.bf16.msra.mxu0 0
  %153 = vmatprep.subr.bf16.mxu0 0
  %154 = vmatpush1.bf16.msra.mxu0 0
  %155 = vmatprep.subr.bf16.mxu0 0
  %156 = vmatpush1.bf16.msra.mxu0 0
  %157 = vmatprep.subr.bf16.mxu0 0
  %158 = vmatpush1.bf16.msra.mxu0 0
  %159 = vmatprep.subr.bf16.mxu0 0
  %160 = vmatpush1.bf16.msra.mxu0 0
  %161 = vmatprep.subr.bf16.mxu0 0
  %162 = vmatpush1.bf16.msra.mxu0 0
  %163 = vmatprep.mubr.bf16.mxu0 0
  %164 = vmatmul.mubr.bf16.gmra.mrb[0].mxu0 %v73
  %v165 = vpop.f32.mrb[0].mxu0
  %v166 = vadd.f32 0.0, %v165
  %v167 = vpop.f32.mrb[0].mxu0
  %v168 = vadd.f32 0.0, %v167
  %v169 = vpop.f32.mrb[0].mxu0
  %v170 = vadd.f32 0.0, %v169
  %v171 = vpop.f32.mrb[0].mxu0
  %v172 = vadd.f32 0.0, %v171
  %173 = vdwg.mxu0
  %v174 = vld [vmem:[%s4] sm:$0xff]
  %v175 = vld [vmem:[%s4 + $0x8] sm:$0xff]
  %177 = vset.pattern.permute.xlu0 0
  %178 = vperm.xlu0 %177, %v174
  %v179 = vpop.permute.xlu0 %178
  %182 = vset.pattern.permute.xlu0 0
  %183 = vperm.xlu0 %182, %v175
  %v184 = vpop.permute.xlu0 %183
  %v186 = vmul.f32 %v123, %v179
  %v187 = vmul.f32 %v125, %v179
  %v188 = vmul.f32 %v166, %v179
  %v189 = vmul.f32 %v168, %v179
  %v190 = vmul.f32 %v127, %v184
  %v191 = vmul.f32 %v129, %v184
  %v192 = vmul.f32 %v170, %v184
  %v193 = vmul.f32 %v172, %v184
  %v194 = vld [vmem:[%s5] sm:$0xff]
  %v195 = vld [vmem:[%s5 + $0x8] sm:$0xff]
  %197 = vset.pattern.permute.xlu0 0
  %198 = vperm.xlu0 %197, %v194
  %v199 = vpop.permute.xlu0 %198
  %202 = vset.pattern.permute.xlu0 0
  %203 = vperm.xlu0 %202, %v195
  %v204 = vpop.permute.xlu0 %203
  %v206 = vadd.f32 %v186, %v199
  %v207 = vadd.f32 %v187, %v199
  %v208 = vadd.f32 %v188, %v199
  %v209 = vadd.f32 %v189, %v199
  %v210 = vadd.f32 %v190, %v204
  %v211 = vadd.f32 %v191, %v204
  %v212 = vadd.f32 %v192, %v204
  %v213 = vadd.f32 %v193, %v204
  %v214 = vmax.f32 %v206, 0.0
  %v215 = vmax.f32 %v207, 0.0
  %v216 = vmax.f32 %v208, 0.0
  %v217 = vmax.f32 %v209, 0.0
  %v218 = vmax.f32 %v210, 0.0
  %v219 = vmax.f32 %v211, 0.0
  %v220 = vmax.f32 %v212, 0.0
  %v221 = vmax.f32 %v213, 0.0
  %222 = vrot.lane.b32.xlu0 %v214, 17
  %v223 = vpop.permute.xlu0 %222
  %224 = vrot.lane.b32.xlu0 %v218, 17
  %v225 = vpop.permute.xlu0 %224
  %226 = vrot.lane.b32.xlu0 %v215, 17
  %v227 = vpop.permute.xlu0 %226
  %228 = vrot.lane.b32.xlu0 %v219, 17
  %v229 = vpop.permute.xlu0 %228
  %230 = vrot.lane.b32.xlu0 %v216, 17
  %v231 = vpop.permute.xlu0 %230
  %232 = vrot.lane.b32.xlu0 %v220, 17
  %v233 = vpop.permute.xlu0 %232
  %234 = vrot.lane.b32.xlu0 %v217, 17
  %v235 = vpop.permute.xlu0 %234
  %236 = vrot.lane.b32.xlu0 %v221, 17
  %v237 = vpop.permute.xlu0 %236
  %v238 = vlaneseq
  %v239 = vand.u32 %v238, 127
  %vm240 = vcmp.lt.s32.totalorder %v239, 17
  %v241 = vsel %vm240, %v231, %v235
  %v242 = vsel %vm240, %v233, %v237
  %v243 = vsel %vm240, %v227, %v231
  %v244 = vsel %vm240, %v229, %v233
  %v245 = vsel %vm240, %v223, %v227
  %v246 = vsel %vm240, %v225, %v229
  %v247 = vsel %vm240, %v235, %v223
  %v248 = vsel %vm240, %v237, %v225
  %v249 = vld [vmem:[%s7] sm:$0xf]
  %v251 = vlaneseq
  %v252 = vshrl.u32 %v251, 7
  %v253 = vsub.s32 0, %v252
  %v254 = vrot.slane %v249, %v253
  %v255 = vlaneseq
  %v256 = vshrl.u32 %v255, 7
  %v257 = vsub.s32 1, %v256
  %v258 = vrot.slane %v249, %v257
  %v259 = vlaneseq
  %v260 = vshrl.u32 %v259, 7
  %v261 = vsub.s32 2, %v260
  %v262 = vrot.slane %v249, %v261
  %v263 = vlaneseq
  %v264 = vshrl.u32 %v263, 7
  %v265 = vsub.s32 3, %v264
  %v266 = vrot.slane %v249, %v265
  %v271 = vmul.f32 %v247, %v254
  %v272 = vmul.f32 %v245, %v258
  %v273 = vmul.f32 %v243, %v262
  %v274 = vmul.f32 %v241, %v266
  %v275 = vmul.f32 %v248, %v254
  %v276 = vmul.f32 %v246, %v258
  %v277 = vmul.f32 %v244, %v262
  %v278 = vmul.f32 %v242, %v266
  %v279 = vpack.c.bf16 %v275, %v271
  %v280 = vpack.c.bf16 %v276, %v272
  %v281 = vpack.c.bf16 %v277, %v273
  %v282 = vpack.c.bf16 %v278, %v274
  %v283 = vld [vmem:[%s6] sm:$0xf]
  %284 = vrot.lane.b32.xlu0 %v214, 16
  %v285 = vpop.permute.xlu0 %284
  %286 = vrot.lane.b32.xlu0 %v218, 16
  %v287 = vpop.permute.xlu0 %286
  %288 = vrot.lane.b32.xlu0 %v215, 16
  %v289 = vpop.permute.xlu0 %288
  %290 = vrot.lane.b32.xlu0 %v219, 16
  %v291 = vpop.permute.xlu0 %290
  %292 = vrot.lane.b32.xlu0 %v216, 16
  %v293 = vpop.permute.xlu0 %292
  %294 = vrot.lane.b32.xlu0 %v220, 16
  %v295 = vpop.permute.xlu0 %294
  %296 = vrot.lane.b32.xlu0 %v217, 16
  %v297 = vpop.permute.xlu0 %296
  %298 = vrot.lane.b32.xlu0 %v221, 16
  %v299 = vpop.permute.xlu0 %298
  %vm300 = vcmp.lt.s32.totalorder %v239, 16
  %v301 = vsel %vm300, %v293, %v297
  %v302 = vsel %vm300, %v295, %v299
  %v303 = vsel %vm300, %v289, %v293
  %v304 = vsel %vm300, %v291, %v295
  %v305 = vsel %vm300, %v285, %v289
  %v306 = vsel %vm300, %v287, %v291
  %v307 = vsel %vm300, %v297, %v285
  %v308 = vsel %vm300, %v299, %v287
  %s309 = scalar_lea.vmem %s7, 4
  %v310 = vld [vmem:[%s309] sm:$0xf]
  %v312 = vlaneseq
  %v313 = vshrl.u32 %v312, 7
  %v314 = vsub.s32 0, %v313
  %v315 = vrot.slane %v310, %v314
  %v316 = vlaneseq
  %v317 = vshrl.u32 %v316, 7
  %v318 = vsub.s32 1, %v317
  %v319 = vrot.slane %v310, %v318
  %v320 = vlaneseq
  %v321 = vshrl.u32 %v320, 7
  %v322 = vsub.s32 2, %v321
  %v323 = vrot.slane %v310, %v322
  %v324 = vlaneseq
  %v325 = vshrl.u32 %v324, 7
  %v326 = vsub.s32 3, %v325
  %v327 = vrot.slane %v310, %v326
  %v332 = vmul.f32 %v307, %v315
  %v333 = vmul.f32 %v305, %v319
  %v334 = vmul.f32 %v303, %v323
  %v335 = vmul.f32 %v301, %v327
  %v336 = vmul.f32 %v308, %v315
  %v337 = vmul.f32 %v306, %v319
  %v338 = vmul.f32 %v304, %v323
  %v339 = vmul.f32 %v302, %v327
  %v340 = vpack.c.bf16 %v336, %v332
  %v341 = vpack.c.bf16 %v337, %v333
  %v342 = vpack.c.bf16 %v338, %v334
  %v343 = vpack.c.bf16 %v339, %v335
  %s344 = scalar_lea.vmem %s6, 4
  %v345 = vld [vmem:[%s344] sm:$0xf]
  %vm346 = vcmask 130048
  %v348 = vsel %vm346, %v345, 0
  %350 = vmatprep.subr.bf16.mxu0 %v341
  %351 = vmatpush1.bf16.msra.mxu0 %v340
  %352 = vmatprep.subr.bf16.mxu0 0
  %353 = vmatpush1.bf16.msra.mxu0 0
  %354 = vmatprep.subr.bf16.mxu0 0
  %355 = vmatpush1.bf16.msra.mxu0 0
  %356 = vmatprep.subr.bf16.mxu0 0
  %357 = vmatpush1.bf16.msra.mxu0 0
  %358 = vmatprep.subr.bf16.mxu0 0
  %359 = vmatpush1.bf16.msra.mxu0 0
  %360 = vmatprep.subr.bf16.mxu0 0
  %361 = vmatpush1.bf16.msra.mxu0 0
  %362 = vmatprep.subr.bf16.mxu0 0
  %363 = vmatpush1.bf16.msra.mxu0 0
  %364 = vmatprep.subr.bf16.mxu0 0
  %365 = vmatpush1.bf16.msra.mxu0 0
  %366 = vmatprep.subr.bf16.mxu0 0
  %367 = vmatpush1.bf16.msra.mxu0 0
  %368 = vmatprep.subr.bf16.mxu0 0
  %369 = vmatpush1.bf16.msra.mxu0 0
  %370 = vmatprep.subr.bf16.mxu0 0
  %371 = vmatpush1.bf16.msra.mxu0 0
  %372 = vmatprep.subr.bf16.mxu0 0
  %373 = vmatpush1.bf16.msra.mxu0 0
  %374 = vmatprep.subr.bf16.mxu0 0
  %375 = vmatpush1.bf16.msra.mxu0 0
  %376 = vmatprep.subr.bf16.mxu0 0
  %377 = vmatpush1.bf16.msra.mxu0 0
  %378 = vmatprep.subr.bf16.mxu0 0
  %379 = vmatpush1.bf16.msra.mxu0 0
  %380 = vmatprep.subr.bf16.mxu0 0
  %381 = vmatpush1.bf16.msra.mxu0 0
  %382 = vmatprep.mubr.bf16.mxu0 0
  %383 = vmatmul.mubr.bf16.gmra.mrb[0].mxu0 %v348
  %v384 = vpop.f32.mrb[0].mxu0
  %v385 = vadd.f32 0.0, %v384
  %v386 = vpop.f32.mrb[0].mxu0
  %v387 = vadd.f32 0.0, %v386
  %v388 = vpop.f32.mrb[0].mxu0
  %v389 = vpop.f32.mrb[0].mxu0
  %390 = vdwg.mxu0
  %391 = vmatprep.subr.bf16.mxu0 %v343
  %392 = vmatpush1.bf16.msra.mxu0 %v342
  %393 = vmatprep.subr.bf16.mxu0 0
  %394 = vmatpush1.bf16.msra.mxu0 0
  %395 = vmatprep.subr.bf16.mxu0 0
  %396 = vmatpush1.bf16.msra.mxu0 0
  %397 = vmatprep.subr.bf16.mxu0 0
  %398 = vmatpush1.bf16.msra.mxu0 0
  %399 = vmatprep.subr.bf16.mxu0 0
  %400 = vmatpush1.bf16.msra.mxu0 0
  %401 = vmatprep.subr.bf16.mxu0 0
  %402 = vmatpush1.bf16.msra.mxu0 0
  %403 = vmatprep.subr.bf16.mxu0 0
  %404 = vmatpush1.bf16.msra.mxu0 0
  %405 = vmatprep.subr.bf16.mxu0 0
  %406 = vmatpush1.bf16.msra.mxu0 0
  %407 = vmatprep.subr.bf16.mxu0 0
  %408 = vmatpush1.bf16.msra.mxu0 0
  %409 = vmatprep.subr.bf16.mxu0 0
  %410 = vmatpush1.bf16.msra.mxu0 0
  %411 = vmatprep.subr.bf16.mxu0 0
  %412 = vmatpush1.bf16.msra.mxu0 0
  %413 = vmatprep.subr.bf16.mxu0 0
  %414 = vmatpush1.bf16.msra.mxu0 0
  %415 = vmatprep.subr.bf16.mxu0 0
  %416 = vmatpush1.bf16.msra.mxu0 0
  %417 = vmatprep.subr.bf16.mxu0 0
  %418 = vmatpush1.bf16.msra.mxu0 0
  %419 = vmatprep.subr.bf16.mxu0 0
  %420 = vmatpush1.bf16.msra.mxu0 0
  %421 = vmatprep.subr.bf16.mxu0 0
  %422 = vmatpush1.bf16.msra.mxu0 0
  %423 = vmatprep.mubr.bf16.mxu0 0
  %424 = vmatmul.mubr.bf16.gmra.mrb[0].mxu0 %v348
  %v425 = vpop.f32.mrb[0].mxu0
  %v426 = vadd.f32 0.0, %v425
  %v427 = vpop.f32.mrb[0].mxu0
  %v428 = vadd.f32 0.0, %v427
  %v429 = vpop.f32.mrb[0].mxu0
  %v430 = vpop.f32.mrb[0].mxu0
  %431 = vdwg.mxu0
  %v433 = vsel %vm346, %v283, 0
  %435 = vmatprep.subr.bf16.mxu0 %v280
  %436 = vmatpush1.bf16.msra.mxu0 %v279
  %437 = vmatprep.subr.bf16.mxu0 0
  %438 = vmatpush1.bf16.msra.mxu0 0
  %439 = vmatprep.subr.bf16.mxu0 0
  %440 = vmatpush1.bf16.msra.mxu0 0
  %441 = vmatprep.subr.bf16.mxu0 0
  %442 = vmatpush1.bf16.msra.mxu0 0
  %443 = vmatprep.subr.bf16.mxu0 0
  %444 = vmatpush1.bf16.msra.mxu0 0
  %445 = vmatprep.subr.bf16.mxu0 0
  %446 = vmatpush1.bf16.msra.mxu0 0
  %447 = vmatprep.subr.bf16.mxu0 0
  %448 = vmatpush1.bf16.msra.mxu0 0
  %449 = vmatprep.subr.bf16.mxu0 0
  %450 = vmatpush1.bf16.msra.mxu0 0
  %451 = vmatprep.subr.bf16.mxu0 0
  %452 = vmatpush1.bf16.msra.mxu0 0
  %453 = vmatprep.subr.bf16.mxu0 0
  %454 = vmatpush1.bf16.msra.mxu0 0
  %455 = vmatprep.subr.bf16.mxu0 0
  %456 = vmatpush1.bf16.msra.mxu0 0
  %457 = vmatprep.subr.bf16.mxu0 0
  %458 = vmatpush1.bf16.msra.mxu0 0
  %459 = vmatprep.subr.bf16.mxu0 0
  %460 = vmatpush1.bf16.msra.mxu0 0
  %461 = vmatprep.subr.bf16.mxu0 0
  %462 = vmatpush1.bf16.msra.mxu0 0
  %463 = vmatprep.subr.bf16.mxu0 0
  %464 = vmatpush1.bf16.msra.mxu0 0
  %465 = vmatprep.subr.bf16.mxu0 0
  %466 = vmatpush1.bf16.msra.mxu0 0
  %467 = vmatprep.mubr.bf16.mxu0 0
  %468 = vmatmul.mubr.bf16.gmra.mrb[0].mxu0 %v433
  %v469 = vpop.f32.mrb[0].mxu0
  %v470 = vadd.f32 %v385, %v469
  %v471 = vpop.f32.mrb[0].mxu0
  %v472 = vadd.f32 %v387, %v471
  %v473 = vpop.f32.mrb[0].mxu0
  %v474 = vpop.f32.mrb[0].mxu0
  %475 = vdwg.mxu0
  %476 = vmatprep.subr.bf16.mxu0 %v282
  %477 = vmatpush1.bf16.msra.mxu0 %v281
  %478 = vmatprep.subr.bf16.mxu0 0
  %479 = vmatpush1.bf16.msra.mxu0 0
  %480 = vmatprep.subr.bf16.mxu0 0
  %481 = vmatpush1.bf16.msra.mxu0 0
  %482 = vmatprep.subr.bf16.mxu0 0
  %483 = vmatpush1.bf16.msra.mxu0 0
  %484 = vmatprep.subr.bf16.mxu0 0
  %485 = vmatpush1.bf16.msra.mxu0 0
  %486 = vmatprep.subr.bf16.mxu0 0
  %487 = vmatpush1.bf16.msra.mxu0 0
  %488 = vmatprep.subr.bf16.mxu0 0
  %489 = vmatpush1.bf16.msra.mxu0 0
  %490 = vmatprep.subr.bf16.mxu0 0
  %491 = vmatpush1.bf16.msra.mxu0 0
  %492 = vmatprep.subr.bf16.mxu0 0
  %493 = vmatpush1.bf16.msra.mxu0 0
  %494 = vmatprep.subr.bf16.mxu0 0
  %495 = vmatpush1.bf16.msra.mxu0 0
  %496 = vmatprep.subr.bf16.mxu0 0
  %497 = vmatpush1.bf16.msra.mxu0 0
  %498 = vmatprep.subr.bf16.mxu0 0
  %499 = vmatpush1.bf16.msra.mxu0 0
  %500 = vmatprep.subr.bf16.mxu0 0
  %501 = vmatpush1.bf16.msra.mxu0 0
  %502 = vmatprep.subr.bf16.mxu0 0
  %503 = vmatpush1.bf16.msra.mxu0 0
  %504 = vmatprep.subr.bf16.mxu0 0
  %505 = vmatpush1.bf16.msra.mxu0 0
  %506 = vmatprep.subr.bf16.mxu0 0
  %507 = vmatpush1.bf16.msra.mxu0 0
  %508 = vmatprep.mubr.bf16.mxu0 0
  %509 = vmatmul.mubr.bf16.gmra.mrb[0].mxu0 %v433
  %v510 = vpop.f32.mrb[0].mxu0
  %v511 = vadd.f32 %v426, %v510
  %v512 = vpop.f32.mrb[0].mxu0
  %v513 = vadd.f32 %v428, %v512
  %v514 = vpop.f32.mrb[0].mxu0
  %v515 = vpop.f32.mrb[0].mxu0
  %516 = vdwg.mxu0
  %517 = vrot.lane.b32.xlu0 %v214, 15
  %v518 = vpop.permute.xlu0 %517
  %519 = vrot.lane.b32.xlu0 %v218, 15
  %v520 = vpop.permute.xlu0 %519
  %521 = vrot.lane.b32.xlu0 %v215, 15
  %v522 = vpop.permute.xlu0 %521
  %523 = vrot.lane.b32.xlu0 %v219, 15
  %v524 = vpop.permute.xlu0 %523
  %525 = vrot.lane.b32.xlu0 %v216, 15
  %v526 = vpop.permute.xlu0 %525
  %527 = vrot.lane.b32.xlu0 %v220, 15
  %v528 = vpop.permute.xlu0 %527
  %529 = vrot.lane.b32.xlu0 %v217, 15
  %v530 = vpop.permute.xlu0 %529
  %531 = vrot.lane.b32.xlu0 %v221, 15
  %v532 = vpop.permute.xlu0 %531
  %vm533 = vcmp.lt.s32.totalorder %v239, 15
  %v534 = vsel %vm533, %v526, %v530
  %v535 = vsel %vm533, %v528, %v532
  %v536 = vsel %vm533, %v522, %v526
  %v537 = vsel %vm533, %v524, %v528
  %v538 = vsel %vm533, %v518, %v522
  %v539 = vsel %vm533, %v520, %v524
  %v540 = vsel %vm533, %v530, %v518
  %v541 = vsel %vm533, %v532, %v520
  %s542 = scalar_lea.vmem %s7, 8
  %v543 = vld [vmem:[%s542] sm:$0xf]
  %v545 = vlaneseq
  %v546 = vshrl.u32 %v545, 7
  %v547 = vsub.s32 0, %v546
  %v548 = vrot.slane %v543, %v547
  %v549 = vlaneseq
  %v550 = vshrl.u32 %v549, 7
  %v551 = vsub.s32 1, %v550
  %v552 = vrot.slane %v543, %v551
  %v553 = vlaneseq
  %v554 = vshrl.u32 %v553, 7
  %v555 = vsub.s32 2, %v554
  %v556 = vrot.slane %v543, %v555
  %v557 = vlaneseq
  %v558 = vshrl.u32 %v557, 7
  %v559 = vsub.s32 3, %v558
  %v560 = vrot.slane %v543, %v559
  %v565 = vmul.f32 %v540, %v548
  %v566 = vmul.f32 %v538, %v552
  %v567 = vmul.f32 %v536, %v556
  %v568 = vmul.f32 %v534, %v560
  %v569 = vmul.f32 %v541, %v548
  %v570 = vmul.f32 %v539, %v552
  %v571 = vmul.f32 %v537, %v556
  %v572 = vmul.f32 %v535, %v560
  %v573 = vpack.c.bf16 %v569, %v565
  %v574 = vpack.c.bf16 %v570, %v566
  %v575 = vpack.c.bf16 %v571, %v567
  %v576 = vpack.c.bf16 %v572, %v568
  %s577 = scalar_lea.vmem %s6, 8
  %v578 = vld [vmem:[%s577] sm:$0xf]
  %v580 = vsel %vm346, %v578, 0
  %582 = vmatprep.subr.bf16.mxu0 %v574
  %583 = vmatpush1.bf16.msra.mxu0 %v573
  %584 = vmatprep.subr.bf16.mxu0 0
  %585 = vmatpush1.bf16.msra.mxu0 0
  %586 = vmatprep.subr.bf16.mxu0 0
  %587 = vmatpush1.bf16.msra.mxu0 0
  %588 = vmatprep.subr.bf16.mxu0 0
  %589 = vmatpush1.bf16.msra.mxu0 0
  %590 = vmatprep.subr.bf16.mxu0 0
  %591 = vmatpush1.bf16.msra.mxu0 0
  %592 = vmatprep.subr.bf16.mxu0 0
  %593 = vmatpush1.bf16.msra.mxu0 0
  %594 = vmatprep.subr.bf16.mxu0 0
  %595 = vmatpush1.bf16.msra.mxu0 0
  %596 = vmatprep.subr.bf16.mxu0 0
  %597 = vmatpush1.bf16.msra.mxu0 0
  %598 = vmatprep.subr.bf16.mxu0 0
  %599 = vmatpush1.bf16.msra.mxu0 0
  %600 = vmatprep.subr.bf16.mxu0 0
  %601 = vmatpush1.bf16.msra.mxu0 0
  %602 = vmatprep.subr.bf16.mxu0 0
  %603 = vmatpush1.bf16.msra.mxu0 0
  %604 = vmatprep.subr.bf16.mxu0 0
  %605 = vmatpush1.bf16.msra.mxu0 0
  %606 = vmatprep.subr.bf16.mxu0 0
  %607 = vmatpush1.bf16.msra.mxu0 0
  %608 = vmatprep.subr.bf16.mxu0 0
  %609 = vmatpush1.bf16.msra.mxu0 0
  %610 = vmatprep.subr.bf16.mxu0 0
  %611 = vmatpush1.bf16.msra.mxu0 0
  %612 = vmatprep.subr.bf16.mxu0 0
  %613 = vmatpush1.bf16.msra.mxu0 0
  %614 = vmatprep.mubr.bf16.mxu0 0
  %615 = vmatmul.mubr.bf16.gmra.mrb[0].mxu0 %v580
  %v616 = vpop.f32.mrb[0].mxu0
  %v617 = vadd.f32 0.0, %v616
  %v618 = vpop.f32.mrb[0].mxu0
  %v619 = vadd.f32 0.0, %v618
  %v620 = vpop.f32.mrb[0].mxu0
  %v621 = vpop.f32.mrb[0].mxu0
  %622 = vdwg.mxu0
  %623 = vmatprep.subr.bf16.mxu0 %v576
  %624 = vmatpush1.bf16.msra.mxu0 %v575
  %625 = vmatprep.subr.bf16.mxu0 0
  %626 = vmatpush1.bf16.msra.mxu0 0
  %627 = vmatprep.subr.bf16.mxu0 0
  %628 = vmatpush1.bf16.msra.mxu0 0
  %629 = vmatprep.subr.bf16.mxu0 0
  %630 = vmatpush1.bf16.msra.mxu0 0
  %631 = vmatprep.subr.bf16.mxu0 0
  %632 = vmatpush1.bf16.msra.mxu0 0
  %633 = vmatprep.subr.bf16.mxu0 0
  %634 = vmatpush1.bf16.msra.mxu0 0
  %635 = vmatprep.subr.bf16.mxu0 0
  %636 = vmatpush1.bf16.msra.mxu0 0
  %637 = vmatprep.subr.bf16.mxu0 0
  %638 = vmatpush1.bf16.msra.mxu0 0
  %639 = vmatprep.subr.bf16.mxu0 0
  %640 = vmatpush1.bf16.msra.mxu0 0
  %641 = vmatprep.subr.bf16.mxu0 0
  %642 = vmatpush1.bf16.msra.mxu0 0
  %643 = vmatprep.subr.bf16.mxu0 0
  %644 = vmatpush1.bf16.msra.mxu0 0
  %645 = vmatprep.subr.bf16.mxu0 0
  %646 = vmatpush1.bf16.msra.mxu0 0
  %647 = vmatprep.subr.bf16.mxu0 0
  %648 = vmatpush1.bf16.msra.mxu0 0
  %649 = vmatprep.subr.bf16.mxu0 0
  %650 = vmatpush1.bf16.msra.mxu0 0
  %651 = vmatprep.subr.bf16.mxu0 0
  %652 = vmatpush1.bf16.msra.mxu0 0
  %653 = vmatprep.subr.bf16.mxu0 0
  %654 = vmatpush1.bf16.msra.mxu0 0
  %655 = vmatprep.mubr.bf16.mxu0 0
  %656 = vmatmul.mubr.bf16.gmra.mrb[0].mxu0 %v580
  %v657 = vpop.f32.mrb[0].mxu0
  %v658 = vadd.f32 0.0, %v657
  %v659 = vpop.f32.mrb[0].mxu0
  %v660 = vadd.f32 0.0, %v659
  %v661 = vpop.f32.mrb[0].mxu0
  %v662 = vpop.f32.mrb[0].mxu0
  %663 = vdwg.mxu0
  %v664 = vadd.f32 %v470, %v617
  %v665 = vadd.f32 %v472, %v619
  %v666 = vadd.f32 %v511, %v658
  %v667 = vadd.f32 %v513, %v660
  %668 = vrot.lane.b32.xlu0 %v214, 1
  %v669 = vpop.permute.xlu0 %668
  %670 = vrot.lane.b32.xlu0 %v218, 1
  %v671 = vpop.permute.xlu0 %670
  %672 = vrot.lane.b32.xlu0 %v215, 1
  %v673 = vpop.permute.xlu0 %672
  %674 = vrot.lane.b32.xlu0 %v219, 1
  %v675 = vpop.permute.xlu0 %674
  %676 = vrot.lane.b32.xlu0 %v216, 1
  %v677 = vpop.permute.xlu0 %676
  %678 = vrot.lane.b32.xlu0 %v220, 1
  %v679 = vpop.permute.xlu0 %678
  %680 = vrot.lane.b32.xlu0 %v217, 1
  %v681 = vpop.permute.xlu0 %680
  %682 = vrot.lane.b32.xlu0 %v221, 1
  %v683 = vpop.permute.xlu0 %682
  %vm684 = vcmp.lt.s32.totalorder %v239, 1
  %v685 = vsel %vm684, %v677, %v681
  %v686 = vsel %vm684, %v679, %v683
  %v687 = vsel %vm684, %v673, %v677
  %v688 = vsel %vm684, %v675, %v679
  %v689 = vsel %vm684, %v669, %v673
  %v690 = vsel %vm684, %v671, %v675
  %v691 = vsel %vm684, %v681, %v669
  %v692 = vsel %vm684, %v683, %v671
  %s693 = scalar_lea.vmem %s7, 12
  %v694 = vld [vmem:[%s693] sm:$0xf]
  %v696 = vlaneseq
  %v697 = vshrl.u32 %v696, 7
  %v698 = vsub.s32 0, %v697
  %v699 = vrot.slane %v694, %v698
  %v700 = vlaneseq
  %v701 = vshrl.u32 %v700, 7
  %v702 = vsub.s32 1, %v701
  %v703 = vrot.slane %v694, %v702
  %v704 = vlaneseq
  %v705 = vshrl.u32 %v704, 7
  %v706 = vsub.s32 2, %v705
  %v707 = vrot.slane %v694, %v706
  %v708 = vlaneseq
  %v709 = vshrl.u32 %v708, 7
  %v710 = vsub.s32 3, %v709
  %v711 = vrot.slane %v694, %v710
  %v716 = vmul.f32 %v691, %v699
  %v717 = vmul.f32 %v689, %v703
  %v718 = vmul.f32 %v687, %v707
  %v719 = vmul.f32 %v685, %v711
  %v720 = vmul.f32 %v692, %v699
  %v721 = vmul.f32 %v690, %v703
  %v722 = vmul.f32 %v688, %v707
  %v723 = vmul.f32 %v686, %v711
  %v724 = vpack.c.bf16 %v720, %v716
  %v725 = vpack.c.bf16 %v721, %v717
  %v726 = vpack.c.bf16 %v722, %v718
  %v727 = vpack.c.bf16 %v723, %v719
  %s728 = scalar_lea.vmem %s6, 12
  %v729 = vld [vmem:[%s728] sm:$0xf]
  %v731 = vsel %vm346, %v729, 0
  %733 = vmatprep.subr.bf16.mxu0 %v725
  %734 = vmatpush1.bf16.msra.mxu0 %v724
  %735 = vmatprep.subr.bf16.mxu0 0
  %736 = vmatpush1.bf16.msra.mxu0 0
  %737 = vmatprep.subr.bf16.mxu0 0
  %738 = vmatpush1.bf16.msra.mxu0 0
  %739 = vmatprep.subr.bf16.mxu0 0
  %740 = vmatpush1.bf16.msra.mxu0 0
  %741 = vmatprep.subr.bf16.mxu0 0
  %742 = vmatpush1.bf16.msra.mxu0 0
  %743 = vmatprep.subr.bf16.mxu0 0
  %744 = vmatpush1.bf16.msra.mxu0 0
  %745 = vmatprep.subr.bf16.mxu0 0
  %746 = vmatpush1.bf16.msra.mxu0 0
  %747 = vmatprep.subr.bf16.mxu0 0
  %748 = vmatpush1.bf16.msra.mxu0 0
  %749 = vmatprep.subr.bf16.mxu0 0
  %750 = vmatpush1.bf16.msra.mxu0 0
  %751 = vmatprep.subr.bf16.mxu0 0
  %752 = vmatpush1.bf16.msra.mxu0 0
  %753 = vmatprep.subr.bf16.mxu0 0
  %754 = vmatpush1.bf16.msra.mxu0 0
  %755 = vmatprep.subr.bf16.mxu0 0
  %756 = vmatpush1.bf16.msra.mxu0 0
  %757 = vmatprep.subr.bf16.mxu0 0
  %758 = vmatpush1.bf16.msra.mxu0 0
  %759 = vmatprep.subr.bf16.mxu0 0
  %760 = vmatpush1.bf16.msra.mxu0 0
  %761 = vmatprep.subr.bf16.mxu0 0
  %762 = vmatpush1.bf16.msra.mxu0 0
  %763 = vmatprep.subr.bf16.mxu0 0
  %764 = vmatpush1.bf16.msra.mxu0 0
  %765 = vmatprep.mubr.bf16.mxu0 0
  %766 = vmatmul.mubr.bf16.gmra.mrb[0].mxu0 %v731
  %v767 = vpop.f32.mrb[0].mxu0
  %v768 = vadd.f32 0.0, %v767
  %v769 = vpop.f32.mrb[0].mxu0
  %v770 = vadd.f32 0.0, %v769
  %v771 = vpop.f32.mrb[0].mxu0
  %v772 = vpop.f32.mrb[0].mxu0
  %773 = vdwg.mxu0
  %774 = vmatprep.subr.bf16.mxu0 %v727
  %775 = vmatpush1.bf16.msra.mxu0 %v726
  %776 = vmatprep.subr.bf16.mxu0 0
  %777 = vmatpush1.bf16.msra.mxu0 0
  %778 = vmatprep.subr.bf16.mxu0 0
  %779 = vmatpush1.bf16.msra.mxu0 0
  %780 = vmatprep.subr.bf16.mxu0 0
  %781 = vmatpush1.bf16.msra.mxu0 0
  %782 = vmatprep.subr.bf16.mxu0 0
  %783 = vmatpush1.bf16.msra.mxu0 0
  %784 = vmatprep.subr.bf16.mxu0 0
  %785 = vmatpush1.bf16.msra.mxu0 0
  %786 = vmatprep.subr.bf16.mxu0 0
  %787 = vmatpush1.bf16.msra.mxu0 0
  %788 = vmatprep.subr.bf16.mxu0 0
  %789 = vmatpush1.bf16.msra.mxu0 0
  %790 = vmatprep.subr.bf16.mxu0 0
  %791 = vmatpush1.bf16.msra.mxu0 0
  %792 = vmatprep.subr.bf16.mxu0 0
  %793 = vmatpush1.bf16.msra.mxu0 0
  %794 = vmatprep.subr.bf16.mxu0 0
  %795 = vmatpush1.bf16.msra.mxu0 0
  %796 = vmatprep.subr.bf16.mxu0 0
  %797 = vmatpush1.bf16.msra.mxu0 0
  %798 = vmatprep.subr.bf16.mxu0 0
  %799 = vmatpush1.bf16.msra.mxu0 0
  %800 = vmatprep.subr.bf16.mxu0 0
  %801 = vmatpush1.bf16.msra.mxu0 0
  %802 = vmatprep.subr.bf16.mxu0 0
  %803 = vmatpush1.bf16.msra.mxu0 0
  %804 = vmatprep.subr.bf16.mxu0 0
  %805 = vmatpush1.bf16.msra.mxu0 0
  %806 = vmatprep.mubr.bf16.mxu0 0
  %807 = vmatmul.mubr.bf16.gmra.mrb[0].mxu0 %v731
  %v808 = vpop.f32.mrb[0].mxu0
  %v809 = vadd.f32 0.0, %v808
  %v810 = vpop.f32.mrb[0].mxu0
  %v811 = vadd.f32 0.0, %v810
  %v812 = vpop.f32.mrb[0].mxu0
  %v813 = vpop.f32.mrb[0].mxu0
  %814 = vdwg.mxu0
  %v815 = vadd.f32 %v664, %v768
  %v816 = vadd.f32 %v665, %v770
  %v817 = vadd.f32 %v666, %v809
  %v818 = vadd.f32 %v667, %v811
  %v819 = vpack.c.bf16 %v218, %v214
  %v820 = vpack.c.bf16 %v219, %v215
  %v821 = vpack.c.bf16 %v220, %v216
  %v822 = vpack.c.bf16 %v221, %v217
  %s823 = scalar_lea.vmem %s6, 16
  %v824 = vld [vmem:[%s823] sm:$0xf]
  %v826 = vsel %vm346, %v824, 0
  %828 = vmatprep.subr.bf16.mxu0 %v820
  %829 = vmatpush1.bf16.msra.mxu0 %v819
  %830 = vmatprep.subr.bf16.mxu0 0
  %831 = vmatpush1.bf16.msra.mxu0 0
  %832 = vmatprep.subr.bf16.mxu0 0
  %833 = vmatpush1.bf16.msra.mxu0 0
  %834 = vmatprep.subr.bf16.mxu0 0
  %835 = vmatpush1.bf16.msra.mxu0 0
  %836 = vmatprep.subr.bf16.mxu0 0
  %837 = vmatpush1.bf16.msra.mxu0 0
  %838 = vmatprep.subr.bf16.mxu0 0
  %839 = vmatpush1.bf16.msra.mxu0 0
  %840 = vmatprep.subr.bf16.mxu0 0
  %841 = vmatpush1.bf16.msra.mxu0 0
  %842 = vmatprep.subr.bf16.mxu0 0
  %843 = vmatpush1.bf16.msra.mxu0 0
  %844 = vmatprep.subr.bf16.mxu0 0
  %845 = vmatpush1.bf16.msra.mxu0 0
  %846 = vmatprep.subr.bf16.mxu0 0
  %847 = vmatpush1.bf16.msra.mxu0 0
  %848 = vmatprep.subr.bf16.mxu0 0
  %849 = vmatpush1.bf16.msra.mxu0 0
  %850 = vmatprep.subr.bf16.mxu0 0
  %851 = vmatpush1.bf16.msra.mxu0 0
  %852 = vmatprep.subr.bf16.mxu0 0
  %853 = vmatpush1.bf16.msra.mxu0 0
  %854 = vmatprep.subr.bf16.mxu0 0
  %855 = vmatpush1.bf16.msra.mxu0 0
  %856 = vmatprep.subr.bf16.mxu0 0
  %857 = vmatpush1.bf16.msra.mxu0 0
  %858 = vmatprep.subr.bf16.mxu0 0
  %859 = vmatpush1.bf16.msra.mxu0 0
  %860 = vmatprep.mubr.bf16.mxu0 0
  %861 = vmatmul.mubr.bf16.gmra.mrb[0].mxu0 %v826
  %v862 = vpop.f32.mrb[0].mxu0
  %v863 = vadd.f32 0.0, %v862
  %v864 = vpop.f32.mrb[0].mxu0
  %v865 = vadd.f32 0.0, %v864
  %v866 = vpop.f32.mrb[0].mxu0
  %v867 = vpop.f32.mrb[0].mxu0
  %868 = vdwg.mxu0
  %869 = vmatprep.subr.bf16.mxu0 %v822
  %870 = vmatpush1.bf16.msra.mxu0 %v821
  %871 = vmatprep.subr.bf16.mxu0 0
  %872 = vmatpush1.bf16.msra.mxu0 0
  %873 = vmatprep.subr.bf16.mxu0 0
  %874 = vmatpush1.bf16.msra.mxu0 0
  %875 = vmatprep.subr.bf16.mxu0 0
  %876 = vmatpush1.bf16.msra.mxu0 0
  %877 = vmatprep.subr.bf16.mxu0 0
  %878 = vmatpush1.bf16.msra.mxu0 0
  %879 = vmatprep.subr.bf16.mxu0 0
  %880 = vmatpush1.bf16.msra.mxu0 0
  %881 = vmatprep.subr.bf16.mxu0 0
  %882 = vmatpush1.bf16.msra.mxu0 0
  %883 = vmatprep.subr.bf16.mxu0 0
  %884 = vmatpush1.bf16.msra.mxu0 0
  %885 = vmatprep.subr.bf16.mxu0 0
  %886 = vmatpush1.bf16.msra.mxu0 0
  %887 = vmatprep.subr.bf16.mxu0 0
  %888 = vmatpush1.bf16.msra.mxu0 0
  %889 = vmatprep.subr.bf16.mxu0 0
  %890 = vmatpush1.bf16.msra.mxu0 0
  %891 = vmatprep.subr.bf16.mxu0 0
  %892 = vmatpush1.bf16.msra.mxu0 0
  %893 = vmatprep.subr.bf16.mxu0 0
  %894 = vmatpush1.bf16.msra.mxu0 0
  %895 = vmatprep.subr.bf16.mxu0 0
  %896 = vmatpush1.bf16.msra.mxu0 0
  %897 = vmatprep.subr.bf16.mxu0 0
  %898 = vmatpush1.bf16.msra.mxu0 0
  %899 = vmatprep.subr.bf16.mxu0 0
  %900 = vmatpush1.bf16.msra.mxu0 0
  %901 = vmatprep.mubr.bf16.mxu0 0
  %902 = vmatmul.mubr.bf16.gmra.mrb[0].mxu0 %v826
  %v903 = vpop.f32.mrb[0].mxu0
  %v904 = vadd.f32 0.0, %v903
  %v905 = vpop.f32.mrb[0].mxu0
  %v906 = vadd.f32 0.0, %v905
  %v907 = vpop.f32.mrb[0].mxu0
  %v908 = vpop.f32.mrb[0].mxu0
  %909 = vdwg.mxu0
  %v910 = vadd.f32 %v815, %v863
  %v911 = vadd.f32 %v816, %v865
  %v912 = vadd.f32 %v817, %v904
  %v913 = vadd.f32 %v818, %v906
  %914 = vrot.lane.b32.xlu0 %v214, 127
  %v915 = vpop.permute.xlu0 %914
  %916 = vrot.lane.b32.xlu0 %v218, 127
  %v917 = vpop.permute.xlu0 %916
  %918 = vrot.lane.b32.xlu0 %v215, 127
  %v919 = vpop.permute.xlu0 %918
  %920 = vrot.lane.b32.xlu0 %v219, 127
  %v921 = vpop.permute.xlu0 %920
  %922 = vrot.lane.b32.xlu0 %v216, 127
  %v923 = vpop.permute.xlu0 %922
  %924 = vrot.lane.b32.xlu0 %v220, 127
  %v925 = vpop.permute.xlu0 %924
  %926 = vrot.lane.b32.xlu0 %v217, 127
  %v927 = vpop.permute.xlu0 %926
  %928 = vrot.lane.b32.xlu0 %v221, 127
  %v929 = vpop.permute.xlu0 %928
  %vm930 = vcmp.lt.s32.totalorder %v239, 127
  %v931 = vsel %vm930, %v923, %v927
  %v932 = vsel %vm930, %v925, %v929
  %v933 = vsel %vm930, %v919, %v923
  %v934 = vsel %vm930, %v921, %v925
  %v935 = vsel %vm930, %v915, %v919
  %v936 = vsel %vm930, %v917, %v921
  %v937 = vsel %vm930, %v927, %v915
  %v938 = vsel %vm930, %v929, %v917
  %s939 = scalar_lea.vmem %s7, 20
  %v940 = vld [vmem:[%s939] sm:$0xf]
  %v942 = vlaneseq
  %v943 = vshrl.u32 %v942, 7
  %v944 = vsub.s32 0, %v943
  %v945 = vrot.slane %v940, %v944
  %v946 = vlaneseq
  %v947 = vshrl.u32 %v946, 7
  %v948 = vsub.s32 1, %v947
  %v949 = vrot.slane %v940, %v948
  %v950 = vlaneseq
  %v951 = vshrl.u32 %v950, 7
  %v952 = vsub.s32 2, %v951
  %v953 = vrot.slane %v940, %v952
  %v954 = vlaneseq
  %v955 = vshrl.u32 %v954, 7
  %v956 = vsub.s32 3, %v955
  %v957 = vrot.slane %v940, %v956
  %v962 = vmul.f32 %v935, %v945
  %v963 = vmul.f32 %v933, %v949
  %v964 = vmul.f32 %v931, %v953
  %v965 = vmul.f32 %v937, %v957
  %v966 = vmul.f32 %v936, %v945
  %v967 = vmul.f32 %v934, %v949
  %v968 = vmul.f32 %v932, %v953
  %v969 = vmul.f32 %v938, %v957
  %v970 = vpack.c.bf16 %v966, %v962
  %v971 = vpack.c.bf16 %v967, %v963
  %v972 = vpack.c.bf16 %v968, %v964
  %v973 = vpack.c.bf16 %v969, %v965
  %s974 = scalar_lea.vmem %s6, 20
  %v975 = vld [vmem:[%s974] sm:$0xf]
  %v977 = vsel %vm346, %v975, 0
  %979 = vmatprep.subr.bf16.mxu0 %v971
  %980 = vmatpush1.bf16.msra.mxu0 %v970
  %981 = vmatprep.subr.bf16.mxu0 0
  %982 = vmatpush1.bf16.msra.mxu0 0
  %983 = vmatprep.subr.bf16.mxu0 0
  %984 = vmatpush1.bf16.msra.mxu0 0
  %985 = vmatprep.subr.bf16.mxu0 0
  %986 = vmatpush1.bf16.msra.mxu0 0
  %987 = vmatprep.subr.bf16.mxu0 0
  %988 = vmatpush1.bf16.msra.mxu0 0
  %989 = vmatprep.subr.bf16.mxu0 0
  %990 = vmatpush1.bf16.msra.mxu0 0
  %991 = vmatprep.subr.bf16.mxu0 0
  %992 = vmatpush1.bf16.msra.mxu0 0
  %993 = vmatprep.subr.bf16.mxu0 0
  %994 = vmatpush1.bf16.msra.mxu0 0
  %995 = vmatprep.subr.bf16.mxu0 0
  %996 = vmatpush1.bf16.msra.mxu0 0
  %997 = vmatprep.subr.bf16.mxu0 0
  %998 = vmatpush1.bf16.msra.mxu0 0
  %999 = vmatprep.subr.bf16.mxu0 0
  %1000 = vmatpush1.bf16.msra.mxu0 0
  %1001 = vmatprep.subr.bf16.mxu0 0
  %1002 = vmatpush1.bf16.msra.mxu0 0
  %1003 = vmatprep.subr.bf16.mxu0 0
  %1004 = vmatpush1.bf16.msra.mxu0 0
  %1005 = vmatprep.subr.bf16.mxu0 0
  %1006 = vmatpush1.bf16.msra.mxu0 0
  %1007 = vmatprep.subr.bf16.mxu0 0
  %1008 = vmatpush1.bf16.msra.mxu0 0
  %1009 = vmatprep.subr.bf16.mxu0 0
  %1010 = vmatpush1.bf16.msra.mxu0 0
  %1011 = vmatprep.mubr.bf16.mxu0 0
  %1012 = vmatmul.mubr.bf16.gmra.mrb[0].mxu0 %v977
  %v1013 = vpop.f32.mrb[0].mxu0
  %v1014 = vadd.f32 0.0, %v1013
  %v1015 = vpop.f32.mrb[0].mxu0
  %v1016 = vadd.f32 0.0, %v1015
  %v1017 = vpop.f32.mrb[0].mxu0
  %v1018 = vpop.f32.mrb[0].mxu0
  %1019 = vdwg.mxu0
  %1020 = vmatprep.subr.bf16.mxu0 %v973
  %1021 = vmatpush1.bf16.msra.mxu0 %v972
  %1022 = vmatprep.subr.bf16.mxu0 0
  %1023 = vmatpush1.bf16.msra.mxu0 0
  %1024 = vmatprep.subr.bf16.mxu0 0
  %1025 = vmatpush1.bf16.msra.mxu0 0
  %1026 = vmatprep.subr.bf16.mxu0 0
  %1027 = vmatpush1.bf16.msra.mxu0 0
  %1028 = vmatprep.subr.bf16.mxu0 0
  %1029 = vmatpush1.bf16.msra.mxu0 0
  %1030 = vmatprep.subr.bf16.mxu0 0
  %1031 = vmatpush1.bf16.msra.mxu0 0
  %1032 = vmatprep.subr.bf16.mxu0 0
  %1033 = vmatpush1.bf16.msra.mxu0 0
  %1034 = vmatprep.subr.bf16.mxu0 0
  %1035 = vmatpush1.bf16.msra.mxu0 0
  %1036 = vmatprep.subr.bf16.mxu0 0
  %1037 = vmatpush1.bf16.msra.mxu0 0
  %1038 = vmatprep.subr.bf16.mxu0 0
  %1039 = vmatpush1.bf16.msra.mxu0 0
  %1040 = vmatprep.subr.bf16.mxu0 0
  %1041 = vmatpush1.bf16.msra.mxu0 0
  %1042 = vmatprep.subr.bf16.mxu0 0
  %1043 = vmatpush1.bf16.msra.mxu0 0
  %1044 = vmatprep.subr.bf16.mxu0 0
  %1045 = vmatpush1.bf16.msra.mxu0 0
  %1046 = vmatprep.subr.bf16.mxu0 0
  %1047 = vmatpush1.bf16.msra.mxu0 0
  %1048 = vmatprep.subr.bf16.mxu0 0
  %1049 = vmatpush1.bf16.msra.mxu0 0
  %1050 = vmatprep.subr.bf16.mxu0 0
  %1051 = vmatpush1.bf16.msra.mxu0 0
  %1052 = vmatprep.mubr.bf16.mxu0 0
  %1053 = vmatmul.mubr.bf16.gmra.mrb[0].mxu0 %v977
  %v1054 = vpop.f32.mrb[0].mxu0
  %v1055 = vadd.f32 0.0, %v1054
  %v1056 = vpop.f32.mrb[0].mxu0
  %v1057 = vadd.f32 0.0, %v1056
  %v1058 = vpop.f32.mrb[0].mxu0
  %v1059 = vpop.f32.mrb[0].mxu0
  %1060 = vdwg.mxu0
  %v1061 = vadd.f32 %v910, %v1014
  %v1062 = vadd.f32 %v911, %v1016
  %v1063 = vadd.f32 %v912, %v1055
  %v1064 = vadd.f32 %v913, %v1057
  %1065 = vrot.lane.b32.xlu0 %v214, 113
  %v1066 = vpop.permute.xlu0 %1065
  %1067 = vrot.lane.b32.xlu0 %v218, 113
  %v1068 = vpop.permute.xlu0 %1067
  %1069 = vrot.lane.b32.xlu0 %v215, 113
  %v1070 = vpop.permute.xlu0 %1069
  %1071 = vrot.lane.b32.xlu0 %v219, 113
  %v1072 = vpop.permute.xlu0 %1071
  %1073 = vrot.lane.b32.xlu0 %v216, 113
  %v1074 = vpop.permute.xlu0 %1073
  %1075 = vrot.lane.b32.xlu0 %v220, 113
  %v1076 = vpop.permute.xlu0 %1075
  %1077 = vrot.lane.b32.xlu0 %v217, 113
  %v1078 = vpop.permute.xlu0 %1077
  %1079 = vrot.lane.b32.xlu0 %v221, 113
  %v1080 = vpop.permute.xlu0 %1079
  %vm1081 = vcmp.lt.s32.totalorder %v239, 113
  %v1082 = vsel %vm1081, %v1074, %v1078
  %v1083 = vsel %vm1081, %v1076, %v1080
  %v1084 = vsel %vm1081, %v1070, %v1074
  %v1085 = vsel %vm1081, %v1072, %v1076
  %v1086 = vsel %vm1081, %v1066, %v1070
  %v1087 = vsel %vm1081, %v1068, %v1072
  %v1088 = vsel %vm1081, %v1078, %v1066
  %v1089 = vsel %vm1081, %v1080, %v1068
  %s1090 = scalar_lea.vmem %s7, 24
  %v1091 = vld [vmem:[%s1090] sm:$0xf]
  %v1093 = vlaneseq
  %v1094 = vshrl.u32 %v1093, 7
  %v1095 = vsub.s32 0, %v1094
  %v1096 = vrot.slane %v1091, %v1095
  %v1097 = vlaneseq
  %v1098 = vshrl.u32 %v1097, 7
  %v1099 = vsub.s32 1, %v1098
  %v1100 = vrot.slane %v1091, %v1099
  %v1101 = vlaneseq
  %v1102 = vshrl.u32 %v1101, 7
  %v1103 = vsub.s32 2, %v1102
  %v1104 = vrot.slane %v1091, %v1103
  %v1105 = vlaneseq
  %v1106 = vshrl.u32 %v1105, 7
  %v1107 = vsub.s32 3, %v1106
  %v1108 = vrot.slane %v1091, %v1107
  %v1113 = vmul.f32 %v1086, %v1096
  %v1114 = vmul.f32 %v1084, %v1100
  %v1115 = vmul.f32 %v1082, %v1104
  %v1116 = vmul.f32 %v1088, %v1108
  %v1117 = vmul.f32 %v1087, %v1096
  %v1118 = vmul.f32 %v1085, %v1100
  %v1119 = vmul.f32 %v1083, %v1104
  %v1120 = vmul.f32 %v1089, %v1108
  %v1121 = vpack.c.bf16 %v1117, %v1113
  %v1122 = vpack.c.bf16 %v1118, %v1114
  %v1123 = vpack.c.bf16 %v1119, %v1115
  %v1124 = vpack.c.bf16 %v1120, %v1116
  %s1125 = scalar_lea.vmem %s6, 24
  %v1126 = vld [vmem:[%s1125] sm:$0xf]
  %v1128 = vsel %vm346, %v1126, 0
  %1130 = vmatprep.subr.bf16.mxu0 %v1122
  %1131 = vmatpush1.bf16.msra.mxu0 %v1121
  %1132 = vmatprep.subr.bf16.mxu0 0
  %1133 = vmatpush1.bf16.msra.mxu0 0
  %1134 = vmatprep.subr.bf16.mxu0 0
  %1135 = vmatpush1.bf16.msra.mxu0 0
  %1136 = vmatprep.subr.bf16.mxu0 0
  %1137 = vmatpush1.bf16.msra.mxu0 0
  %1138 = vmatprep.subr.bf16.mxu0 0
  %1139 = vmatpush1.bf16.msra.mxu0 0
  %1140 = vmatprep.subr.bf16.mxu0 0
  %1141 = vmatpush1.bf16.msra.mxu0 0
  %1142 = vmatprep.subr.bf16.mxu0 0
  %1143 = vmatpush1.bf16.msra.mxu0 0
  %1144 = vmatprep.subr.bf16.mxu0 0
  %1145 = vmatpush1.bf16.msra.mxu0 0
  %1146 = vmatprep.subr.bf16.mxu0 0
  %1147 = vmatpush1.bf16.msra.mxu0 0
  %1148 = vmatprep.subr.bf16.mxu0 0
  %1149 = vmatpush1.bf16.msra.mxu0 0
  %1150 = vmatprep.subr.bf16.mxu0 0
  %1151 = vmatpush1.bf16.msra.mxu0 0
  %1152 = vmatprep.subr.bf16.mxu0 0
  %1153 = vmatpush1.bf16.msra.mxu0 0
  %1154 = vmatprep.subr.bf16.mxu0 0
  %1155 = vmatpush1.bf16.msra.mxu0 0
  %1156 = vmatprep.subr.bf16.mxu0 0
  %1157 = vmatpush1.bf16.msra.mxu0 0
  %1158 = vmatprep.subr.bf16.mxu0 0
  %1159 = vmatpush1.bf16.msra.mxu0 0
  %1160 = vmatprep.subr.bf16.mxu0 0
  %1161 = vmatpush1.bf16.msra.mxu0 0
  %1162 = vmatprep.mubr.bf16.mxu0 0
  %1163 = vmatmul.mubr.bf16.gmra.mrb[0].mxu0 %v1128
  %v1164 = vpop.f32.mrb[0].mxu0
  %v1165 = vadd.f32 0.0, %v1164
  %v1166 = vpop.f32.mrb[0].mxu0
  %v1167 = vadd.f32 0.0, %v1166
  %v1168 = vpop.f32.mrb[0].mxu0
  %v1169 = vpop.f32.mrb[0].mxu0
  %1170 = vdwg.mxu0
  %1171 = vmatprep.subr.bf16.mxu0 %v1124
  %1172 = vmatpush1.bf16.msra.mxu0 %v1123
  %1173 = vmatprep.subr.bf16.mxu0 0
  %1174 = vmatpush1.bf16.msra.mxu0 0
  %1175 = vmatprep.subr.bf16.mxu0 0
  %1176 = vmatpush1.bf16.msra.mxu0 0
  %1177 = vmatprep.subr.bf16.mxu0 0
  %1178 = vmatpush1.bf16.msra.mxu0 0
  %1179 = vmatprep.subr.bf16.mxu0 0
  %1180 = vmatpush1.bf16.msra.mxu0 0
  %1181 = vmatprep.subr.bf16.mxu0 0
  %1182 = vmatpush1.bf16.msra.mxu0 0
  %1183 = vmatprep.subr.bf16.mxu0 0
  %1184 = vmatpush1.bf16.msra.mxu0 0
  %1185 = vmatprep.subr.bf16.mxu0 0
  %1186 = vmatpush1.bf16.msra.mxu0 0
  %1187 = vmatprep.subr.bf16.mxu0 0
  %1188 = vmatpush1.bf16.msra.mxu0 0
  %1189 = vmatprep.subr.bf16.mxu0 0
  %1190 = vmatpush1.bf16.msra.mxu0 0
  %1191 = vmatprep.subr.bf16.mxu0 0
  %1192 = vmatpush1.bf16.msra.mxu0 0
  %1193 = vmatprep.subr.bf16.mxu0 0
  %1194 = vmatpush1.bf16.msra.mxu0 0
  %1195 = vmatprep.subr.bf16.mxu0 0
  %1196 = vmatpush1.bf16.msra.mxu0 0
  %1197 = vmatprep.subr.bf16.mxu0 0
  %1198 = vmatpush1.bf16.msra.mxu0 0
  %1199 = vmatprep.subr.bf16.mxu0 0
  %1200 = vmatpush1.bf16.msra.mxu0 0
  %1201 = vmatprep.subr.bf16.mxu0 0
  %1202 = vmatpush1.bf16.msra.mxu0 0
  %1203 = vmatprep.mubr.bf16.mxu0 0
  %1204 = vmatmul.mubr.bf16.gmra.mrb[0].mxu0 %v1128
  %v1205 = vpop.f32.mrb[0].mxu0
  %v1206 = vadd.f32 0.0, %v1205
  %v1207 = vpop.f32.mrb[0].mxu0
  %v1208 = vadd.f32 0.0, %v1207
  %v1209 = vpop.f32.mrb[0].mxu0
  %v1210 = vpop.f32.mrb[0].mxu0
  %1211 = vdwg.mxu0
  %v1212 = vadd.f32 %v1061, %v1165
  %v1213 = vadd.f32 %v1062, %v1167
  %v1214 = vadd.f32 %v1063, %v1206
  %v1215 = vadd.f32 %v1064, %v1208
  %1216 = vrot.lane.b32.xlu0 %v214, 112
  %v1217 = vpop.permute.xlu0 %1216
  %1218 = vrot.lane.b32.xlu0 %v218, 112
  %v1219 = vpop.permute.xlu0 %1218
  %1220 = vrot.lane.b32.xlu0 %v215, 112
  %v1221 = vpop.permute.xlu0 %1220
  %1222 = vrot.lane.b32.xlu0 %v219, 112
  %v1223 = vpop.permute.xlu0 %1222
  %1224 = vrot.lane.b32.xlu0 %v216, 112
  %v1225 = vpop.permute.xlu0 %1224
  %1226 = vrot.lane.b32.xlu0 %v220, 112
  %v1227 = vpop.permute.xlu0 %1226
  %1228 = vrot.lane.b32.xlu0 %v217, 112
  %v1229 = vpop.permute.xlu0 %1228
  %1230 = vrot.lane.b32.xlu0 %v221, 112
  %v1231 = vpop.permute.xlu0 %1230
  %vm1232 = vcmp.lt.s32.totalorder %v239, 112
  %v1233 = vsel %vm1232, %v1225, %v1229
  %v1234 = vsel %vm1232, %v1227, %v1231
  %v1235 = vsel %vm1232, %v1221, %v1225
  %v1236 = vsel %vm1232, %v1223, %v1227
  %v1237 = vsel %vm1232, %v1217, %v1221
  %v1238 = vsel %vm1232, %v1219, %v1223
  %v1239 = vsel %vm1232, %v1229, %v1217
  %v1240 = vsel %vm1232, %v1231, %v1219
  %s1241 = scalar_lea.vmem %s7, 28
  %v1242 = vld [vmem:[%s1241] sm:$0xf]
  %v1244 = vlaneseq
  %v1245 = vshrl.u32 %v1244, 7
  %v1246 = vsub.s32 0, %v1245
  %v1247 = vrot.slane %v1242, %v1246
  %v1248 = vlaneseq
  %v1249 = vshrl.u32 %v1248, 7
  %v1250 = vsub.s32 1, %v1249
  %v1251 = vrot.slane %v1242, %v1250
  %v1252 = vlaneseq
  %v1253 = vshrl.u32 %v1252, 7
  %v1254 = vsub.s32 2, %v1253
  %v1255 = vrot.slane %v1242, %v1254
  %v1256 = vlaneseq
  %v1257 = vshrl.u32 %v1256, 7
  %v1258 = vsub.s32 3, %v1257
  %v1259 = vrot.slane %v1242, %v1258
  %v1264 = vmul.f32 %v1237, %v1247
  %v1265 = vmul.f32 %v1235, %v1251
  %v1266 = vmul.f32 %v1233, %v1255
  %v1267 = vmul.f32 %v1239, %v1259
  %v1268 = vmul.f32 %v1238, %v1247
  %v1269 = vmul.f32 %v1236, %v1251
  %v1270 = vmul.f32 %v1234, %v1255
  %v1271 = vmul.f32 %v1240, %v1259
  %v1272 = vpack.c.bf16 %v1268, %v1264
  %v1273 = vpack.c.bf16 %v1269, %v1265
  %v1274 = vpack.c.bf16 %v1270, %v1266
  %v1275 = vpack.c.bf16 %v1271, %v1267
  %s1276 = scalar_lea.vmem %s6, 28
  %v1277 = vld [vmem:[%s1276] sm:$0xf]
  %v1279 = vsel %vm346, %v1277, 0
  %1281 = vmatprep.subr.bf16.mxu0 %v1273
  %1282 = vmatpush1.bf16.msra.mxu0 %v1272
  %1283 = vmatprep.subr.bf16.mxu0 0
  %1284 = vmatpush1.bf16.msra.mxu0 0
  %1285 = vmatprep.subr.bf16.mxu0 0
  %1286 = vmatpush1.bf16.msra.mxu0 0
  %1287 = vmatprep.subr.bf16.mxu0 0
  %1288 = vmatpush1.bf16.msra.mxu0 0
  %1289 = vmatprep.subr.bf16.mxu0 0
  %1290 = vmatpush1.bf16.msra.mxu0 0
  %1291 = vmatprep.subr.bf16.mxu0 0
  %1292 = vmatpush1.bf16.msra.mxu0 0
  %1293 = vmatprep.subr.bf16.mxu0 0
  %1294 = vmatpush1.bf16.msra.mxu0 0
  %1295 = vmatprep.subr.bf16.mxu0 0
  %1296 = vmatpush1.bf16.msra.mxu0 0
  %1297 = vmatprep.subr.bf16.mxu0 0
  %1298 = vmatpush1.bf16.msra.mxu0 0
  %1299 = vmatprep.subr.bf16.mxu0 0
  %1300 = vmatpush1.bf16.msra.mxu0 0
  %1301 = vmatprep.subr.bf16.mxu0 0
  %1302 = vmatpush1.bf16.msra.mxu0 0
  %1303 = vmatprep.subr.bf16.mxu0 0
  %1304 = vmatpush1.bf16.msra.mxu0 0
  %1305 = vmatprep.subr.bf16.mxu0 0
  %1306 = vmatpush1.bf16.msra.mxu0 0
  %1307 = vmatprep.subr.bf16.mxu0 0
  %1308 = vmatpush1.bf16.msra.mxu0 0
  %1309 = vmatprep.subr.bf16.mxu0 0
  %1310 = vmatpush1.bf16.msra.mxu0 0
  %1311 = vmatprep.subr.bf16.mxu0 0
  %1312 = vmatpush1.bf16.msra.mxu0 0
  %1313 = vmatprep.mubr.bf16.mxu0 0
  %1314 = vmatmul.mubr.bf16.gmra.mrb[0].mxu0 %v1279
  %v1315 = vpop.f32.mrb[0].mxu0
  %v1316 = vadd.f32 0.0, %v1315
  %v1317 = vpop.f32.mrb[0].mxu0
  %v1318 = vadd.f32 0.0, %v1317
  %v1319 = vpop.f32.mrb[0].mxu0
  %v1320 = vpop.f32.mrb[0].mxu0
  %1321 = vdwg.mxu0
  %1322 = vmatprep.subr.bf16.mxu0 %v1275
  %1323 = vmatpush1.bf16.msra.mxu0 %v1274
  %1324 = vmatprep.subr.bf16.mxu0 0
  %1325 = vmatpush1.bf16.msra.mxu0 0
  %1326 = vmatprep.subr.bf16.mxu0 0
  %1327 = vmatpush1.bf16.msra.mxu0 0
  %1328 = vmatprep.subr.bf16.mxu0 0
  %1329 = vmatpush1.bf16.msra.mxu0 0
  %1330 = vmatprep.subr.bf16.mxu0 0
  %1331 = vmatpush1.bf16.msra.mxu0 0
  %1332 = vmatprep.subr.bf16.mxu0 0
  %1333 = vmatpush1.bf16.msra.mxu0 0
  %1334 = vmatprep.subr.bf16.mxu0 0
  %1335 = vmatpush1.bf16.msra.mxu0 0
  %1336 = vmatprep.subr.bf16.mxu0 0
  %1337 = vmatpush1.bf16.msra.mxu0 0
  %1338 = vmatprep.subr.bf16.mxu0 0
  %1339 = vmatpush1.bf16.msra.mxu0 0
  %1340 = vmatprep.subr.bf16.mxu0 0
  %1341 = vmatpush1.bf16.msra.mxu0 0
  %1342 = vmatprep.subr.bf16.mxu0 0
  %1343 = vmatpush1.bf16.msra.mxu0 0
  %1344 = vmatprep.subr.bf16.mxu0 0
  %1345 = vmatpush1.bf16.msra.mxu0 0
  %1346 = vmatprep.subr.bf16.mxu0 0
  %1347 = vmatpush1.bf16.msra.mxu0 0
  %1348 = vmatprep.subr.bf16.mxu0 0
  %1349 = vmatpush1.bf16.msra.mxu0 0
  %1350 = vmatprep.subr.bf16.mxu0 0
  %1351 = vmatpush1.bf16.msra.mxu0 0
  %1352 = vmatprep.subr.bf16.mxu0 0
  %1353 = vmatpush1.bf16.msra.mxu0 0
  %1354 = vmatprep.mubr.bf16.mxu0 0
  %1355 = vmatmul.mubr.bf16.gmra.mrb[0].mxu0 %v1279
  %v1356 = vpop.f32.mrb[0].mxu0
  %v1357 = vadd.f32 0.0, %v1356
  %v1358 = vpop.f32.mrb[0].mxu0
  %v1359 = vadd.f32 0.0, %v1358
  %v1360 = vpop.f32.mrb[0].mxu0
  %v1361 = vpop.f32.mrb[0].mxu0
  %1362 = vdwg.mxu0
  %v1363 = vadd.f32 %v1212, %v1316
  %v1364 = vadd.f32 %v1213, %v1318
  %v1365 = vadd.f32 %v1214, %v1357
  %v1366 = vadd.f32 %v1215, %v1359
  %1367 = vrot.lane.b32.xlu0 %v214, 111
  %v1368 = vpop.permute.xlu0 %1367
  %1369 = vrot.lane.b32.xlu0 %v218, 111
  %v1370 = vpop.permute.xlu0 %1369
  %1371 = vrot.lane.b32.xlu0 %v215, 111
  %v1372 = vpop.permute.xlu0 %1371
  %1373 = vrot.lane.b32.xlu0 %v219, 111
  %v1374 = vpop.permute.xlu0 %1373
  %1375 = vrot.lane.b32.xlu0 %v216, 111
  %v1376 = vpop.permute.xlu0 %1375
  %1377 = vrot.lane.b32.xlu0 %v220, 111
  %v1378 = vpop.permute.xlu0 %1377
  %1379 = vrot.lane.b32.xlu0 %v217, 111
  %v1380 = vpop.permute.xlu0 %1379
  %1381 = vrot.lane.b32.xlu0 %v221, 111
  %v1382 = vpop.permute.xlu0 %1381
  %vm1383 = vcmp.lt.s32.totalorder %v239, 111
  %v1384 = vsel %vm1383, %v1376, %v1380
  %v1385 = vsel %vm1383, %v1378, %v1382
  %v1386 = vsel %vm1383, %v1372, %v1376
  %v1387 = vsel %vm1383, %v1374, %v1378
  %v1388 = vsel %vm1383, %v1368, %v1372
  %v1389 = vsel %vm1383, %v1370, %v1374
  %v1390 = vsel %vm1383, %v1380, %v1368
  %v1391 = vsel %vm1383, %v1382, %v1370
  %s1392 = scalar_lea.vmem %s7, 32
  %v1393 = vld [vmem:[%s1392] sm:$0xf]
  %v1395 = vlaneseq
  %v1396 = vshrl.u32 %v1395, 7
  %v1397 = vsub.s32 0, %v1396
  %v1398 = vrot.slane %v1393, %v1397
  %v1399 = vlaneseq
  %v1400 = vshrl.u32 %v1399, 7
  %v1401 = vsub.s32 1, %v1400
  %v1402 = vrot.slane %v1393, %v1401
  %v1403 = vlaneseq
  %v1404 = vshrl.u32 %v1403, 7
  %v1405 = vsub.s32 2, %v1404
  %v1406 = vrot.slane %v1393, %v1405
  %v1407 = vlaneseq
  %v1408 = vshrl.u32 %v1407, 7
  %v1409 = vsub.s32 3, %v1408
  %v1410 = vrot.slane %v1393, %v1409
  %v1415 = vmul.f32 %v1388, %v1398
  %v1416 = vmul.f32 %v1386, %v1402
  %v1417 = vmul.f32 %v1384, %v1406
  %v1418 = vmul.f32 %v1390, %v1410
  %v1419 = vmul.f32 %v1389, %v1398
  %v1420 = vmul.f32 %v1387, %v1402
  %v1421 = vmul.f32 %v1385, %v1406
  %v1422 = vmul.f32 %v1391, %v1410
  %v1423 = vpack.c.bf16 %v1419, %v1415
  %v1424 = vpack.c.bf16 %v1420, %v1416
  %v1425 = vpack.c.bf16 %v1421, %v1417
  %v1426 = vpack.c.bf16 %v1422, %v1418
  %s1427 = scalar_lea.vmem %s6, 32
  %v1428 = vld [vmem:[%s1427] sm:$0xf]
  %v1430 = vsel %vm346, %v1428, 0
  %1432 = vmatprep.subr.bf16.mxu0 %v1424
  %1433 = vmatpush1.bf16.msra.mxu0 %v1423
  %1434 = vmatprep.subr.bf16.mxu0 0
  %1435 = vmatpush1.bf16.msra.mxu0 0
  %1436 = vmatprep.subr.bf16.mxu0 0
  %1437 = vmatpush1.bf16.msra.mxu0 0
  %1438 = vmatprep.subr.bf16.mxu0 0
  %1439 = vmatpush1.bf16.msra.mxu0 0
  %1440 = vmatprep.subr.bf16.mxu0 0
  %1441 = vmatpush1.bf16.msra.mxu0 0
  %1442 = vmatprep.subr.bf16.mxu0 0
  %1443 = vmatpush1.bf16.msra.mxu0 0
  %1444 = vmatprep.subr.bf16.mxu0 0
  %1445 = vmatpush1.bf16.msra.mxu0 0
  %1446 = vmatprep.subr.bf16.mxu0 0
  %1447 = vmatpush1.bf16.msra.mxu0 0
  %1448 = vmatprep.subr.bf16.mxu0 0
  %1449 = vmatpush1.bf16.msra.mxu0 0
  %1450 = vmatprep.subr.bf16.mxu0 0
  %1451 = vmatpush1.bf16.msra.mxu0 0
  %1452 = vmatprep.subr.bf16.mxu0 0
  %1453 = vmatpush1.bf16.msra.mxu0 0
  %1454 = vmatprep.subr.bf16.mxu0 0
  %1455 = vmatpush1.bf16.msra.mxu0 0
  %1456 = vmatprep.subr.bf16.mxu0 0
  %1457 = vmatpush1.bf16.msra.mxu0 0
  %1458 = vmatprep.subr.bf16.mxu0 0
  %1459 = vmatpush1.bf16.msra.mxu0 0
  %1460 = vmatprep.subr.bf16.mxu0 0
  %1461 = vmatpush1.bf16.msra.mxu0 0
  %1462 = vmatprep.subr.bf16.mxu0 0
  %1463 = vmatpush1.bf16.msra.mxu0 0
  %1464 = vmatprep.mubr.bf16.mxu0 0
  %1465 = vmatmul.mubr.bf16.gmra.mrb[0].mxu0 %v1430
  %v1466 = vpop.f32.mrb[0].mxu0
  %v1467 = vadd.f32 0.0, %v1466
  %v1468 = vpop.f32.mrb[0].mxu0
  %v1469 = vadd.f32 0.0, %v1468
  %v1470 = vpop.f32.mrb[0].mxu0
  %v1471 = vpop.f32.mrb[0].mxu0
  %1472 = vdwg.mxu0
  %1473 = vmatprep.subr.bf16.mxu0 %v1426
  %1474 = vmatpush1.bf16.msra.mxu0 %v1425
  %1475 = vmatprep.subr.bf16.mxu0 0
  %1476 = vmatpush1.bf16.msra.mxu0 0
  %1477 = vmatprep.subr.bf16.mxu0 0
  %1478 = vmatpush1.bf16.msra.mxu0 0
  %1479 = vmatprep.subr.bf16.mxu0 0
  %1480 = vmatpush1.bf16.msra.mxu0 0
  %1481 = vmatprep.subr.bf16.mxu0 0
  %1482 = vmatpush1.bf16.msra.mxu0 0
  %1483 = vmatprep.subr.bf16.mxu0 0
  %1484 = vmatpush1.bf16.msra.mxu0 0
  %1485 = vmatprep.subr.bf16.mxu0 0
  %1486 = vmatpush1.bf16.msra.mxu0 0
  %1487 = vmatprep.subr.bf16.mxu0 0
  %1488 = vmatpush1.bf16.msra.mxu0 0
  %1489 = vmatprep.subr.bf16.mxu0 0
  %1490 = vmatpush1.bf16.msra.mxu0 0
  %1491 = vmatprep.subr.bf16.mxu0 0
  %1492 = vmatpush1.bf16.msra.mxu0 0
  %1493 = vmatprep.subr.bf16.mxu0 0
  %1494 = vmatpush1.bf16.msra.mxu0 0
  %1495 = vmatprep.subr.bf16.mxu0 0
  %1496 = vmatpush1.bf16.msra.mxu0 0
  %1497 = vmatprep.subr.bf16.mxu0 0
  %1498 = vmatpush1.bf16.msra.mxu0 0
  %1499 = vmatprep.subr.bf16.mxu0 0
  %1500 = vmatpush1.bf16.msra.mxu0 0
  %1501 = vmatprep.subr.bf16.mxu0 0
  %1502 = vmatpush1.bf16.msra.mxu0 0
  %1503 = vmatprep.subr.bf16.mxu0 0
  %1504 = vmatpush1.bf16.msra.mxu0 0
  %1505 = vmatprep.mubr.bf16.mxu0 0
  %1506 = vmatmul.mubr.bf16.gmra.mrb[0].mxu0 %v1430
  %v1507 = vpop.f32.mrb[0].mxu0
  %v1508 = vadd.f32 0.0, %v1507
  %v1509 = vpop.f32.mrb[0].mxu0
  %v1510 = vadd.f32 0.0, %v1509
  %v1511 = vpop.f32.mrb[0].mxu0
  %v1512 = vpop.f32.mrb[0].mxu0
  %1513 = vdwg.mxu0
  %v1514 = vadd.f32 %v1363, %v1467
  %v1515 = vadd.f32 %v1364, %v1469
  %v1516 = vadd.f32 %v1365, %v1508
  %v1517 = vadd.f32 %v1366, %v1510
  %1518 = vst [vmem:[%s30] sm:$0xff] %v1514
  %1519 = vst [vmem:[%s30 + $0x8] sm:$0xff] %v1515
  %1520 = vst [vmem:[%s30 + $0x10] sm:$0xff] %v1516
  %1521 = vst [vmem:[%s30 + $0x18] sm:$0xff] %v1517
  %s1522 = scalar_lea.vmem %s8, 32
  // Predicated region
  $region34: #{dense_block_apply.2} parent=0 // pred_check
    _
  $region35: #{dense_block_apply.2} parent=0 // pred_check_branch
    %1524 = sbr.rel (0) target = $region37
  $region36: #{dense_block_apply.2} parent=0 // pred_region
    _
  $region37: #{dense_block_apply.2} parent=0 // pred_fallthru
    _
  // Predicated region
  $region38: #{dense_block_apply.2} parent=0 // pred_check
    _
  $region39: #{dense_block_apply.2} parent=0 // pred_check_branch
    %1526 = sbr.rel (0) target = $region41
  $region40: #{dense_block_apply.2} parent=0 // pred_region
    %s1527 = scalar_lea.vmem %s8, 32
  $region41: #{dense_block_apply.2} parent=0 // pred_fallthru
    _

</llo_original>
